<compile_context>
chip_gen: v7x
topology: tpu7x:2x2x1
jax: 0.10.0
libtpu: 0.0.40
codegen_flags: <defaults>
</compile_context>

<pallas_src>
import functools

import jax
import jax.numpy as jnp
from jax.experimental import pallas as pl
from jax.experimental.pallas import tpu as pltpu


def _round_up(a, b):
    return (a + b - 1) // b * b


# -----------------------------------------------------------------------------
# Pallas kernel: fused ModifiedMLP forward, batch-along-lanes layout
# -----------------------------------------------------------------------------
def _modified_mlp_kernel(d_in, hidden, n_mid,
                         x_ref, s1_ref, wm_ref, bm_ref, wl_ref, bl_ref, o_ref):
    x = x_ref[...]                 # (d_in, BN)   -- batch on the lane axis
    s1 = s1_ref[...]               # (3H, 1+d_in) -- col 0 = bias, col 1+k = weight col k

    # ---- fused first layer [U1^T ; U2^T ; W0] -------------------------------
    # Contraction dim is only d_in (=3): d_in broadcast-FMAs on the VPU; the
    # MXU is kept free for the H=32 contractions below.
    h = s1[:, 0:1] + s1[:, 1:2] * x[0:1, :]
    for k in range(1, d_in):
        h = h + s1[:, k + 1:k + 2] * x[k:k + 1, :]
    h = jnp.sin(h)                 # (3H, BN)  (sin = VPU range-reduce + polynomial)

    # Sublane slices at multiples of 8 -> zero-cost views (no lane shuffles).
    u = h[:hidden, :]                      # U
    v = h[hidden:2 * hidden, :]            # V
    z = h[2 * hidden:, :]                  # act(linears[0](x))
    z = z * u + (1.0 - z) * v

    # ---- gated hidden layers: (H,H) @ (H,BN) on the MXU ----------------------
    # n_mid is 1 for this trunk; for much deeper trunks switch this to
    # lax.fori_loop(..., unroll=True) over the 3-D weight slab.
    for m in range(n_mid):
        z = jnp.sin(jnp.dot(wm_ref[m], z, preferred_element_type=jnp.float32)
                    + bm_ref[m])
        z = z * u + (1.0 - z) * v

    # ---- final linear: (d_out,H) @ (H,BN) -> lane-dense (d_out,BN) store -----
    o_ref[...] = (jnp.dot(wl_ref[...], z, preferred_element_type=jnp.float32)
                  + bl_ref[...]).astype(o_ref.dtype)


# -----------------------------------------------------------------------------
# One-time parameter packing (hoisted out of the per-call hot path)
# -----------------------------------------------------------------------------
def pack_params(params, layers):
    hidden = layers[1]
    assert all(w == hidden for w in layers[1:-1]), \
        "ModifiedMLP gating requires equal hidden widths"
    n_mid = len(layers) - 3
    f32 = jnp.float32

    # Fused first layer, feature-major: rows = [U1^T ; U2^T ; W0] (3H, d_in),
    # with the bias prepended as column 0 -> slab1 (3H, 1+d_in).
    wf = jnp.concatenate([params["U1"].T, params["U2"].T, params["lin_w"][0]], axis=0)
    bf = jnp.concatenate([params["b1"], params["b2"], params["lin_b"][0]])
    slab1 = jnp.concatenate([bf[:, None], wf], axis=1).astype(f32)

    # Gated hidden layers as 3-D slabs -> leading-axis indexing in the kernel.
    if n_mid > 0:
        wmid = jnp.stack(params["lin_w"][1:-1], axis=0).astype(f32)          # (n_mid, H, H)
        bmid = jnp.stack([b[:, None] for b in params["lin_b"][1:-1]],
                         axis=0).astype(f32)                                 # (n_mid, H, 1)
    else:  # dummy, never read (kernel loop runs 0 times)
        wmid = jnp.zeros((1, hidden, hidden), f32)
        bmid = jnp.zeros((1, hidden, 1), f32)

    wlast = params["lin_w"][-1].astype(f32)               # (d_out, H)
    blast = params["lin_b"][-1][:, None].astype(f32)      # (d_out, 1)
    return slab1, wmid, bmid, wlast, blast


# -----------------------------------------------------------------------------
# Wrapper: padding, block selection, pallas_call
# -----------------------------------------------------------------------------
def modified_mlp_forward(x, packed, layers, *, max_block_n=4096, min_blocks=2):
    """x: (n, d_in) batch-first (module convention). Returns (n, d_out).

    Internally everything runs batch-along-lanes; callers that can keep a
    feature-major (d_in, N) layout end-to-end should do so and skip the
    transposes here.
    """
    slab1, wmid, bmid, wlast, blast = packed
    n, d_in = x.shape
    hidden, d_out = layers[1], layers[-1]
    n_mid = len(layers) - 3

    # Lane-align the batch and pick the block size.
    #  * min_blocks=2 (default) guarantees >=2 grid steps when the batch allows,
    #    so both v7x TensorCores get work.  On v5e/v6e pass min_blocks=1 to use
    #    one big block (grid is a sequential loop there; ~0.35us/step overhead).
    n_lane = _round_up(n, 128)
    num_blocks = max(min_blocks, -(-n_lane // max_block_n))
    block_n = min(n_lane, _round_up(-(-n_lane // num_blocks), 128))
    n_pad = _round_up(n_lane, block_n)
    grid = (n_pad // block_n,)

    # Feature-major, zero-padded input: three contiguous lane-dense stripes.
    x_fm = jnp.pad(x.T.astype(jnp.float32), ((0, 0), (0, n_pad - n)))

    flops = 2 * n_pad * (d_in * 3 * hidden + n_mid * hidden * hidden + hidden * d_out)
    transcendentals = n_pad * (3 * hidden + n_mid * hidden)
    bytes_accessed = 4 * (x_fm.size + slab1.size + wmid.size + bmid.size
                          + wlast.size + blast.size + n_pad * d_out)

    out_fm = pl.pallas_call(
        functools.partial(_modified_mlp_kernel, d_in, hidden, n_mid),
        out_shape=jax.ShapeDtypeStruct((d_out, n_pad), jnp.float32),
        grid_spec=pltpu.PrefetchScalarGridSpec(
            num_scalar_prefetch=0,
            grid=grid,
            in_specs=[
                pl.BlockSpec((d_in, block_n), lambda i: (0, i)),      # x, lane-dense
                pl.BlockSpec(slab1.shape, lambda i: (0, 0)),          # fused L0 slab
                pl.BlockSpec(wmid.shape, lambda i: (0, 0, 0)),        # (n_mid, H, H)
                pl.BlockSpec(bmid.shape, lambda i: (0, 0, 0)),        # (n_mid, H, 1)
                pl.BlockSpec(wlast.shape, lambda i: (0, 0)),          # (d_out, H)
                pl.BlockSpec(blast.shape, lambda i: (0, 0)),          # (d_out, 1)
            ],
            out_specs=pl.BlockSpec((d_out, block_n), lambda i: (0, i)),
        ),
        compiler_params=pltpu.CompilerParams(
            dimension_semantics=("parallel",),
            # Footprint is ~0.5 KB/row, so even block_n=4096 is ~2 MiB; this
            # limit is only there so much larger block_n sweeps don't trip the
            # default scoped-VMEM cap.
            vmem_limit_bytes=32 * 1024 * 1024,
        ),
        cost_estimate=pl.CostEstimate(flops=flops,
                                      transcendentals=transcendentals,
                                      bytes_accessed=bytes_accessed),
    )(x_fm, slab1, wmid, bmid, wlast, blast)

    return out_fm[:, :n].T


# -----------------------------------------------------------------------------
# Pure-JAX reference (mirrors the PyTorch ModifiedMLP.forward)
# -----------------------------------------------------------------------------
def modified_mlp_reference(x, params):
    act = jnp.sin
    u = act(x @ params["U1"] + params["b1"])
    v = act(x @ params["U2"] + params["b2"])
    h = x
    for w, b in zip(params["lin_w"][:-1], params["lin_b"][:-1]):
        h = act(h @ w.T + b)
        h = h * u + (1.0 - h) * v
    return h @ params["lin_w"][-1].T + params["lin_b"][-1]


# -----------------------------------------------------------------------------
# Deterministic synthetic parameters / inputs
# -----------------------------------------------------------------------------
def _xavier(key, shape):
    fan_in, fan_out = shape[-2], shape[-1]
    std = (2.0 / (fan_in + fan_out)) ** 0.5
    return std * jax.random.normal(key, shape, jnp.float32)


def init_params(key, layers):
    n_lin = len(layers) - 1
    ks = jax.random.split(key, 2 + n_lin)
    return {
        "U1": _xavier(ks[0], (layers[0], layers[1])),
        "b1": jnp.zeros((layers[1],), jnp.float32),
        "U2": _xavier(ks[1], (layers[0], layers[1])),
        "b2": jnp.zeros((layers[1],), jnp.float32),
        "lin_w": [_xavier(ks[2 + i], (layers[i + 1], layers[i]))
                  for i in range(n_lin)],
        "lin_b": [jnp.zeros((layers[i + 1],), jnp.float32) for i in range(n_lin)],
    }


if __name__ == "__main__":
    # trunk_layers used by the 3Dnls PI model; activation = sin
    layers = [3, 32, 32, 2]
    n_pts = 500          # deliberately NOT a multiple of 128: exercises padding path

    key = jax.random.PRNGKey(0)
    k_p, k_x = jax.random.split(key)
    params = init_params(k_p, layers)
    x = jax.random.normal(k_x, (n_pts, layers[0]), jnp.float32)

    packed = pack_params(params, layers)          # done once per parameter update
    out = jax.block_until_ready(modified_mlp_forward(x, packed, layers))
    ref = jax.block_until_ready(modified_mlp_reference(x, params))

    assert out.shape == (n_pts, layers[-1]), out.shape
    assert jnp.allclose(out, ref, atol=2e-3, rtol=2e-3), \
        float(jnp.max(jnp.abs(out - ref)))
    print("KERNEL_OK")
</pallas_src>

<mosaic_0001>
module attributes {stable_mosaic.version = 11 : i64} {
  func.func @_modified_mlp_kernel(%arg0: i32, %arg1: memref<3x256xf32, #tpu.memory_space<vmem>>, %arg2: memref<96x4xf32, #tpu.memory_space<vmem>>, %arg3: memref<1x32x32xf32, #tpu.memory_space<vmem>>, %arg4: memref<1x32x1xf32, #tpu.memory_space<vmem>>, %arg5: memref<2x32xf32, #tpu.memory_space<vmem>>, %arg6: memref<2x1xf32, #tpu.memory_space<vmem>>, %arg7: memref<2x256xf32, #tpu.memory_space<vmem>>) attributes {dimension_semantics = [#tpu.dimension_semantics<parallel>], iteration_bounds = array<i64: 2>, scalar_prefetch = 0 : i64, scratch_operands = 0 : i64, tpu.core_type = #tpu.core_type<tc>, window_params = [{transform_indices = @transform_0, window_bounds = array<i64: 3, 256>}, {pipeline_mode = #tpu.pipeline_mode<synchronous>, transform_indices = @transform_1, window_bounds = array<i64: 96, 4>}, {pipeline_mode = #tpu.pipeline_mode<synchronous>, transform_indices = @transform_2, window_bounds = array<i64: 1, 32, 32>}, {pipeline_mode = #tpu.pipeline_mode<synchronous>, transform_indices = @transform_3, window_bounds = array<i64: 1, 32, 1>}, {pipeline_mode = #tpu.pipeline_mode<synchronous>, transform_indices = @transform_4, window_bounds = array<i64: 2, 32>}, {pipeline_mode = #tpu.pipeline_mode<synchronous>, transform_indices = @transform_5, window_bounds = array<i64: 2, 1>}, {transform_indices = @transform_6, window_bounds = array<i64: 2, 256>}]} {
    %c0 = arith.constant 0 : index
    %c0_0 = arith.constant 0 : index
    %0 = vector.load %arg1[%c0, %c0_0] : memref<3x256xf32, #tpu.memory_space<vmem>>, vector<3x256xf32>
    %c0_1 = arith.constant 0 : index
    %c0_2 = arith.constant 0 : index
    %1 = vector.load %arg2[%c0_1, %c0_2] : memref<96x4xf32, #tpu.memory_space<vmem>>, vector<96x4xf32>
    %2 = vector.extract_strided_slice %1 {offsets = [0, 0], sizes = [96, 1], strides = [1, 1]} : vector<96x4xf32> to vector<96x1xf32>
    %3 = vector.extract_strided_slice %1 {offsets = [0, 1], sizes = [96, 1], strides = [1, 1]} : vector<96x4xf32> to vector<96x1xf32>
    %4 = vector.extract_strided_slice %0 {offsets = [0, 0], sizes = [1, 256], strides = [1, 1]} : vector<3x256xf32> to vector<1x256xf32>
    %5 = vector.broadcast %3 : vector<96x1xf32> to vector<96x256xf32>
    %6 = vector.broadcast %4 : vector<1x256xf32> to vector<96x256xf32>
    %7 = arith.mulf %5, %6 : vector<96x256xf32>
    %8 = vector.broadcast %2 : vector<96x1xf32> to vector<96x256xf32>
    %9 = arith.addf %8, %7 : vector<96x256xf32>
    %10 = vector.extract_strided_slice %1 {offsets = [0, 2], sizes = [96, 1], strides = [1, 1]} : vector<96x4xf32> to vector<96x1xf32>
    %11 = vector.extract_strided_slice %0 {offsets = [1, 0], sizes = [1, 256], strides = [1, 1]} : vector<3x256xf32> to vector<1x256xf32>
    %12 = vector.broadcast %10 : vector<96x1xf32> to vector<96x256xf32>
    %13 = vector.broadcast %11 : vector<1x256xf32> to vector<96x256xf32>
    %14 = arith.mulf %12, %13 : vector<96x256xf32>
    %15 = arith.addf %9, %14 : vector<96x256xf32>
    %16 = vector.extract_strided_slice %1 {offsets = [0, 3], sizes = [96, 1], strides = [1, 1]} : vector<96x4xf32> to vector<96x1xf32>
    %17 = vector.extract_strided_slice %0 {offsets = [2, 0], sizes = [1, 256], strides = [1, 1]} : vector<3x256xf32> to vector<1x256xf32>
    %18 = vector.broadcast %16 : vector<96x1xf32> to vector<96x256xf32>
    %19 = vector.broadcast %17 : vector<1x256xf32> to vector<96x256xf32>
    %20 = arith.mulf %18, %19 : vector<96x256xf32>
    %21 = arith.addf %15, %20 : vector<96x256xf32>
    %22 = math.sin %21 : vector<96x256xf32>
    %23 = vector.extract_strided_slice %22 {offsets = [0, 0], sizes = [32, 256], strides = [1, 1]} : vector<96x256xf32> to vector<32x256xf32>
    %24 = vector.extract_strided_slice %22 {offsets = [32, 0], sizes = [32, 256], strides = [1, 1]} : vector<96x256xf32> to vector<32x256xf32>
    %25 = vector.extract_strided_slice %22 {offsets = [64, 0], sizes = [32, 256], strides = [1, 1]} : vector<96x256xf32> to vector<32x256xf32>
    %26 = arith.mulf %25, %23 : vector<32x256xf32>
    %cst = arith.constant 1.000000e+00 : f32
    %27 = vector.broadcast %cst : f32 to vector<32x256xf32>
    %28 = arith.subf %27, %25 : vector<32x256xf32>
    %29 = arith.mulf %28, %24 : vector<32x256xf32>
    %30 = arith.addf %26, %29 : vector<32x256xf32>
    %c0_3 = arith.constant 0 : index
    %c0_4 = arith.constant 0 : index
    %c0_5 = arith.constant 0 : index
    %31 = vector.load %arg3[%c0_3, %c0_4, %c0_5] : memref<1x32x32xf32, #tpu.memory_space<vmem>>, vector<1x32x32xf32>
    %32 = vector.shape_cast %31 : vector<1x32x32xf32> to vector<32x32xf32>
    %cst_6 = arith.constant dense<0.000000e+00> : vector<32x256xf32>
    %33 = tpu.matmul %32, %30, %cst_6 {dimension_numbers = #tpu.dot_dimension_numbers<[1], [0], [0], [1], [0, 0, 1, 1], [], []>} : vector<32x32xf32>, vector<32x256xf32>, vector<32x256xf32> -> vector<32x256xf32>
    %c0_7 = arith.constant 0 : index
    %c0_8 = arith.constant 0 : index
    %c0_9 = arith.constant 0 : index
    %34 = vector.load %arg4[%c0_7, %c0_8, %c0_9] : memref<1x32x1xf32, #tpu.memory_space<vmem>>, vector<1x32x1xf32>
    %35 = vector.shape_cast %34 : vector<1x32x1xf32> to vector<32x1xf32>
    %36 = vector.broadcast %35 : vector<32x1xf32> to vector<32x256xf32>
    %37 = arith.addf %33, %36 : vector<32x256xf32>
    %38 = math.sin %37 : vector<32x256xf32>
    %39 = arith.mulf %38, %23 : vector<32x256xf32>
    %cst_10 = arith.constant 1.000000e+00 : f32
    %40 = vector.broadcast %cst_10 : f32 to vector<32x256xf32>
    %41 = arith.subf %40, %38 : vector<32x256xf32>
    %42 = arith.mulf %41, %24 : vector<32x256xf32>
    %43 = arith.addf %39, %42 : vector<32x256xf32>
    %c0_11 = arith.constant 0 : index
    %c0_12 = arith.constant 0 : index
    %44 = vector.load %arg5[%c0_11, %c0_12] : memref<2x32xf32, #tpu.memory_space<vmem>>, vector<2x32xf32>
    %cst_13 = arith.constant dense<0.000000e+00> : vector<2x256xf32>
    %45 = tpu.matmul %44, %43, %cst_13 {dimension_numbers = #tpu.dot_dimension_numbers<[1], [0], [0], [1], [0, 0, 1, 1], [], []>} : vector<2x32xf32>, vector<32x256xf32>, vector<2x256xf32> -> vector<2x256xf32>
    %c0_14 = arith.constant 0 : index
    %c0_15 = arith.constant 0 : index
    %46 = vector.load %arg6[%c0_14, %c0_15] : memref<2x1xf32, #tpu.memory_space<vmem>>, vector<2x1xf32>
    %47 = vector.broadcast %46 : vector<2x1xf32> to vector<2x256xf32>
    %48 = arith.addf %45, %47 : vector<2x256xf32>
    %c0_16 = arith.constant 0 : index
    %c0_17 = arith.constant 0 : index
    %49 = vector.load %arg7[%c0_16, %c0_17] : memref<2x256xf32, #tpu.memory_space<vmem>>, vector<2x256xf32>
    tpu.vector_store %arg7[%c0_16, %c0_17], %48 {strides = array<i32>} : memref<2x256xf32, #tpu.memory_space<vmem>>, vector<2x256xf32>,
    return
  }
  func.func @transform_0(%arg0: i32) -> (i32, i32) {
    %c0_i32 = arith.constant 0 : i32
    %c0_i32_0 = arith.constant 0 : i32
    return %c0_i32, %arg0 : i32, i32
  }
  func.func @transform_1(%arg0: i32) -> (i32, i32) {
    %c0_i32 = arith.constant 0 : i32
    %c0_i32_0 = arith.constant 0 : i32
    %c0_i32_1 = arith.constant 0 : i32
    return %c0_i32, %c0_i32_0 : i32, i32
  }
  func.func @transform_2(%arg0: i32) -> (i32, i32, i32) {
    %c0_i32 = arith.constant 0 : i32
    %c0_i32_0 = arith.constant 0 : i32
    %c0_i32_1 = arith.constant 0 : i32
    %c0_i32_2 = arith.constant 0 : i32
    return %c0_i32, %c0_i32_0, %c0_i32_1 : i32, i32, i32
  }
  func.func @transform_3(%arg0: i32) -> (i32, i32, i32) {
    %c0_i32 = arith.constant 0 : i32
    %c0_i32_0 = arith.constant 0 : i32
    %c0_i32_1 = arith.constant 0 : i32
    %c0_i32_2 = arith.constant 0 : i32
    return %c0_i32, %c0_i32_0, %c0_i32_1 : i32, i32, i32
  }
  func.func @transform_4(%arg0: i32) -> (i32, i32) {
    %c0_i32 = arith.constant 0 : i32
    %c0_i32_0 = arith.constant 0 : i32
    %c0_i32_1 = arith.constant 0 : i32
    return %c0_i32, %c0_i32_0 : i32, i32
  }
  func.func @transform_5(%arg0: i32) -> (i32, i32) {
    %c0_i32 = arith.constant 0 : i32
    %c0_i32_0 = arith.constant 0 : i32
    %c0_i32_1 = arith.constant 0 : i32
    return %c0_i32, %c0_i32_0 : i32, i32
  }
  func.func @transform_6(%arg0: i32) -> (i32, i32) {
    %c0_i32 = arith.constant 0 : i32
    %c0_i32_0 = arith.constant 0 : i32
    return %c0_i32, %arg0 : i32, i32
  }
}

</mosaic_0001>

<llo_original>
// kernel: tpu_custom_call.1
$region0: #{tpu_custom_call.1}
  #allocation0 [shape = 'u32[]', space=smem, size = 0x4, offset = 0x4, fixed_abs, tag = 'smem constant byte address 0x4 - core index']
  #allocation1 [shape = 'u32[144,128]{1,0:T(1,128)}', space=vmem, size = 0x12000, scoped, tag = 'internal scratch']
  %s0 = inlined_call_operand.vmem [shape: f32[3,512], index: 0, kind: input, shape index: {}]
  %s1 = inlined_call_operand.vmem [shape: f32[96,4], index: 1, kind: input, shape index: {}]
  %s2 = inlined_call_operand.vmem [shape: f32[1,32,32], index: 2, kind: input, shape index: {}]
  %s3 = inlined_call_operand.vmem [shape: f32[1,32,1], index: 3, kind: input, shape index: {}]
  %s4 = inlined_call_operand.vmem [shape: f32[2,32], index: 4, kind: input, shape index: {}]
  %s5 = inlined_call_operand.vmem [shape: f32[2,1], index: 5, kind: input, shape index: {}]
  %s6 = inlined_call_operand.hbm [shape: f32[2,512], index: 6, kind: output, shape index: {}]
  %s7 = sld [smem:[#allocation0]]
  $region57: #{tpu_custom_call.1} parent=0
    _
  %s9 = ssub.s32 1, %s7
  %s10 = scalar_select 0, %s9, %s7
  $region1: #{tpu_custom_call.1} parent=0
    #allocation2 [shape = 'u8[4096]{0}', space=vmem, size = 0x1000, scoped, tag = 'output window, operand 0']
    #allocation3 [shape = 's32[2]{0}', space=sflag, size = 0x8, scoped, tag = 'scoped memory for tpu_custom_call.1']
    %11 = vsyncpa [#allocation3], 0
    %s12 = scalar_lea.sflag [#allocation3], 1
    %13 = vsyncpa %s12, 0
    loop: start=0, step=1, limit=4
    $region2: #{tpu_custom_call.1} parent=1 // loop_pre_header
      _
    $region3: #{tpu_custom_call.1} parent=1 // loop_header
      %s15 = sphi 0, %s19
      %p16 = scmp.ge.s32.totalorder %s15, 4
      %s25 = sphi 0, %s27
      %s28 = sphi 0, %s25
      %s29 = sphi 0, %s28
      %s45 = sphi 0, %s29
      %s49 = sphi 0, %s49
      %s51 = sphi 0, %s49
      %s52 = sphi 0, %s51
      %s66 = sphi 0, %s52
      %s70 = sphi 0, %s70
      %s72 = sphi 0, %s70
      %s73 = sphi 0, %s72
      %s87 = sphi 0, %s73
      %s91 = sphi 0, %s91
      %s93 = sphi 0, %s91
      %s94 = sphi 0, %s93
      %s108 = sphi 0, %s94
      %s112 = sphi 0, %s112
      %s114 = sphi 0, %s112
      %s115 = sphi 0, %s114
      %s129 = sphi 0, %s115
      %s133 = sphi 0, %s133
      %s135 = sphi 0, %s133
      %s136 = sphi 0, %s135
      %s150 = sphi 0, %s136
      %s156 = sphi 0, %s158
      %s159 = sphi 0, %s156
      %s160 = sphi 0, %s159
      %s176 = sphi 0, %s160
    $region4: #{tpu_custom_call.1} parent=1 // loop_header_branch
      %18 = sbr.rel (%p16) target = $region8
    $region5: #{tpu_custom_call.1} parent=1 // loop_body
      %s20 = ssub.s32 %s15, 1
      %s21 = ssub.s32 %s15, 2
      %s22 = sadd.s32 %s15, 1
      %s23 = ssub.s32 %s15, %s22
      %p24 = scmp.eq.s32.totalorder %s23, 0
      %s26 = sadd.s32 %s25, 1
      %s27 = scalar_select %p24, %s25, %s26
      %p30 = pneg %p24
      %p31 = scmp.eq.s32.totalorder %s15, 1
      %p32 = por %p30, %p31
      %p33 = scmp.ne.s32.totalorder %s25, %s28
      %p34 = scmp.eq.s32.totalorder %s15, 0
      %p35 = por %p33, %p34
      %p36 = scmp.ne.s32.totalorder %s25, %s28
      %p37 = scmp.eq.s32.totalorder %s20, 1
      %p38 = por %p36, %p37
      %p39 = scmp.ne.s32.totalorder %s28, %s29
      %p40 = scmp.eq.s32.totalorder %s20, 0
      %p41 = por %p39, %p40
      %p42 = scmp.ne.s32.totalorder %s28, %s29
      %p43 = scmp.eq.s32.totalorder %s21, 1
      %p44 = por %p42, %p43
      %p46 = scmp.ne.s32.totalorder %s29, %s45
      %p47 = scmp.eq.s32.totalorder %s21, 0
      %p48 = por %p46, %p47
      %s50 = sadd.s32 %s49, 1
      %p53 = scmp.eq.s32.totalorder %s15, 1
      %p54 = scmp.ne.s32.totalorder %s49, %s51
      %p55 = scmp.eq.s32.totalorder %s15, 0
      %p56 = por %p54, %p55
      %p57 = scmp.ne.s32.totalorder %s49, %s51
      %p58 = scmp.eq.s32.totalorder %s20, 1
      %p59 = por %p57, %p58
      %p60 = scmp.ne.s32.totalorder %s51, %s52
      %p61 = scmp.eq.s32.totalorder %s20, 0
      %p62 = por %p60, %p61
      %p63 = scmp.ne.s32.totalorder %s51, %s52
      %p64 = scmp.eq.s32.totalorder %s21, 1
      %p65 = por %p63, %p64
      %p67 = scmp.ne.s32.totalorder %s52, %s66
      %p68 = scmp.eq.s32.totalorder %s21, 0
      %p69 = por %p67, %p68
      %s71 = sadd.s32 %s70, 1
      %p74 = scmp.eq.s32.totalorder %s15, 1
      %p75 = scmp.ne.s32.totalorder %s70, %s72
      %p76 = scmp.eq.s32.totalorder %s15, 0
      %p77 = por %p75, %p76
      %p78 = scmp.ne.s32.totalorder %s70, %s72
      %p79 = scmp.eq.s32.totalorder %s20, 1
      %p80 = por %p78, %p79
      %p81 = scmp.ne.s32.totalorder %s72, %s73
      %p82 = scmp.eq.s32.totalorder %s20, 0
      %p83 = por %p81, %p82
      %p84 = scmp.ne.s32.totalorder %s72, %s73
      %p85 = scmp.eq.s32.totalorder %s21, 1
      %p86 = por %p84, %p85
      %p88 = scmp.ne.s32.totalorder %s73, %s87
      %p89 = scmp.eq.s32.totalorder %s21, 0
      %p90 = por %p88, %p89
      %s92 = sadd.s32 %s91, 1
      %p95 = scmp.eq.s32.totalorder %s15, 1
      %p96 = scmp.ne.s32.totalorder %s91, %s93
      %p97 = scmp.eq.s32.totalorder %s15, 0
      %p98 = por %p96, %p97
      %p99 = scmp.ne.s32.totalorder %s91, %s93
      %p100 = scmp.eq.s32.totalorder %s20, 1
      %p101 = por %p99, %p100
      %p102 = scmp.ne.s32.totalorder %s93, %s94
      %p103 = scmp.eq.s32.totalorder %s20, 0
      %p104 = por %p102, %p103
      %p105 = scmp.ne.s32.totalorder %s93, %s94
      %p106 = scmp.eq.s32.totalorder %s21, 1
      %p107 = por %p105, %p106
      %p109 = scmp.ne.s32.totalorder %s94, %s108
      %p110 = scmp.eq.s32.totalorder %s21, 0
      %p111 = por %p109, %p110
      %s113 = sadd.s32 %s112, 1
      %p116 = scmp.eq.s32.totalorder %s15, 1
      %p117 = scmp.ne.s32.totalorder %s112, %s114
      %p118 = scmp.eq.s32.totalorder %s15, 0
      %p119 = por %p117, %p118
      %p120 = scmp.ne.s32.totalorder %s112, %s114
      %p121 = scmp.eq.s32.totalorder %s20, 1
      %p122 = por %p120, %p121
      %p123 = scmp.ne.s32.totalorder %s114, %s115
      %p124 = scmp.eq.s32.totalorder %s20, 0
      %p125 = por %p123, %p124
      %p126 = scmp.ne.s32.totalorder %s114, %s115
      %p127 = scmp.eq.s32.totalorder %s21, 1
      %p128 = por %p126, %p127
      %p130 = scmp.ne.s32.totalorder %s115, %s129
      %p131 = scmp.eq.s32.totalorder %s21, 0
      %p132 = por %p130, %p131
      %s134 = sadd.s32 %s133, 1
      %p137 = scmp.eq.s32.totalorder %s15, 1
      %p138 = scmp.ne.s32.totalorder %s133, %s135
      %p139 = scmp.eq.s32.totalorder %s15, 0
      %p140 = por %p138, %p139
      %p141 = scmp.ne.s32.totalorder %s133, %s135
      %p142 = scmp.eq.s32.totalorder %s20, 1
      %p143 = por %p141, %p142
      %p144 = scmp.ne.s32.totalorder %s135, %s136
      %p145 = scmp.eq.s32.totalorder %s20, 0
      %p146 = por %p144, %p145
      %p147 = scmp.ne.s32.totalorder %s135, %s136
      %p148 = scmp.eq.s32.totalorder %s21, 1
      %p149 = por %p147, %p148
      %p151 = scmp.ne.s32.totalorder %s136, %s150
      %p152 = scmp.eq.s32.totalorder %s21, 0
      %p153 = por %p151, %p152
      %s154 = ssub.s32 %s15, %s22
      %p155 = scmp.eq.s32.totalorder %s154, 0
      %s157 = sadd.s32 %s156, 1
      %s158 = scalar_select %p155, %s156, %s157
      %p161 = pneg %p155
      %p162 = scmp.eq.s32.totalorder %s15, 1
      %p163 = por %p161, %p162
      %p164 = scmp.ne.s32.totalorder %s156, %s159
      %p165 = scmp.eq.s32.totalorder %s15, 0
      %p166 = por %p164, %p165
      %p167 = scmp.ne.s32.totalorder %s156, %s159
      %p168 = scmp.eq.s32.totalorder %s20, 1
      %p169 = por %p167, %p168
      %p170 = scmp.ne.s32.totalorder %s159, %s160
      %p171 = scmp.eq.s32.totalorder %s20, 0
      %p172 = por %p170, %p171
      %p173 = scmp.ne.s32.totalorder %s159, %s160
      %p174 = scmp.eq.s32.totalorder %s21, 1
      %p175 = por %p173, %p174
      %p177 = scmp.ne.s32.totalorder %s160, %s176
      %p178 = scmp.eq.s32.totalorder %s21, 0
      %p179 = por %p177, %p178
      %p180 = scmp.le.s32.totalorder 1, %s15
      %p181 = scmp.lt.s32.totalorder %s15, 3
      %p182 = pnand %p180, %p181
      %p183 = pneg %p182
      // Predicated region
      $region9: #{tpu_custom_call.1} parent=5 // pred_check
        _
      $region10: #{tpu_custom_call.1} parent=5 // pred_check_branch
        %185 = sbr.rel (%p182) target = $region12
      $region11: #{tpu_custom_call.1} parent=5 // pred_region
        %s186 = ssub.s32 %s15, 1
        // Predicated region
        $region13: #{tpu_custom_call.1} parent=11 // pred_check
          %p187 = pneg %p62
        $region14: #{tpu_custom_call.1} parent=11 // pred_check_branch
          %189 = sbr.rel (%p187) target = $region16
        $region15: #{tpu_custom_call.1} parent=11 // pred_region
          _
        $region16: #{tpu_custom_call.1} parent=11 // pred_fallthru
          _
        // Predicated region
        $region17: #{tpu_custom_call.1} parent=11 // pred_check
          %p190 = pneg %p83
        $region18: #{tpu_custom_call.1} parent=11 // pred_check_branch
          %192 = sbr.rel (%p190) target = $region20
        $region19: #{tpu_custom_call.1} parent=11 // pred_region
          _
        $region20: #{tpu_custom_call.1} parent=11 // pred_fallthru
          _
        // Predicated region
        $region21: #{tpu_custom_call.1} parent=11 // pred_check
          %p193 = pneg %p104
        $region22: #{tpu_custom_call.1} parent=11 // pred_check_branch
          %195 = sbr.rel (%p193) target = $region24
        $region23: #{tpu_custom_call.1} parent=11 // pred_region
          _
        $region24: #{tpu_custom_call.1} parent=11 // pred_fallthru
          _
        // Predicated region
        $region25: #{tpu_custom_call.1} parent=11 // pred_check
          %p196 = pneg %p125
        $region26: #{tpu_custom_call.1} parent=11 // pred_check_branch
          %198 = sbr.rel (%p196) target = $region28
        $region27: #{tpu_custom_call.1} parent=11 // pred_region
          _
        $region28: #{tpu_custom_call.1} parent=11 // pred_fallthru
          _
        // Predicated region
        $region29: #{tpu_custom_call.1} parent=11 // pred_check
          %p199 = pneg %p146
        $region30: #{tpu_custom_call.1} parent=11 // pred_check_branch
          %201 = sbr.rel (%p199) target = $region32
        $region31: #{tpu_custom_call.1} parent=11 // pred_region
          _
        $region32: #{tpu_custom_call.1} parent=11 // pred_fallthru
          _
      $region12: #{tpu_custom_call.1} parent=5 // pred_fallthru
        _
      %p202 = scmp.lt.s32.totalorder %s15, 2
      // Predicated region
      $region33: #{tpu_custom_call.1} parent=5 // pred_check
        %p203 = pneg %p202
      $region34: #{tpu_custom_call.1} parent=5 // pred_check_branch
        %205 = sbr.rel (%p203) target = $region36
      $region35: #{tpu_custom_call.1} parent=5 // pred_region
        // Predicated region
        $region37: #{tpu_custom_call.1} parent=35 // pred_check
          %p206 = pneg %p35
        $region38: #{tpu_custom_call.1} parent=35 // pred_check_branch
          %208 = sbr.rel (%p206) target = $region40
        $region39: #{tpu_custom_call.1} parent=35 // pred_region
          %s209 = smul.u32 2, %s15
          %p210 = scmp.lt.s32.totalorder %s209, 3
          %s211 = scalar_select %p210, %s209, 3
          %s212 = smul.addr %s211, 4
          %s213 = scalar_lea.vmem %s0, %s212
          %s214 = smul.u32 2, %s15
        $region40: #{tpu_custom_call.1} parent=35 // pred_fallthru
          _
      $region36: #{tpu_custom_call.1} parent=5 // pred_fallthru
        _
      %p215 = scmp.le.s32.totalorder 1, %s15
      %p216 = scmp.lt.s32.totalorder %s15, 3
      %p217 = pnand %p215, %p216
      %p218 = pneg %p217
      // Predicated region
      $region41: #{tpu_custom_call.1} parent=5 // pred_check
        _
      $region42: #{tpu_custom_call.1} parent=5 // pred_check_branch
        %220 = sbr.rel (%p217) target = $region44
      $region43: #{tpu_custom_call.1} parent=5 // pred_region
        %s221 = ssub.s32 %s15, 1
        %s222 = smul.u32 2, %s20
        %p223 = scmp.lt.s32.totalorder %s222, 3
        %s224 = scalar_select %p223, %s222, 3
        %s225 = smul.addr %s224, 4
        %s226 = scalar_lea.vmem %s0, %s225
        %p227 = pneg %p41
        %p228 = pneg %p38
        %p229 = pneg %p62
        %p230 = pneg %p59
        %p231 = pneg %p83
        %p232 = pneg %p80
        %p233 = pneg %p104
        %p234 = pneg %p101
        %p235 = pneg %p125
        %p236 = pneg %p122
        %p237 = pneg %p146
        %p238 = pneg %p143
        %p239 = pneg %p172
        %p240 = pneg %p169
        %s241 = sand.u32 %s159, 1
        %s242 = scalar_lea.sflag [#allocation3], %s241
        %s243 = sand.u32 %s159, 1
        %s244 = smul.addr %s243, 4
        %s245 = scalar_lea.vmem [#allocation2], %s244
        %s246 = smul.u32 2, %s20
        %p247 = scmp.lt.s32.totalorder %s246, 3
        %s248 = scalar_select %p247, %s246, 3
        %s249 = smul.addr %s248, 4
        %s250 = scalar_lea.vmem %s0, %s249
        %s251 = smul.u32 2, %s20
        %s252 = smul.u32 2, %s20
        %v253 = vld [vmem:[%s250] sm:$0x77]
        %v254 = vld [vmem:[%s1] sm:$0xff]
        %v255 = vld [vmem:[%s1 + $0x8] sm:$0xff]
        %v256 = vld [vmem:[%s1 + $0x10] sm:$0xff]
        %v257 = vld [vmem:[%s1 + $0x18] sm:$0xff]
        %v258 = vld [vmem:[%s1 + $0x20] sm:$0xff]
        %v259 = vld [vmem:[%s1 + $0x28] sm:$0xff]
        %v260 = vld [vmem:[%s1 + $0x30] sm:$0xff]
        %v261 = vld [vmem:[%s1 + $0x38] sm:$0xff]
        %v262 = vld [vmem:[%s1 + $0x40] sm:$0xff]
        %v263 = vld [vmem:[%s1 + $0x48] sm:$0xff]
        %v264 = vld [vmem:[%s1 + $0x50] sm:$0xff]
        %v265 = vld [vmem:[%s1 + $0x58] sm:$0xff]
        %267 = vset.pattern.permute.xlu0 1
        %268 = vperm.xlu0 %267, %v254
        %v269 = vpop.permute.xlu0 %268
        %272 = vset.pattern.permute.xlu0 1
        %273 = vperm.xlu0 %272, %v255
        %v274 = vpop.permute.xlu0 %273
        %277 = vset.pattern.permute.xlu0 1
        %278 = vperm.xlu0 %277, %v256
        %v279 = vpop.permute.xlu0 %278
        %282 = vset.pattern.permute.xlu0 1
        %283 = vperm.xlu0 %282, %v257
        %v284 = vpop.permute.xlu0 %283
        %287 = vset.pattern.permute.xlu0 1
        %288 = vperm.xlu0 %287, %v258
        %v289 = vpop.permute.xlu0 %288
        %292 = vset.pattern.permute.xlu0 1
        %293 = vperm.xlu0 %292, %v259
        %v294 = vpop.permute.xlu0 %293
        %297 = vset.pattern.permute.xlu0 1
        %298 = vperm.xlu0 %297, %v260
        %v299 = vpop.permute.xlu0 %298
        %302 = vset.pattern.permute.xlu0 1
        %303 = vperm.xlu0 %302, %v261
        %v304 = vpop.permute.xlu0 %303
        %307 = vset.pattern.permute.xlu0 1
        %308 = vperm.xlu0 %307, %v262
        %v309 = vpop.permute.xlu0 %308
        %312 = vset.pattern.permute.xlu0 1
        %313 = vperm.xlu0 %312, %v263
        %v314 = vpop.permute.xlu0 %313
        %317 = vset.pattern.permute.xlu0 1
        %318 = vperm.xlu0 %317, %v264
        %v319 = vpop.permute.xlu0 %318
        %322 = vset.pattern.permute.xlu0 1
        %323 = vperm.xlu0 %322, %v265
        %v324 = vpop.permute.xlu0 %323
        %v327 = vlaneseq
        %v328 = vshrl.u32 %v327, 7
        %v329 = vsub.s32 0, %v328
        %v330 = vrot.slane %v253, %v329
        %v331 = vlaneseq
        %v332 = vshrl.u32 %v331, 7
        %v333 = vsub.s32 4, %v332
        %v334 = vrot.slane %v253, %v333
        %v337 = vlaneseq
        %v338 = vshrl.u32 %v337, 7
        %v339 = vsub.s32 0, %v338
        %v340 = vrot.slane %v330, %v339
        %v341 = vlaneseq
        %v342 = vshrl.u32 %v341, 7
        %v343 = vsub.s32 0, %v342
        %v344 = vrot.slane %v334, %v343
        %v345 = vmul.f32 %v269, %v340
        %v346 = vmul.f32 %v269, %v344
        %v347 = vmul.f32 %v274, %v340
        %v348 = vmul.f32 %v274, %v344
        %v349 = vmul.f32 %v279, %v340
        %v350 = vmul.f32 %v279, %v344
        %v351 = vmul.f32 %v284, %v340
        %v352 = vmul.f32 %v284, %v344
        %v353 = vmul.f32 %v289, %v340
        %v354 = vmul.f32 %v289, %v344
        %v355 = vmul.f32 %v294, %v340
        %v356 = vmul.f32 %v294, %v344
        %v357 = vmul.f32 %v299, %v340
        %v358 = vmul.f32 %v299, %v344
        %v359 = vmul.f32 %v304, %v340
        %v360 = vmul.f32 %v304, %v344
        %v361 = vmul.f32 %v309, %v340
        %v362 = vmul.f32 %v309, %v344
        %v363 = vmul.f32 %v314, %v340
        %v364 = vmul.f32 %v314, %v344
        %v365 = vmul.f32 %v319, %v340
        %v366 = vmul.f32 %v319, %v344
        %v367 = vmul.f32 %v324, %v340
        %v368 = vmul.f32 %v324, %v344
        %369 = vset.pattern.permute.xlu0 0
        %370 = vperm.xlu0 %369, %v254
        %v371 = vpop.permute.xlu0 %370
        %373 = vset.pattern.permute.xlu0 0
        %374 = vperm.xlu0 %373, %v255
        %v375 = vpop.permute.xlu0 %374
        %377 = vset.pattern.permute.xlu0 0
        %378 = vperm.xlu0 %377, %v256
        %v379 = vpop.permute.xlu0 %378
        %381 = vset.pattern.permute.xlu0 0
        %382 = vperm.xlu0 %381, %v257
        %v383 = vpop.permute.xlu0 %382
        %385 = vset.pattern.permute.xlu0 0
        %386 = vperm.xlu0 %385, %v258
        %v387 = vpop.permute.xlu0 %386
        %389 = vset.pattern.permute.xlu0 0
        %390 = vperm.xlu0 %389, %v259
        %v391 = vpop.permute.xlu0 %390
        %393 = vset.pattern.permute.xlu0 0
        %394 = vperm.xlu0 %393, %v260
        %v395 = vpop.permute.xlu0 %394
        %397 = vset.pattern.permute.xlu0 0
        %398 = vperm.xlu0 %397, %v261
        %v399 = vpop.permute.xlu0 %398
        %401 = vset.pattern.permute.xlu0 0
        %402 = vperm.xlu0 %401, %v262
        %v403 = vpop.permute.xlu0 %402
        %405 = vset.pattern.permute.xlu0 0
        %406 = vperm.xlu0 %405, %v263
        %v407 = vpop.permute.xlu0 %406
        %409 = vset.pattern.permute.xlu0 0
        %410 = vperm.xlu0 %409, %v264
        %v411 = vpop.permute.xlu0 %410
        %413 = vset.pattern.permute.xlu0 0
        %414 = vperm.xlu0 %413, %v265
        %v415 = vpop.permute.xlu0 %414
        %v417 = vadd.f32 %v371, %v345
        %v418 = vadd.f32 %v371, %v346
        %v419 = vadd.f32 %v375, %v347
        %v420 = vadd.f32 %v375, %v348
        %v421 = vadd.f32 %v379, %v349
        %v422 = vadd.f32 %v379, %v350
        %v423 = vadd.f32 %v383, %v351
        %v424 = vadd.f32 %v383, %v352
        %v425 = vadd.f32 %v387, %v353
        %v426 = vadd.f32 %v387, %v354
        %v427 = vadd.f32 %v391, %v355
        %v428 = vadd.f32 %v391, %v356
        %v429 = vadd.f32 %v395, %v357
        %v430 = vadd.f32 %v395, %v358
        %v431 = vadd.f32 %v399, %v359
        %v432 = vadd.f32 %v399, %v360
        %v433 = vadd.f32 %v403, %v361
        %v434 = vadd.f32 %v403, %v362
        %v435 = vadd.f32 %v407, %v363
        %v436 = vadd.f32 %v407, %v364
        %v437 = vadd.f32 %v411, %v365
        %v438 = vadd.f32 %v411, %v366
        %v439 = vadd.f32 %v415, %v367
        %v440 = vadd.f32 %v415, %v368
        %441 = vset.pattern.permute.xlu0 2
        %442 = vperm.xlu0 %441, %v254
        %v443 = vpop.permute.xlu0 %442
        %445 = vset.pattern.permute.xlu0 2
        %446 = vperm.xlu0 %445, %v255
        %v447 = vpop.permute.xlu0 %446
        %449 = vset.pattern.permute.xlu0 2
        %450 = vperm.xlu0 %449, %v256
        %v451 = vpop.permute.xlu0 %450
        %453 = vset.pattern.permute.xlu0 2
        %454 = vperm.xlu0 %453, %v257
        %v455 = vpop.permute.xlu0 %454
        %457 = vset.pattern.permute.xlu0 2
        %458 = vperm.xlu0 %457, %v258
        %v459 = vpop.permute.xlu0 %458
        %461 = vset.pattern.permute.xlu0 2
        %462 = vperm.xlu0 %461, %v259
        %v463 = vpop.permute.xlu0 %462
        %465 = vset.pattern.permute.xlu0 2
        %466 = vperm.xlu0 %465, %v260
        %v467 = vpop.permute.xlu0 %466
        %469 = vset.pattern.permute.xlu0 2
        %470 = vperm.xlu0 %469, %v261
        %v471 = vpop.permute.xlu0 %470
        %473 = vset.pattern.permute.xlu0 2
        %474 = vperm.xlu0 %473, %v262
        %v475 = vpop.permute.xlu0 %474
        %477 = vset.pattern.permute.xlu0 2
        %478 = vperm.xlu0 %477, %v263
        %v479 = vpop.permute.xlu0 %478
        %481 = vset.pattern.permute.xlu0 2
        %482 = vperm.xlu0 %481, %v264
        %v483 = vpop.permute.xlu0 %482
        %485 = vset.pattern.permute.xlu0 2
        %486 = vperm.xlu0 %485, %v265
        %v487 = vpop.permute.xlu0 %486
        %v489 = vlaneseq
        %v490 = vshrl.u32 %v489, 7
        %v491 = vsub.s32 1, %v490
        %v492 = vrot.slane %v253, %v491
        %v493 = vlaneseq
        %v494 = vshrl.u32 %v493, 7
        %v495 = vsub.s32 5, %v494
        %v496 = vrot.slane %v253, %v495
        %v499 = vlaneseq
        %v500 = vshrl.u32 %v499, 7
        %v501 = vsub.s32 1, %v500
        %v502 = vrot.slane %v492, %v501
        %v503 = vlaneseq
        %v504 = vshrl.u32 %v503, 7
        %v505 = vsub.s32 1, %v504
        %v506 = vrot.slane %v496, %v505
        %v507 = vmul.f32 %v443, %v502
        %v508 = vmul.f32 %v443, %v506
        %v509 = vmul.f32 %v447, %v502
        %v510 = vmul.f32 %v447, %v506
        %v511 = vmul.f32 %v451, %v502
        %v512 = vmul.f32 %v451, %v506
        %v513 = vmul.f32 %v455, %v502
        %v514 = vmul.f32 %v455, %v506
        %v515 = vmul.f32 %v459, %v502
        %v516 = vmul.f32 %v459, %v506
        %v517 = vmul.f32 %v463, %v502
        %v518 = vmul.f32 %v463, %v506
        %v519 = vmul.f32 %v467, %v502
        %v520 = vmul.f32 %v467, %v506
        %v521 = vmul.f32 %v471, %v502
        %v522 = vmul.f32 %v471, %v506
        %v523 = vmul.f32 %v475, %v502
        %v524 = vmul.f32 %v475, %v506
        %v525 = vmul.f32 %v479, %v502
        %v526 = vmul.f32 %v479, %v506
        %v527 = vmul.f32 %v483, %v502
        %v528 = vmul.f32 %v483, %v506
        %v529 = vmul.f32 %v487, %v502
        %v530 = vmul.f32 %v487, %v506
        %v531 = vadd.f32 %v417, %v507
        %v532 = vadd.f32 %v418, %v508
        %v533 = vadd.f32 %v419, %v509
        %v534 = vadd.f32 %v420, %v510
        %v535 = vadd.f32 %v421, %v511
        %v536 = vadd.f32 %v422, %v512
        %v537 = vadd.f32 %v423, %v513
        %v538 = vadd.f32 %v424, %v514
        %v539 = vadd.f32 %v425, %v515
        %v540 = vadd.f32 %v426, %v516
        %v541 = vadd.f32 %v427, %v517
        %v542 = vadd.f32 %v428, %v518
        %v543 = vadd.f32 %v429, %v519
        %v544 = vadd.f32 %v430, %v520
        %v545 = vadd.f32 %v431, %v521
        %v546 = vadd.f32 %v432, %v522
        %v547 = vadd.f32 %v433, %v523
        %v548 = vadd.f32 %v434, %v524
        %v549 = vadd.f32 %v435, %v525
        %v550 = vadd.f32 %v436, %v526
        %v551 = vadd.f32 %v437, %v527
        %v552 = vadd.f32 %v438, %v528
        %v553 = vadd.f32 %v439, %v529
        %v554 = vadd.f32 %v440, %v530
        %555 = vset.pattern.permute.xlu0 3
        %556 = vperm.xlu0 %555, %v254
        %v557 = vpop.permute.xlu0 %556
        %559 = vset.pattern.permute.xlu0 3
        %560 = vperm.xlu0 %559, %v255
        %v561 = vpop.permute.xlu0 %560
        %563 = vset.pattern.permute.xlu0 3
        %564 = vperm.xlu0 %563, %v256
        %v565 = vpop.permute.xlu0 %564
        %567 = vset.pattern.permute.xlu0 3
        %568 = vperm.xlu0 %567, %v257
        %v569 = vpop.permute.xlu0 %568
        %571 = vset.pattern.permute.xlu0 3
        %572 = vperm.xlu0 %571, %v258
        %v573 = vpop.permute.xlu0 %572
        %575 = vset.pattern.permute.xlu0 3
        %576 = vperm.xlu0 %575, %v259
        %v577 = vpop.permute.xlu0 %576
        %579 = vset.pattern.permute.xlu0 3
        %580 = vperm.xlu0 %579, %v260
        %v581 = vpop.permute.xlu0 %580
        %583 = vset.pattern.permute.xlu0 3
        %584 = vperm.xlu0 %583, %v261
        %v585 = vpop.permute.xlu0 %584
        %587 = vset.pattern.permute.xlu0 3
        %588 = vperm.xlu0 %587, %v262
        %v589 = vpop.permute.xlu0 %588
        %591 = vset.pattern.permute.xlu0 3
        %592 = vperm.xlu0 %591, %v263
        %v593 = vpop.permute.xlu0 %592
        %595 = vset.pattern.permute.xlu0 3
        %596 = vperm.xlu0 %595, %v264
        %v597 = vpop.permute.xlu0 %596
        %599 = vset.pattern.permute.xlu0 3
        %600 = vperm.xlu0 %599, %v265
        %v601 = vpop.permute.xlu0 %600
        %v603 = vlaneseq
        %v604 = vshrl.u32 %v603, 7
        %v605 = vsub.s32 2, %v604
        %v606 = vrot.slane %v253, %v605
        %v607 = vlaneseq
        %v608 = vshrl.u32 %v607, 7
        %v609 = vsub.s32 6, %v608
        %v610 = vrot.slane %v253, %v609
        %v613 = vlaneseq
        %v614 = vshrl.u32 %v613, 7
        %v615 = vsub.s32 2, %v614
        %v616 = vrot.slane %v606, %v615
        %v617 = vlaneseq
        %v618 = vshrl.u32 %v617, 7
        %v619 = vsub.s32 2, %v618
        %v620 = vrot.slane %v610, %v619
        %v621 = vmul.f32 %v557, %v616
        %v622 = vmul.f32 %v557, %v620
        %v623 = vmul.f32 %v561, %v616
        %v624 = vmul.f32 %v561, %v620
        %v625 = vmul.f32 %v565, %v616
        %v626 = vmul.f32 %v565, %v620
        %v627 = vmul.f32 %v569, %v616
        %v628 = vmul.f32 %v569, %v620
        %v629 = vmul.f32 %v573, %v616
        %v630 = vmul.f32 %v573, %v620
        %v631 = vmul.f32 %v577, %v616
        %v632 = vmul.f32 %v577, %v620
        %v633 = vmul.f32 %v581, %v616
        %v634 = vmul.f32 %v581, %v620
        %v635 = vmul.f32 %v585, %v616
        %v636 = vmul.f32 %v585, %v620
        %v637 = vmul.f32 %v589, %v616
        %v638 = vmul.f32 %v589, %v620
        %v639 = vmul.f32 %v593, %v616
        %v640 = vmul.f32 %v593, %v620
        %v641 = vmul.f32 %v597, %v616
        %v642 = vmul.f32 %v597, %v620
        %v643 = vmul.f32 %v601, %v616
        %v644 = vmul.f32 %v601, %v620
        %v645 = vadd.f32 %v531, %v621
        %v646 = vadd.f32 %v532, %v622
        %v647 = vadd.f32 %v533, %v623
        %v648 = vadd.f32 %v534, %v624
        %v649 = vadd.f32 %v535, %v625
        %v650 = vadd.f32 %v536, %v626
        %v651 = vadd.f32 %v537, %v627
        %v652 = vadd.f32 %v538, %v628
        %v653 = vadd.f32 %v539, %v629
        %v654 = vadd.f32 %v540, %v630
        %v655 = vadd.f32 %v541, %v631
        %v656 = vadd.f32 %v542, %v632
        %v657 = vadd.f32 %v543, %v633
        %v658 = vadd.f32 %v544, %v634
        %v659 = vadd.f32 %v545, %v635
        %v660 = vadd.f32 %v546, %v636
        %v661 = vadd.f32 %v547, %v637
        %v662 = vadd.f32 %v548, %v638
        %v663 = vadd.f32 %v549, %v639
        %v664 = vadd.f32 %v550, %v640
        %v665 = vadd.f32 %v551, %v641
        %v666 = vadd.f32 %v552, %v642
        %v667 = vadd.f32 %v553, %v643
        %v668 = vadd.f32 %v554, %v644
        %v669 = vand.u32 2147483647, %v645
        %vm670 = vcmp.le.f32.partialorder %v669, 0.7853982
        %vm671 = vcmp.lt.s32.totalorder %v645, 0
        %v672 = vand.u32 %v645, 2139095040
        %v673 = vshrl.u32 %v672, 23
        %v674 = vsub.s32 %v673, 127
        %v675 = vand.u32 2147483647, %v645
        %v676 = vand.u32 %v675, 8388607
        %v677 = vor.u32 %v676, 8388608
        %v678 = vsub.s32 0, %v677
        %v679 = vadd.s32 %v674, 1
        %vm680 = vcmp.gt.s32.totalorder %v679, 0
        %v681 = vsel %vm680, %v679, 0
        %v682 = vshrl.u32 %v681, 5
        %v683 = vand.u32 %v681, 31
        %v684 = vsub.s32 32, %v683
        %v685 = vshrl.u32 683565275, %v684
        %v686 = vshll.u32 683565275, %v683
        %v687 = vshrl.u32 2475754826, %v684
        %v688 = vor.u32 %v686, %v687
        %v689 = vshll.u32 2475754826, %v683
        %v690 = vshrl.u32 2131351028, %v684
        %v691 = vor.u32 %v689, %v690
        %v692 = vshll.u32 2131351028, %v683
        %v693 = vshrl.u32 2102212464, %v684
        %v694 = vor.u32 %v692, %v693
        %v695 = vshll.u32 2102212464, %v683
        %v696 = vshrl.u32 920167782, %v684
        %v697 = vor.u32 %v695, %v696
        %v698 = vshll.u32 920167782, %v683
        %v699 = vshrl.u32 1326507024, %v684
        %v700 = vor.u32 %v698, %v699
        %vm701 = vcmp.lt.s32.totalorder %v682, 1
        %vm702 = vcmp.lt.s32.totalorder %v682, 2
        %vm703 = vcmp.lt.s32.totalorder %v682, 3
        %vm704 = vcmp.lt.s32.totalorder %v682, 4
        %v705 = vsel %vm701, %v685, %v688
        %v706 = vsel %vm704, %v694, 2102212464
        %v707 = vsel %vm703, %v691, %v706
        %v708 = vsel %vm702, %v705, %v707
        %v709 = vsel %vm701, %v688, %v691
        %v710 = vsel %vm704, %v697, 920167782
        %v711 = vsel %vm703, %v694, %v710
        %v712 = vsel %vm702, %v709, %v711
        %v713 = vsel %vm701, %v691, %v694
        %v714 = vsel %vm704, %v700, 1326507024
        %v715 = vsel %vm703, %v697, %v714
        %v716 = vsel %vm702, %v713, %v715
        %v717 = vshll.u32 %v677, 8
        %v718 = vmul.u32.u64.compose %v717, %v716
        %v719 = vextract.low.u32 %v718
        %v720 = vextract.high.u32 %v718
        %v721 = vmul.u32.u64.compose %v717, %v712
        %v722 = vextract.low.u32 %v721
        %v723 = vextract.high.u32 %v721
        %v724 = vmul.u32 %v717, %v708
        %v725 = vadd.s32 %v720, %v722
        %vm726 = vc.u32 %v720, %v722
        %v727 = vadd.s32 %v723, 1
        %v728 = vsel %vm726, %v727, %v723
        %v729 = vadd.s32 %v724, %v728
        %v730 = vadd.s32 %v729, 536870912
        %v731 = vshrl.u32 %v730, 30
        %v732 = vshll.u32 %v731, 30
        %v733 = vsub.s32 %v729, %v732
        %vm734 = vcmp.lt.s32.totalorder %v733, 0
        %v735 = vsub.s32 0, %v733
        %v736 = vsel %vm734, %v735, %v733
        %v737 = vclz %v736
        %v738 = vsub.s32 %v737, 2
        %vm739 = vcmp.gt.s32.totalorder 0, %v738
        %v740 = vsel %vm739, 0, %v738
        %v741 = vsub.s32 32, %v740
        %v742 = vshll.u32 %v733, %v740
        %v743 = vshrl.u32 %v725, %v741
        %v744 = vor.u32 %v742, %v743
        %v745 = vsub.s32 4294967266, %v740
        %v746 = vadd.s32 %v745, 127
        %v747 = vshll.u32 %v746, 23
        %v748 = vor.u32 4788187, %v747
        %v749 = vand.u32 2147483647, %v748
        %v751 = vcvt.s32.f32 %v744
        %v752 = vmul.f32 %v751, %v749
        %v753 = vxor.u32 %v752, 2147483648
        %v754 = vsel %vm671, %v753, %v752
        %v755 = vsub.s32 4, %v731
        %v756 = vsel %vm671, %v755, %v731
        %v757 = vsel %vm670, %v645, %v754
        %v758 = vsel %vm670, 0, %v756
        %v759 = vcosq.f32.pop %v757
        %v760 = vsinq.f32.pop %v757
        %vm761 = vweird.f32 %v645
        %v762 = vadd.s32 %v758, 3
        %v763 = vand.u32 %v762, 3
        %vm764 = vcmp.lt.s32.totalorder %v763, 2
        %vm765 = vcmp.eq.s32.totalorder %v763, 0
        %v766 = vxor.u32 %v760, 2147483648
        %v767 = vsel %vm765, %v759, %v766
        %vm768 = vcmp.eq.s32.totalorder %v763, 2
        %v769 = vxor.u32 %v759, 2147483648
        %v770 = vsel %vm768, %v769, %v760
        %v771 = vsel %vm764, %v767, %v770
        %v772 = vsel %vm761, nan, %v771
        %v773 = vand.u32 2147483647, %v646
        %vm774 = vcmp.le.f32.partialorder %v773, 0.7853982
        %vm775 = vcmp.lt.s32.totalorder %v646, 0
        %v776 = vand.u32 %v646, 2139095040
        %v777 = vshrl.u32 %v776, 23
        %v778 = vsub.s32 %v777, 127
        %v779 = vand.u32 2147483647, %v646
        %v780 = vand.u32 %v779, 8388607
        %v781 = vor.u32 %v780, 8388608
        %v782 = vsub.s32 0, %v781
        %v783 = vadd.s32 %v778, 1
        %vm784 = vcmp.gt.s32.totalorder %v783, 0
        %v785 = vsel %vm784, %v783, 0
        %v786 = vshrl.u32 %v785, 5
        %v787 = vand.u32 %v785, 31
        %v788 = vsub.s32 32, %v787
        %v789 = vshrl.u32 683565275, %v788
        %v790 = vshll.u32 683565275, %v787
        %v791 = vshrl.u32 2475754826, %v788
        %v792 = vor.u32 %v790, %v791
        %v793 = vshll.u32 2475754826, %v787
        %v794 = vshrl.u32 2131351028, %v788
        %v795 = vor.u32 %v793, %v794
        %v796 = vshll.u32 2131351028, %v787
        %v797 = vshrl.u32 2102212464, %v788
        %v798 = vor.u32 %v796, %v797
        %v799 = vshll.u32 2102212464, %v787
        %v800 = vshrl.u32 920167782, %v788
        %v801 = vor.u32 %v799, %v800
        %v802 = vshll.u32 920167782, %v787
        %v803 = vshrl.u32 1326507024, %v788
        %v804 = vor.u32 %v802, %v803
        %vm805 = vcmp.lt.s32.totalorder %v786, 1
        %vm806 = vcmp.lt.s32.totalorder %v786, 2
        %vm807 = vcmp.lt.s32.totalorder %v786, 3
        %vm808 = vcmp.lt.s32.totalorder %v786, 4
        %v809 = vsel %vm805, %v789, %v792
        %v810 = vsel %vm808, %v798, 2102212464
        %v811 = vsel %vm807, %v795, %v810
        %v812 = vsel %vm806, %v809, %v811
        %v813 = vsel %vm805, %v792, %v795
        %v814 = vsel %vm808, %v801, 920167782
        %v815 = vsel %vm807, %v798, %v814
        %v816 = vsel %vm806, %v813, %v815
        %v817 = vsel %vm805, %v795, %v798
        %v818 = vsel %vm808, %v804, 1326507024
        %v819 = vsel %vm807, %v801, %v818
        %v820 = vsel %vm806, %v817, %v819
        %v821 = vshll.u32 %v781, 8
        %v822 = vmul.u32.u64.compose %v821, %v820
        %v823 = vextract.low.u32 %v822
        %v824 = vextract.high.u32 %v822
        %v825 = vmul.u32.u64.compose %v821, %v816
        %v826 = vextract.low.u32 %v825
        %v827 = vextract.high.u32 %v825
        %v828 = vmul.u32 %v821, %v812
        %v829 = vadd.s32 %v824, %v826
        %vm830 = vc.u32 %v824, %v826
        %v831 = vadd.s32 %v827, 1
        %v832 = vsel %vm830, %v831, %v827
        %v833 = vadd.s32 %v828, %v832
        %v834 = vadd.s32 %v833, 536870912
        %v835 = vshrl.u32 %v834, 30
        %v836 = vshll.u32 %v835, 30
        %v837 = vsub.s32 %v833, %v836
        %vm838 = vcmp.lt.s32.totalorder %v837, 0
        %v839 = vsub.s32 0, %v837
        %v840 = vsel %vm838, %v839, %v837
        %v841 = vclz %v840
        %v842 = vsub.s32 %v841, 2
        %vm843 = vcmp.gt.s32.totalorder 0, %v842
        %v844 = vsel %vm843, 0, %v842
        %v845 = vsub.s32 32, %v844
        %v846 = vshll.u32 %v837, %v844
        %v847 = vshrl.u32 %v829, %v845
        %v848 = vor.u32 %v846, %v847
        %v849 = vsub.s32 4294967266, %v844
        %v850 = vadd.s32 %v849, 127
        %v851 = vshll.u32 %v850, 23
        %v852 = vor.u32 4788187, %v851
        %v853 = vand.u32 2147483647, %v852
        %v855 = vcvt.s32.f32 %v848
        %v856 = vmul.f32 %v855, %v853
        %v857 = vxor.u32 %v856, 2147483648
        %v858 = vsel %vm775, %v857, %v856
        %v859 = vsub.s32 4, %v835
        %v860 = vsel %vm775, %v859, %v835
        %v861 = vsel %vm774, %v646, %v858
        %v862 = vsel %vm774, 0, %v860
        %v863 = vcosq.f32.pop %v861
        %v864 = vsinq.f32.pop %v861
        %vm865 = vweird.f32 %v646
        %v866 = vadd.s32 %v862, 3
        %v867 = vand.u32 %v866, 3
        %vm868 = vcmp.lt.s32.totalorder %v867, 2
        %vm869 = vcmp.eq.s32.totalorder %v867, 0
        %v870 = vxor.u32 %v864, 2147483648
        %v871 = vsel %vm869, %v863, %v870
        %vm872 = vcmp.eq.s32.totalorder %v867, 2
        %v873 = vxor.u32 %v863, 2147483648
        %v874 = vsel %vm872, %v873, %v864
        %v875 = vsel %vm868, %v871, %v874
        %v876 = vsel %vm865, nan, %v875
        %v877 = vand.u32 2147483647, %v647
        %vm878 = vcmp.le.f32.partialorder %v877, 0.7853982
        %vm879 = vcmp.lt.s32.totalorder %v647, 0
        %v880 = vand.u32 %v647, 2139095040
        %v881 = vshrl.u32 %v880, 23
        %v882 = vsub.s32 %v881, 127
        %v883 = vand.u32 2147483647, %v647
        %v884 = vand.u32 %v883, 8388607
        %v885 = vor.u32 %v884, 8388608
        %v886 = vsub.s32 0, %v885
        %v887 = vadd.s32 %v882, 1
        %vm888 = vcmp.gt.s32.totalorder %v887, 0
        %v889 = vsel %vm888, %v887, 0
        %v890 = vshrl.u32 %v889, 5
        %v891 = vand.u32 %v889, 31
        %v892 = vsub.s32 32, %v891
        %v893 = vshrl.u32 683565275, %v892
        %v894 = vshll.u32 683565275, %v891
        %v895 = vshrl.u32 2475754826, %v892
        %v896 = vor.u32 %v894, %v895
        %v897 = vshll.u32 2475754826, %v891
        %v898 = vshrl.u32 2131351028, %v892
        %v899 = vor.u32 %v897, %v898
        %v900 = vshll.u32 2131351028, %v891
        %v901 = vshrl.u32 2102212464, %v892
        %v902 = vor.u32 %v900, %v901
        %v903 = vshll.u32 2102212464, %v891
        %v904 = vshrl.u32 920167782, %v892
        %v905 = vor.u32 %v903, %v904
        %v906 = vshll.u32 920167782, %v891
        %v907 = vshrl.u32 1326507024, %v892
        %v908 = vor.u32 %v906, %v907
        %vm909 = vcmp.lt.s32.totalorder %v890, 1
        %vm910 = vcmp.lt.s32.totalorder %v890, 2
        %vm911 = vcmp.lt.s32.totalorder %v890, 3
        %vm912 = vcmp.lt.s32.totalorder %v890, 4
        %v913 = vsel %vm909, %v893, %v896
        %v914 = vsel %vm912, %v902, 2102212464
        %v915 = vsel %vm911, %v899, %v914
        %v916 = vsel %vm910, %v913, %v915
        %v917 = vsel %vm909, %v896, %v899
        %v918 = vsel %vm912, %v905, 920167782
        %v919 = vsel %vm911, %v902, %v918
        %v920 = vsel %vm910, %v917, %v919
        %v921 = vsel %vm909, %v899, %v902
        %v922 = vsel %vm912, %v908, 1326507024
        %v923 = vsel %vm911, %v905, %v922
        %v924 = vsel %vm910, %v921, %v923
        %v925 = vshll.u32 %v885, 8
        %v926 = vmul.u32.u64.compose %v925, %v924
        %v927 = vextract.low.u32 %v926
        %v928 = vextract.high.u32 %v926
        %v929 = vmul.u32.u64.compose %v925, %v920
        %v930 = vextract.low.u32 %v929
        %v931 = vextract.high.u32 %v929
        %v932 = vmul.u32 %v925, %v916
        %v933 = vadd.s32 %v928, %v930
        %vm934 = vc.u32 %v928, %v930
        %v935 = vadd.s32 %v931, 1
        %v936 = vsel %vm934, %v935, %v931
        %v937 = vadd.s32 %v932, %v936
        %v938 = vadd.s32 %v937, 536870912
        %v939 = vshrl.u32 %v938, 30
        %v940 = vshll.u32 %v939, 30
        %v941 = vsub.s32 %v937, %v940
        %vm942 = vcmp.lt.s32.totalorder %v941, 0
        %v943 = vsub.s32 0, %v941
        %v944 = vsel %vm942, %v943, %v941
        %v945 = vclz %v944
        %v946 = vsub.s32 %v945, 2
        %vm947 = vcmp.gt.s32.totalorder 0, %v946
        %v948 = vsel %vm947, 0, %v946
        %v949 = vsub.s32 32, %v948
        %v950 = vshll.u32 %v941, %v948
        %v951 = vshrl.u32 %v933, %v949
        %v952 = vor.u32 %v950, %v951
        %v953 = vsub.s32 4294967266, %v948
        %v954 = vadd.s32 %v953, 127
        %v955 = vshll.u32 %v954, 23
        %v956 = vor.u32 4788187, %v955
        %v957 = vand.u32 2147483647, %v956
        %v959 = vcvt.s32.f32 %v952
        %v960 = vmul.f32 %v959, %v957
        %v961 = vxor.u32 %v960, 2147483648
        %v962 = vsel %vm879, %v961, %v960
        %v963 = vsub.s32 4, %v939
        %v964 = vsel %vm879, %v963, %v939
        %v965 = vsel %vm878, %v647, %v962
        %v966 = vsel %vm878, 0, %v964
        %v967 = vcosq.f32.pop %v965
        %v968 = vsinq.f32.pop %v965
        %vm969 = vweird.f32 %v647
        %v970 = vadd.s32 %v966, 3
        %v971 = vand.u32 %v970, 3
        %vm972 = vcmp.lt.s32.totalorder %v971, 2
        %vm973 = vcmp.eq.s32.totalorder %v971, 0
        %v974 = vxor.u32 %v968, 2147483648
        %v975 = vsel %vm973, %v967, %v974
        %vm976 = vcmp.eq.s32.totalorder %v971, 2
        %v977 = vxor.u32 %v967, 2147483648
        %v978 = vsel %vm976, %v977, %v968
        %v979 = vsel %vm972, %v975, %v978
        %v980 = vsel %vm969, nan, %v979
        %v981 = vand.u32 2147483647, %v648
        %vm982 = vcmp.le.f32.partialorder %v981, 0.7853982
        %vm983 = vcmp.lt.s32.totalorder %v648, 0
        %v984 = vand.u32 %v648, 2139095040
        %v985 = vshrl.u32 %v984, 23
        %v986 = vsub.s32 %v985, 127
        %v987 = vand.u32 2147483647, %v648
        %v988 = vand.u32 %v987, 8388607
        %v989 = vor.u32 %v988, 8388608
        %v990 = vsub.s32 0, %v989
        %v991 = vadd.s32 %v986, 1
        %vm992 = vcmp.gt.s32.totalorder %v991, 0
        %v993 = vsel %vm992, %v991, 0
        %v994 = vshrl.u32 %v993, 5
        %v995 = vand.u32 %v993, 31
        %v996 = vsub.s32 32, %v995
        %v997 = vshrl.u32 683565275, %v996
        %v998 = vshll.u32 683565275, %v995
        %v999 = vshrl.u32 2475754826, %v996
        %v1000 = vor.u32 %v998, %v999
        %v1001 = vshll.u32 2475754826, %v995
        %v1002 = vshrl.u32 2131351028, %v996
        %v1003 = vor.u32 %v1001, %v1002
        %v1004 = vshll.u32 2131351028, %v995
        %v1005 = vshrl.u32 2102212464, %v996
        %v1006 = vor.u32 %v1004, %v1005
        %v1007 = vshll.u32 2102212464, %v995
        %v1008 = vshrl.u32 920167782, %v996
        %v1009 = vor.u32 %v1007, %v1008
        %v1010 = vshll.u32 920167782, %v995
        %v1011 = vshrl.u32 1326507024, %v996
        %v1012 = vor.u32 %v1010, %v1011
        %vm1013 = vcmp.lt.s32.totalorder %v994, 1
        %vm1014 = vcmp.lt.s32.totalorder %v994, 2
        %vm1015 = vcmp.lt.s32.totalorder %v994, 3
        %vm1016 = vcmp.lt.s32.totalorder %v994, 4
        %v1017 = vsel %vm1013, %v997, %v1000
        %v1018 = vsel %vm1016, %v1006, 2102212464
        %v1019 = vsel %vm1015, %v1003, %v1018
        %v1020 = vsel %vm1014, %v1017, %v1019
        %v1021 = vsel %vm1013, %v1000, %v1003
        %v1022 = vsel %vm1016, %v1009, 920167782
        %v1023 = vsel %vm1015, %v1006, %v1022
        %v1024 = vsel %vm1014, %v1021, %v1023
        %v1025 = vsel %vm1013, %v1003, %v1006
        %v1026 = vsel %vm1016, %v1012, 1326507024
        %v1027 = vsel %vm1015, %v1009, %v1026
        %v1028 = vsel %vm1014, %v1025, %v1027
        %v1029 = vshll.u32 %v989, 8
        %v1030 = vmul.u32.u64.compose %v1029, %v1028
        %v1031 = vextract.low.u32 %v1030
        %v1032 = vextract.high.u32 %v1030
        %v1033 = vmul.u32.u64.compose %v1029, %v1024
        %v1034 = vextract.low.u32 %v1033
        %v1035 = vextract.high.u32 %v1033
        %v1036 = vmul.u32 %v1029, %v1020
        %v1037 = vadd.s32 %v1032, %v1034
        %vm1038 = vc.u32 %v1032, %v1034
        %v1039 = vadd.s32 %v1035, 1
        %v1040 = vsel %vm1038, %v1039, %v1035
        %v1041 = vadd.s32 %v1036, %v1040
        %v1042 = vadd.s32 %v1041, 536870912
        %v1043 = vshrl.u32 %v1042, 30
        %v1044 = vshll.u32 %v1043, 30
        %v1045 = vsub.s32 %v1041, %v1044
        %vm1046 = vcmp.lt.s32.totalorder %v1045, 0
        %v1047 = vsub.s32 0, %v1045
        %v1048 = vsel %vm1046, %v1047, %v1045
        %v1049 = vclz %v1048
        %v1050 = vsub.s32 %v1049, 2
        %vm1051 = vcmp.gt.s32.totalorder 0, %v1050
        %v1052 = vsel %vm1051, 0, %v1050
        %v1053 = vsub.s32 32, %v1052
        %v1054 = vshll.u32 %v1045, %v1052
        %v1055 = vshrl.u32 %v1037, %v1053
        %v1056 = vor.u32 %v1054, %v1055
        %v1057 = vsub.s32 4294967266, %v1052
        %v1058 = vadd.s32 %v1057, 127
        %v1059 = vshll.u32 %v1058, 23
        %v1060 = vor.u32 4788187, %v1059
        %v1061 = vand.u32 2147483647, %v1060
        %v1063 = vcvt.s32.f32 %v1056
        %v1064 = vmul.f32 %v1063, %v1061
        %v1065 = vxor.u32 %v1064, 2147483648
        %v1066 = vsel %vm983, %v1065, %v1064
        %v1067 = vsub.s32 4, %v1043
        %v1068 = vsel %vm983, %v1067, %v1043
        %v1069 = vsel %vm982, %v648, %v1066
        %v1070 = vsel %vm982, 0, %v1068
        %v1071 = vcosq.f32.pop %v1069
        %v1072 = vsinq.f32.pop %v1069
        %vm1073 = vweird.f32 %v648
        %v1074 = vadd.s32 %v1070, 3
        %v1075 = vand.u32 %v1074, 3
        %vm1076 = vcmp.lt.s32.totalorder %v1075, 2
        %vm1077 = vcmp.eq.s32.totalorder %v1075, 0
        %v1078 = vxor.u32 %v1072, 2147483648
        %v1079 = vsel %vm1077, %v1071, %v1078
        %vm1080 = vcmp.eq.s32.totalorder %v1075, 2
        %v1081 = vxor.u32 %v1071, 2147483648
        %v1082 = vsel %vm1080, %v1081, %v1072
        %v1083 = vsel %vm1076, %v1079, %v1082
        %v1084 = vsel %vm1073, nan, %v1083
        %v1085 = vand.u32 2147483647, %v649
        %vm1086 = vcmp.le.f32.partialorder %v1085, 0.7853982
        %vm1087 = vcmp.lt.s32.totalorder %v649, 0
        %v1088 = vand.u32 %v649, 2139095040
        %v1089 = vshrl.u32 %v1088, 23
        %v1090 = vsub.s32 %v1089, 127
        %v1091 = vand.u32 2147483647, %v649
        %v1092 = vand.u32 %v1091, 8388607
        %v1093 = vor.u32 %v1092, 8388608
        %v1094 = vsub.s32 0, %v1093
        %v1095 = vadd.s32 %v1090, 1
        %vm1096 = vcmp.gt.s32.totalorder %v1095, 0
        %v1097 = vsel %vm1096, %v1095, 0
        %v1098 = vshrl.u32 %v1097, 5
        %v1099 = vand.u32 %v1097, 31
        %v1100 = vsub.s32 32, %v1099
        %v1101 = vshrl.u32 683565275, %v1100
        %v1102 = vshll.u32 683565275, %v1099
        %v1103 = vshrl.u32 2475754826, %v1100
        %v1104 = vor.u32 %v1102, %v1103
        %v1105 = vshll.u32 2475754826, %v1099
        %v1106 = vshrl.u32 2131351028, %v1100
        %v1107 = vor.u32 %v1105, %v1106
        %v1108 = vshll.u32 2131351028, %v1099
        %v1109 = vshrl.u32 2102212464, %v1100
        %v1110 = vor.u32 %v1108, %v1109
        %v1111 = vshll.u32 2102212464, %v1099
        %v1112 = vshrl.u32 920167782, %v1100
        %v1113 = vor.u32 %v1111, %v1112
        %v1114 = vshll.u32 920167782, %v1099
        %v1115 = vshrl.u32 1326507024, %v1100
        %v1116 = vor.u32 %v1114, %v1115
        %vm1117 = vcmp.lt.s32.totalorder %v1098, 1
        %vm1118 = vcmp.lt.s32.totalorder %v1098, 2
        %vm1119 = vcmp.lt.s32.totalorder %v1098, 3
        %vm1120 = vcmp.lt.s32.totalorder %v1098, 4
        %v1121 = vsel %vm1117, %v1101, %v1104
        %v1122 = vsel %vm1120, %v1110, 2102212464
        %v1123 = vsel %vm1119, %v1107, %v1122
        %v1124 = vsel %vm1118, %v1121, %v1123
        %v1125 = vsel %vm1117, %v1104, %v1107
        %v1126 = vsel %vm1120, %v1113, 920167782
        %v1127 = vsel %vm1119, %v1110, %v1126
        %v1128 = vsel %vm1118, %v1125, %v1127
        %v1129 = vsel %vm1117, %v1107, %v1110
        %v1130 = vsel %vm1120, %v1116, 1326507024
        %v1131 = vsel %vm1119, %v1113, %v1130
        %v1132 = vsel %vm1118, %v1129, %v1131
        %v1133 = vshll.u32 %v1093, 8
        %v1134 = vmul.u32.u64.compose %v1133, %v1132
        %v1135 = vextract.low.u32 %v1134
        %v1136 = vextract.high.u32 %v1134
        %v1137 = vmul.u32.u64.compose %v1133, %v1128
        %v1138 = vextract.low.u32 %v1137
        %v1139 = vextract.high.u32 %v1137
        %v1140 = vmul.u32 %v1133, %v1124
        %v1141 = vadd.s32 %v1136, %v1138
        %vm1142 = vc.u32 %v1136, %v1138
        %v1143 = vadd.s32 %v1139, 1
        %v1144 = vsel %vm1142, %v1143, %v1139
        %v1145 = vadd.s32 %v1140, %v1144
        %v1146 = vadd.s32 %v1145, 536870912
        %v1147 = vshrl.u32 %v1146, 30
        %v1148 = vshll.u32 %v1147, 30
        %v1149 = vsub.s32 %v1145, %v1148
        %vm1150 = vcmp.lt.s32.totalorder %v1149, 0
        %v1151 = vsub.s32 0, %v1149
        %v1152 = vsel %vm1150, %v1151, %v1149
        %v1153 = vclz %v1152
        %v1154 = vsub.s32 %v1153, 2
        %vm1155 = vcmp.gt.s32.totalorder 0, %v1154
        %v1156 = vsel %vm1155, 0, %v1154
        %v1157 = vsub.s32 32, %v1156
        %v1158 = vshll.u32 %v1149, %v1156
        %v1159 = vshrl.u32 %v1141, %v1157
        %v1160 = vor.u32 %v1158, %v1159
        %v1161 = vsub.s32 4294967266, %v1156
        %v1162 = vadd.s32 %v1161, 127
        %v1163 = vshll.u32 %v1162, 23
        %v1164 = vor.u32 4788187, %v1163
        %v1165 = vand.u32 2147483647, %v1164
        %v1167 = vcvt.s32.f32 %v1160
        %v1168 = vmul.f32 %v1167, %v1165
        %v1169 = vxor.u32 %v1168, 2147483648
        %v1170 = vsel %vm1087, %v1169, %v1168
        %v1171 = vsub.s32 4, %v1147
        %v1172 = vsel %vm1087, %v1171, %v1147
        %v1173 = vsel %vm1086, %v649, %v1170
        %v1174 = vsel %vm1086, 0, %v1172
        %v1175 = vcosq.f32.pop %v1173
        %v1176 = vsinq.f32.pop %v1173
        %vm1177 = vweird.f32 %v649
        %v1178 = vadd.s32 %v1174, 3
        %v1179 = vand.u32 %v1178, 3
        %vm1180 = vcmp.lt.s32.totalorder %v1179, 2
        %vm1181 = vcmp.eq.s32.totalorder %v1179, 0
        %v1182 = vxor.u32 %v1176, 2147483648
        %v1183 = vsel %vm1181, %v1175, %v1182
        %vm1184 = vcmp.eq.s32.totalorder %v1179, 2
        %v1185 = vxor.u32 %v1175, 2147483648
        %v1186 = vsel %vm1184, %v1185, %v1176
        %v1187 = vsel %vm1180, %v1183, %v1186
        %v1188 = vsel %vm1177, nan, %v1187
        %v1189 = vand.u32 2147483647, %v650
        %vm1190 = vcmp.le.f32.partialorder %v1189, 0.7853982
        %vm1191 = vcmp.lt.s32.totalorder %v650, 0
        %v1192 = vand.u32 %v650, 2139095040
        %v1193 = vshrl.u32 %v1192, 23
        %v1194 = vsub.s32 %v1193, 127
        %v1195 = vand.u32 2147483647, %v650
        %v1196 = vand.u32 %v1195, 8388607
        %v1197 = vor.u32 %v1196, 8388608
        %v1198 = vsub.s32 0, %v1197
        %v1199 = vadd.s32 %v1194, 1
        %vm1200 = vcmp.gt.s32.totalorder %v1199, 0
        %v1201 = vsel %vm1200, %v1199, 0
        %v1202 = vshrl.u32 %v1201, 5
        %v1203 = vand.u32 %v1201, 31
        %v1204 = vsub.s32 32, %v1203
        %v1205 = vshrl.u32 683565275, %v1204
        %v1206 = vshll.u32 683565275, %v1203
        %v1207 = vshrl.u32 2475754826, %v1204
        %v1208 = vor.u32 %v1206, %v1207
        %v1209 = vshll.u32 2475754826, %v1203
        %v1210 = vshrl.u32 2131351028, %v1204
        %v1211 = vor.u32 %v1209, %v1210
        %v1212 = vshll.u32 2131351028, %v1203
        %v1213 = vshrl.u32 2102212464, %v1204
        %v1214 = vor.u32 %v1212, %v1213
        %v1215 = vshll.u32 2102212464, %v1203
        %v1216 = vshrl.u32 920167782, %v1204
        %v1217 = vor.u32 %v1215, %v1216
        %v1218 = vshll.u32 920167782, %v1203
        %v1219 = vshrl.u32 1326507024, %v1204
        %v1220 = vor.u32 %v1218, %v1219
        %vm1221 = vcmp.lt.s32.totalorder %v1202, 1
        %vm1222 = vcmp.lt.s32.totalorder %v1202, 2
        %vm1223 = vcmp.lt.s32.totalorder %v1202, 3
        %vm1224 = vcmp.lt.s32.totalorder %v1202, 4
        %v1225 = vsel %vm1221, %v1205, %v1208
        %v1226 = vsel %vm1224, %v1214, 2102212464
        %v1227 = vsel %vm1223, %v1211, %v1226
        %v1228 = vsel %vm1222, %v1225, %v1227
        %v1229 = vsel %vm1221, %v1208, %v1211
        %v1230 = vsel %vm1224, %v1217, 920167782
        %v1231 = vsel %vm1223, %v1214, %v1230
        %v1232 = vsel %vm1222, %v1229, %v1231
        %v1233 = vsel %vm1221, %v1211, %v1214
        %v1234 = vsel %vm1224, %v1220, 1326507024
        %v1235 = vsel %vm1223, %v1217, %v1234
        %v1236 = vsel %vm1222, %v1233, %v1235
        %v1237 = vshll.u32 %v1197, 8
        %v1238 = vmul.u32.u64.compose %v1237, %v1236
        %v1239 = vextract.low.u32 %v1238
        %v1240 = vextract.high.u32 %v1238
        %v1241 = vmul.u32.u64.compose %v1237, %v1232
        %v1242 = vextract.low.u32 %v1241
        %v1243 = vextract.high.u32 %v1241
        %v1244 = vmul.u32 %v1237, %v1228
        %v1245 = vadd.s32 %v1240, %v1242
        %vm1246 = vc.u32 %v1240, %v1242
        %v1247 = vadd.s32 %v1243, 1
        %v1248 = vsel %vm1246, %v1247, %v1243
        %v1249 = vadd.s32 %v1244, %v1248
        %v1250 = vadd.s32 %v1249, 536870912
        %v1251 = vshrl.u32 %v1250, 30
        %v1252 = vshll.u32 %v1251, 30
        %v1253 = vsub.s32 %v1249, %v1252
        %vm1254 = vcmp.lt.s32.totalorder %v1253, 0
        %v1255 = vsub.s32 0, %v1253
        %v1256 = vsel %vm1254, %v1255, %v1253
        %v1257 = vclz %v1256
        %v1258 = vsub.s32 %v1257, 2
        %vm1259 = vcmp.gt.s32.totalorder 0, %v1258
        %v1260 = vsel %vm1259, 0, %v1258
        %v1261 = vsub.s32 32, %v1260
        %v1262 = vshll.u32 %v1253, %v1260
        %v1263 = vshrl.u32 %v1245, %v1261
        %v1264 = vor.u32 %v1262, %v1263
        %v1265 = vsub.s32 4294967266, %v1260
        %v1266 = vadd.s32 %v1265, 127
        %v1267 = vshll.u32 %v1266, 23
        %v1268 = vor.u32 4788187, %v1267
        %v1269 = vand.u32 2147483647, %v1268
        %v1271 = vcvt.s32.f32 %v1264
        %v1272 = vmul.f32 %v1271, %v1269
        %v1273 = vxor.u32 %v1272, 2147483648
        %v1274 = vsel %vm1191, %v1273, %v1272
        %v1275 = vsub.s32 4, %v1251
        %v1276 = vsel %vm1191, %v1275, %v1251
        %v1277 = vsel %vm1190, %v650, %v1274
        %v1278 = vsel %vm1190, 0, %v1276
        %v1279 = vcosq.f32.pop %v1277
        %v1280 = vsinq.f32.pop %v1277
        %vm1281 = vweird.f32 %v650
        %v1282 = vadd.s32 %v1278, 3
        %v1283 = vand.u32 %v1282, 3
        %vm1284 = vcmp.lt.s32.totalorder %v1283, 2
        %vm1285 = vcmp.eq.s32.totalorder %v1283, 0
        %v1286 = vxor.u32 %v1280, 2147483648
        %v1287 = vsel %vm1285, %v1279, %v1286
        %vm1288 = vcmp.eq.s32.totalorder %v1283, 2
        %v1289 = vxor.u32 %v1279, 2147483648
        %v1290 = vsel %vm1288, %v1289, %v1280
        %v1291 = vsel %vm1284, %v1287, %v1290
        %v1292 = vsel %vm1281, nan, %v1291
        %v1293 = vand.u32 2147483647, %v651
        %vm1294 = vcmp.le.f32.partialorder %v1293, 0.7853982
        %vm1295 = vcmp.lt.s32.totalorder %v651, 0
        %v1296 = vand.u32 %v651, 2139095040
        %v1297 = vshrl.u32 %v1296, 23
        %v1298 = vsub.s32 %v1297, 127
        %v1299 = vand.u32 2147483647, %v651
        %v1300 = vand.u32 %v1299, 8388607
        %v1301 = vor.u32 %v1300, 8388608
        %v1302 = vsub.s32 0, %v1301
        %v1303 = vadd.s32 %v1298, 1
        %vm1304 = vcmp.gt.s32.totalorder %v1303, 0
        %v1305 = vsel %vm1304, %v1303, 0
        %v1306 = vshrl.u32 %v1305, 5
        %v1307 = vand.u32 %v1305, 31
        %v1308 = vsub.s32 32, %v1307
        %v1309 = vshrl.u32 683565275, %v1308
        %v1310 = vshll.u32 683565275, %v1307
        %v1311 = vshrl.u32 2475754826, %v1308
        %v1312 = vor.u32 %v1310, %v1311
        %v1313 = vshll.u32 2475754826, %v1307
        %v1314 = vshrl.u32 2131351028, %v1308
        %v1315 = vor.u32 %v1313, %v1314
        %v1316 = vshll.u32 2131351028, %v1307
        %v1317 = vshrl.u32 2102212464, %v1308
        %v1318 = vor.u32 %v1316, %v1317
        %v1319 = vshll.u32 2102212464, %v1307
        %v1320 = vshrl.u32 920167782, %v1308
        %v1321 = vor.u32 %v1319, %v1320
        %v1322 = vshll.u32 920167782, %v1307
        %v1323 = vshrl.u32 1326507024, %v1308
        %v1324 = vor.u32 %v1322, %v1323
        %vm1325 = vcmp.lt.s32.totalorder %v1306, 1
        %vm1326 = vcmp.lt.s32.totalorder %v1306, 2
        %vm1327 = vcmp.lt.s32.totalorder %v1306, 3
        %vm1328 = vcmp.lt.s32.totalorder %v1306, 4
        %v1329 = vsel %vm1325, %v1309, %v1312
        %v1330 = vsel %vm1328, %v1318, 2102212464
        %v1331 = vsel %vm1327, %v1315, %v1330
        %v1332 = vsel %vm1326, %v1329, %v1331
        %v1333 = vsel %vm1325, %v1312, %v1315
        %v1334 = vsel %vm1328, %v1321, 920167782
        %v1335 = vsel %vm1327, %v1318, %v1334
        %v1336 = vsel %vm1326, %v1333, %v1335
        %v1337 = vsel %vm1325, %v1315, %v1318
        %v1338 = vsel %vm1328, %v1324, 1326507024
        %v1339 = vsel %vm1327, %v1321, %v1338
        %v1340 = vsel %vm1326, %v1337, %v1339
        %v1341 = vshll.u32 %v1301, 8
        %v1342 = vmul.u32.u64.compose %v1341, %v1340
        %v1343 = vextract.low.u32 %v1342
        %v1344 = vextract.high.u32 %v1342
        %v1345 = vmul.u32.u64.compose %v1341, %v1336
        %v1346 = vextract.low.u32 %v1345
        %v1347 = vextract.high.u32 %v1345
        %v1348 = vmul.u32 %v1341, %v1332
        %v1349 = vadd.s32 %v1344, %v1346
        %vm1350 = vc.u32 %v1344, %v1346
        %v1351 = vadd.s32 %v1347, 1
        %v1352 = vsel %vm1350, %v1351, %v1347
        %v1353 = vadd.s32 %v1348, %v1352
        %v1354 = vadd.s32 %v1353, 536870912
        %v1355 = vshrl.u32 %v1354, 30
        %v1356 = vshll.u32 %v1355, 30
        %v1357 = vsub.s32 %v1353, %v1356
        %vm1358 = vcmp.lt.s32.totalorder %v1357, 0
        %v1359 = vsub.s32 0, %v1357
        %v1360 = vsel %vm1358, %v1359, %v1357
        %v1361 = vclz %v1360
        %v1362 = vsub.s32 %v1361, 2
        %vm1363 = vcmp.gt.s32.totalorder 0, %v1362
        %v1364 = vsel %vm1363, 0, %v1362
        %v1365 = vsub.s32 32, %v1364
        %v1366 = vshll.u32 %v1357, %v1364
        %v1367 = vshrl.u32 %v1349, %v1365
        %v1368 = vor.u32 %v1366, %v1367
        %v1369 = vsub.s32 4294967266, %v1364
        %v1370 = vadd.s32 %v1369, 127
        %v1371 = vshll.u32 %v1370, 23
        %v1372 = vor.u32 4788187, %v1371
        %v1373 = vand.u32 2147483647, %v1372
        %v1375 = vcvt.s32.f32 %v1368
        %v1376 = vmul.f32 %v1375, %v1373
        %v1377 = vxor.u32 %v1376, 2147483648
        %v1378 = vsel %vm1295, %v1377, %v1376
        %v1379 = vsub.s32 4, %v1355
        %v1380 = vsel %vm1295, %v1379, %v1355
        %v1381 = vsel %vm1294, %v651, %v1378
        %v1382 = vsel %vm1294, 0, %v1380
        %v1383 = vcosq.f32.pop %v1381
        %v1384 = vsinq.f32.pop %v1381
        %vm1385 = vweird.f32 %v651
        %v1386 = vadd.s32 %v1382, 3
        %v1387 = vand.u32 %v1386, 3
        %vm1388 = vcmp.lt.s32.totalorder %v1387, 2
        %vm1389 = vcmp.eq.s32.totalorder %v1387, 0
        %v1390 = vxor.u32 %v1384, 2147483648
        %v1391 = vsel %vm1389, %v1383, %v1390
        %vm1392 = vcmp.eq.s32.totalorder %v1387, 2
        %v1393 = vxor.u32 %v1383, 2147483648
        %v1394 = vsel %vm1392, %v1393, %v1384
        %v1395 = vsel %vm1388, %v1391, %v1394
        %v1396 = vsel %vm1385, nan, %v1395
        %v1397 = vand.u32 2147483647, %v652
        %vm1398 = vcmp.le.f32.partialorder %v1397, 0.7853982
        %vm1399 = vcmp.lt.s32.totalorder %v652, 0
        %v1400 = vand.u32 %v652, 2139095040
        %v1401 = vshrl.u32 %v1400, 23
        %v1402 = vsub.s32 %v1401, 127
        %v1403 = vand.u32 2147483647, %v652
        %v1404 = vand.u32 %v1403, 8388607
        %v1405 = vor.u32 %v1404, 8388608
        %v1406 = vsub.s32 0, %v1405
        %v1407 = vadd.s32 %v1402, 1
        %vm1408 = vcmp.gt.s32.totalorder %v1407, 0
        %v1409 = vsel %vm1408, %v1407, 0
        %v1410 = vshrl.u32 %v1409, 5
        %v1411 = vand.u32 %v1409, 31
        %v1412 = vsub.s32 32, %v1411
        %v1413 = vshrl.u32 683565275, %v1412
        %v1414 = vshll.u32 683565275, %v1411
        %v1415 = vshrl.u32 2475754826, %v1412
        %v1416 = vor.u32 %v1414, %v1415
        %v1417 = vshll.u32 2475754826, %v1411
        %v1418 = vshrl.u32 2131351028, %v1412
        %v1419 = vor.u32 %v1417, %v1418
        %v1420 = vshll.u32 2131351028, %v1411
        %v1421 = vshrl.u32 2102212464, %v1412
        %v1422 = vor.u32 %v1420, %v1421
        %v1423 = vshll.u32 2102212464, %v1411
        %v1424 = vshrl.u32 920167782, %v1412
        %v1425 = vor.u32 %v1423, %v1424
        %v1426 = vshll.u32 920167782, %v1411
        %v1427 = vshrl.u32 1326507024, %v1412
        %v1428 = vor.u32 %v1426, %v1427
        %vm1429 = vcmp.lt.s32.totalorder %v1410, 1
        %vm1430 = vcmp.lt.s32.totalorder %v1410, 2
        %vm1431 = vcmp.lt.s32.totalorder %v1410, 3
        %vm1432 = vcmp.lt.s32.totalorder %v1410, 4
        %v1433 = vsel %vm1429, %v1413, %v1416
        %v1434 = vsel %vm1432, %v1422, 2102212464
        %v1435 = vsel %vm1431, %v1419, %v1434
        %v1436 = vsel %vm1430, %v1433, %v1435
        %v1437 = vsel %vm1429, %v1416, %v1419
        %v1438 = vsel %vm1432, %v1425, 920167782
        %v1439 = vsel %vm1431, %v1422, %v1438
        %v1440 = vsel %vm1430, %v1437, %v1439
        %v1441 = vsel %vm1429, %v1419, %v1422
        %v1442 = vsel %vm1432, %v1428, 1326507024
        %v1443 = vsel %vm1431, %v1425, %v1442
        %v1444 = vsel %vm1430, %v1441, %v1443
        %v1445 = vshll.u32 %v1405, 8
        %v1446 = vmul.u32.u64.compose %v1445, %v1444
        %v1447 = vextract.low.u32 %v1446
        %v1448 = vextract.high.u32 %v1446
        %v1449 = vmul.u32.u64.compose %v1445, %v1440
        %v1450 = vextract.low.u32 %v1449
        %v1451 = vextract.high.u32 %v1449
        %v1452 = vmul.u32 %v1445, %v1436
        %v1453 = vadd.s32 %v1448, %v1450
        %vm1454 = vc.u32 %v1448, %v1450
        %v1455 = vadd.s32 %v1451, 1
        %v1456 = vsel %vm1454, %v1455, %v1451
        %v1457 = vadd.s32 %v1452, %v1456
        %v1458 = vadd.s32 %v1457, 536870912
        %v1459 = vshrl.u32 %v1458, 30
        %v1460 = vshll.u32 %v1459, 30
        %v1461 = vsub.s32 %v1457, %v1460
        %vm1462 = vcmp.lt.s32.totalorder %v1461, 0
        %v1463 = vsub.s32 0, %v1461
        %v1464 = vsel %vm1462, %v1463, %v1461
        %v1465 = vclz %v1464
        %v1466 = vsub.s32 %v1465, 2
        %vm1467 = vcmp.gt.s32.totalorder 0, %v1466
        %v1468 = vsel %vm1467, 0, %v1466
        %v1469 = vsub.s32 32, %v1468
        %v1470 = vshll.u32 %v1461, %v1468
        %v1471 = vshrl.u32 %v1453, %v1469
        %v1472 = vor.u32 %v1470, %v1471
        %v1473 = vsub.s32 4294967266, %v1468
        %v1474 = vadd.s32 %v1473, 127
        %v1475 = vshll.u32 %v1474, 23
        %v1476 = vor.u32 4788187, %v1475
        %v1477 = vand.u32 2147483647, %v1476
        %v1479 = vcvt.s32.f32 %v1472
        %v1480 = vmul.f32 %v1479, %v1477
        %v1481 = vxor.u32 %v1480, 2147483648
        %v1482 = vsel %vm1399, %v1481, %v1480
        %v1483 = vsub.s32 4, %v1459
        %v1484 = vsel %vm1399, %v1483, %v1459
        %v1485 = vsel %vm1398, %v652, %v1482
        %v1486 = vsel %vm1398, 0, %v1484
        %v1487 = vcosq.f32.pop %v1485
        %v1488 = vsinq.f32.pop %v1485
        %vm1489 = vweird.f32 %v652
        %v1490 = vadd.s32 %v1486, 3
        %v1491 = vand.u32 %v1490, 3
        %vm1492 = vcmp.lt.s32.totalorder %v1491, 2
        %vm1493 = vcmp.eq.s32.totalorder %v1491, 0
        %v1494 = vxor.u32 %v1488, 2147483648
        %v1495 = vsel %vm1493, %v1487, %v1494
        %vm1496 = vcmp.eq.s32.totalorder %v1491, 2
        %v1497 = vxor.u32 %v1487, 2147483648
        %v1498 = vsel %vm1496, %v1497, %v1488
        %v1499 = vsel %vm1492, %v1495, %v1498
        %v1500 = vsel %vm1489, nan, %v1499
        %v1501 = vand.u32 2147483647, %v653
        %vm1502 = vcmp.le.f32.partialorder %v1501, 0.7853982
        %vm1503 = vcmp.lt.s32.totalorder %v653, 0
        %v1504 = vand.u32 %v653, 2139095040
        %v1505 = vshrl.u32 %v1504, 23
        %v1506 = vsub.s32 %v1505, 127
        %v1507 = vand.u32 2147483647, %v653
        %v1508 = vand.u32 %v1507, 8388607
        %v1509 = vor.u32 %v1508, 8388608
        %v1510 = vsub.s32 0, %v1509
        %v1511 = vadd.s32 %v1506, 1
        %vm1512 = vcmp.gt.s32.totalorder %v1511, 0
        %v1513 = vsel %vm1512, %v1511, 0
        %v1514 = vshrl.u32 %v1513, 5
        %v1515 = vand.u32 %v1513, 31
        %v1516 = vsub.s32 32, %v1515
        %v1517 = vshrl.u32 683565275, %v1516
        %v1518 = vshll.u32 683565275, %v1515
        %v1519 = vshrl.u32 2475754826, %v1516
        %v1520 = vor.u32 %v1518, %v1519
        %v1521 = vshll.u32 2475754826, %v1515
        %v1522 = vshrl.u32 2131351028, %v1516
        %v1523 = vor.u32 %v1521, %v1522
        %v1524 = vshll.u32 2131351028, %v1515
        %v1525 = vshrl.u32 2102212464, %v1516
        %v1526 = vor.u32 %v1524, %v1525
        %v1527 = vshll.u32 2102212464, %v1515
        %v1528 = vshrl.u32 920167782, %v1516
        %v1529 = vor.u32 %v1527, %v1528
        %v1530 = vshll.u32 920167782, %v1515
        %v1531 = vshrl.u32 1326507024, %v1516
        %v1532 = vor.u32 %v1530, %v1531
        %vm1533 = vcmp.lt.s32.totalorder %v1514, 1
        %vm1534 = vcmp.lt.s32.totalorder %v1514, 2
        %vm1535 = vcmp.lt.s32.totalorder %v1514, 3
        %vm1536 = vcmp.lt.s32.totalorder %v1514, 4
        %v1537 = vsel %vm1533, %v1517, %v1520
        %v1538 = vsel %vm1536, %v1526, 2102212464
        %v1539 = vsel %vm1535, %v1523, %v1538
        %v1540 = vsel %vm1534, %v1537, %v1539
        %v1541 = vsel %vm1533, %v1520, %v1523
        %v1542 = vsel %vm1536, %v1529, 920167782
        %v1543 = vsel %vm1535, %v1526, %v1542
        %v1544 = vsel %vm1534, %v1541, %v1543
        %v1545 = vsel %vm1533, %v1523, %v1526
        %v1546 = vsel %vm1536, %v1532, 1326507024
        %v1547 = vsel %vm1535, %v1529, %v1546
        %v1548 = vsel %vm1534, %v1545, %v1547
        %v1549 = vshll.u32 %v1509, 8
        %v1550 = vmul.u32.u64.compose %v1549, %v1548
        %v1551 = vextract.low.u32 %v1550
        %v1552 = vextract.high.u32 %v1550
        %v1553 = vmul.u32.u64.compose %v1549, %v1544
        %v1554 = vextract.low.u32 %v1553
        %v1555 = vextract.high.u32 %v1553
        %v1556 = vmul.u32 %v1549, %v1540
        %v1557 = vadd.s32 %v1552, %v1554
        %vm1558 = vc.u32 %v1552, %v1554
        %v1559 = vadd.s32 %v1555, 1
        %v1560 = vsel %vm1558, %v1559, %v1555
        %v1561 = vadd.s32 %v1556, %v1560
        %v1562 = vadd.s32 %v1561, 536870912
        %v1563 = vshrl.u32 %v1562, 30
        %v1564 = vshll.u32 %v1563, 30
        %v1565 = vsub.s32 %v1561, %v1564
        %vm1566 = vcmp.lt.s32.totalorder %v1565, 0
        %v1567 = vsub.s32 0, %v1565
        %v1568 = vsel %vm1566, %v1567, %v1565
        %v1569 = vclz %v1568
        %v1570 = vsub.s32 %v1569, 2
        %vm1571 = vcmp.gt.s32.totalorder 0, %v1570
        %v1572 = vsel %vm1571, 0, %v1570
        %v1573 = vsub.s32 32, %v1572
        %v1574 = vshll.u32 %v1565, %v1572
        %v1575 = vshrl.u32 %v1557, %v1573
        %v1576 = vor.u32 %v1574, %v1575
        %v1577 = vsub.s32 4294967266, %v1572
        %v1578 = vadd.s32 %v1577, 127
        %v1579 = vshll.u32 %v1578, 23
        %v1580 = vor.u32 4788187, %v1579
        %v1581 = vand.u32 2147483647, %v1580
        %v1583 = vcvt.s32.f32 %v1576
        %v1584 = vmul.f32 %v1583, %v1581
        %v1585 = vxor.u32 %v1584, 2147483648
        %v1586 = vsel %vm1503, %v1585, %v1584
        %v1587 = vsub.s32 4, %v1563
        %v1588 = vsel %vm1503, %v1587, %v1563
        %v1589 = vsel %vm1502, %v653, %v1586
        %v1590 = vsel %vm1502, 0, %v1588
        %v1591 = vcosq.f32.pop %v1589
        %v1592 = vsinq.f32.pop %v1589
        %vm1593 = vweird.f32 %v653
        %v1594 = vadd.s32 %v1590, 3
        %v1595 = vand.u32 %v1594, 3
        %vm1596 = vcmp.lt.s32.totalorder %v1595, 2
        %vm1597 = vcmp.eq.s32.totalorder %v1595, 0
        %v1598 = vxor.u32 %v1592, 2147483648
        %v1599 = vsel %vm1597, %v1591, %v1598
        %vm1600 = vcmp.eq.s32.totalorder %v1595, 2
        %v1601 = vxor.u32 %v1591, 2147483648
        %v1602 = vsel %vm1600, %v1601, %v1592
        %v1603 = vsel %vm1596, %v1599, %v1602
        %v1604 = vsel %vm1593, nan, %v1603
        %v1605 = vand.u32 2147483647, %v654
        %vm1606 = vcmp.le.f32.partialorder %v1605, 0.7853982
        %vm1607 = vcmp.lt.s32.totalorder %v654, 0
        %v1608 = vand.u32 %v654, 2139095040
        %v1609 = vshrl.u32 %v1608, 23
        %v1610 = vsub.s32 %v1609, 127
        %v1611 = vand.u32 2147483647, %v654
        %v1612 = vand.u32 %v1611, 8388607
        %v1613 = vor.u32 %v1612, 8388608
        %v1614 = vsub.s32 0, %v1613
        %v1615 = vadd.s32 %v1610, 1
        %vm1616 = vcmp.gt.s32.totalorder %v1615, 0
        %v1617 = vsel %vm1616, %v1615, 0
        %v1618 = vshrl.u32 %v1617, 5
        %v1619 = vand.u32 %v1617, 31
        %v1620 = vsub.s32 32, %v1619
        %v1621 = vshrl.u32 683565275, %v1620
        %v1622 = vshll.u32 683565275, %v1619
        %v1623 = vshrl.u32 2475754826, %v1620
        %v1624 = vor.u32 %v1622, %v1623
        %v1625 = vshll.u32 2475754826, %v1619
        %v1626 = vshrl.u32 2131351028, %v1620
        %v1627 = vor.u32 %v1625, %v1626
        %v1628 = vshll.u32 2131351028, %v1619
        %v1629 = vshrl.u32 2102212464, %v1620
        %v1630 = vor.u32 %v1628, %v1629
        %v1631 = vshll.u32 2102212464, %v1619
        %v1632 = vshrl.u32 920167782, %v1620
        %v1633 = vor.u32 %v1631, %v1632
        %v1634 = vshll.u32 920167782, %v1619
        %v1635 = vshrl.u32 1326507024, %v1620
        %v1636 = vor.u32 %v1634, %v1635
        %vm1637 = vcmp.lt.s32.totalorder %v1618, 1
        %vm1638 = vcmp.lt.s32.totalorder %v1618, 2
        %vm1639 = vcmp.lt.s32.totalorder %v1618, 3
        %vm1640 = vcmp.lt.s32.totalorder %v1618, 4
        %v1641 = vsel %vm1637, %v1621, %v1624
        %v1642 = vsel %vm1640, %v1630, 2102212464
        %v1643 = vsel %vm1639, %v1627, %v1642
        %v1644 = vsel %vm1638, %v1641, %v1643
        %v1645 = vsel %vm1637, %v1624, %v1627
        %v1646 = vsel %vm1640, %v1633, 920167782
        %v1647 = vsel %vm1639, %v1630, %v1646
        %v1648 = vsel %vm1638, %v1645, %v1647
        %v1649 = vsel %vm1637, %v1627, %v1630
        %v1650 = vsel %vm1640, %v1636, 1326507024
        %v1651 = vsel %vm1639, %v1633, %v1650
        %v1652 = vsel %vm1638, %v1649, %v1651
        %v1653 = vshll.u32 %v1613, 8
        %v1654 = vmul.u32.u64.compose %v1653, %v1652
        %v1655 = vextract.low.u32 %v1654
        %v1656 = vextract.high.u32 %v1654
        %v1657 = vmul.u32.u64.compose %v1653, %v1648
        %v1658 = vextract.low.u32 %v1657
        %v1659 = vextract.high.u32 %v1657
        %v1660 = vmul.u32 %v1653, %v1644
        %v1661 = vadd.s32 %v1656, %v1658
        %vm1662 = vc.u32 %v1656, %v1658
        %v1663 = vadd.s32 %v1659, 1
        %v1664 = vsel %vm1662, %v1663, %v1659
        %v1665 = vadd.s32 %v1660, %v1664
        %v1666 = vadd.s32 %v1665, 536870912
        %v1667 = vshrl.u32 %v1666, 30
        %v1668 = vshll.u32 %v1667, 30
        %v1669 = vsub.s32 %v1665, %v1668
        %vm1670 = vcmp.lt.s32.totalorder %v1669, 0
        %v1671 = vsub.s32 0, %v1669
        %v1672 = vsel %vm1670, %v1671, %v1669
        %v1673 = vclz %v1672
        %v1674 = vsub.s32 %v1673, 2
        %vm1675 = vcmp.gt.s32.totalorder 0, %v1674
        %v1676 = vsel %vm1675, 0, %v1674
        %v1677 = vsub.s32 32, %v1676
        %v1678 = vshll.u32 %v1669, %v1676
        %v1679 = vshrl.u32 %v1661, %v1677
        %v1680 = vor.u32 %v1678, %v1679
        %v1681 = vsub.s32 4294967266, %v1676
        %v1682 = vadd.s32 %v1681, 127
        %v1683 = vshll.u32 %v1682, 23
        %v1684 = vor.u32 4788187, %v1683
        %v1685 = vand.u32 2147483647, %v1684
        %v1687 = vcvt.s32.f32 %v1680
        %v1688 = vmul.f32 %v1687, %v1685
        %v1689 = vxor.u32 %v1688, 2147483648
        %v1690 = vsel %vm1607, %v1689, %v1688
        %v1691 = vsub.s32 4, %v1667
        %v1692 = vsel %vm1607, %v1691, %v1667
        %v1693 = vsel %vm1606, %v654, %v1690
        %v1694 = vsel %vm1606, 0, %v1692
        %v1695 = vcosq.f32.pop %v1693
        %v1696 = vsinq.f32.pop %v1693
        %vm1697 = vweird.f32 %v654
        %v1698 = vadd.s32 %v1694, 3
        %v1699 = vand.u32 %v1698, 3
        %vm1700 = vcmp.lt.s32.totalorder %v1699, 2
        %vm1701 = vcmp.eq.s32.totalorder %v1699, 0
        %v1702 = vxor.u32 %v1696, 2147483648
        %v1703 = vsel %vm1701, %v1695, %v1702
        %vm1704 = vcmp.eq.s32.totalorder %v1699, 2
        %v1705 = vxor.u32 %v1695, 2147483648
        %v1706 = vsel %vm1704, %v1705, %v1696
        %v1707 = vsel %vm1700, %v1703, %v1706
        %v1708 = vsel %vm1697, nan, %v1707
        %v1709 = vand.u32 2147483647, %v655
        %vm1710 = vcmp.le.f32.partialorder %v1709, 0.7853982
        %vm1711 = vcmp.lt.s32.totalorder %v655, 0
        %v1712 = vand.u32 %v655, 2139095040
        %v1713 = vshrl.u32 %v1712, 23
        %v1714 = vsub.s32 %v1713, 127
        %v1715 = vand.u32 2147483647, %v655
        %v1716 = vand.u32 %v1715, 8388607
        %v1717 = vor.u32 %v1716, 8388608
        %v1718 = vsub.s32 0, %v1717
        %v1719 = vadd.s32 %v1714, 1
        %vm1720 = vcmp.gt.s32.totalorder %v1719, 0
        %v1721 = vsel %vm1720, %v1719, 0
        %v1722 = vshrl.u32 %v1721, 5
        %v1723 = vand.u32 %v1721, 31
        %v1724 = vsub.s32 32, %v1723
        %v1725 = vshrl.u32 683565275, %v1724
        %v1726 = vshll.u32 683565275, %v1723
        %v1727 = vshrl.u32 2475754826, %v1724
        %v1728 = vor.u32 %v1726, %v1727
        %v1729 = vshll.u32 2475754826, %v1723
        %v1730 = vshrl.u32 2131351028, %v1724
        %v1731 = vor.u32 %v1729, %v1730
        %v1732 = vshll.u32 2131351028, %v1723
        %v1733 = vshrl.u32 2102212464, %v1724
        %v1734 = vor.u32 %v1732, %v1733
        %v1735 = vshll.u32 2102212464, %v1723
        %v1736 = vshrl.u32 920167782, %v1724
        %v1737 = vor.u32 %v1735, %v1736
        %v1738 = vshll.u32 920167782, %v1723
        %v1739 = vshrl.u32 1326507024, %v1724
        %v1740 = vor.u32 %v1738, %v1739
        %vm1741 = vcmp.lt.s32.totalorder %v1722, 1
        %vm1742 = vcmp.lt.s32.totalorder %v1722, 2
        %vm1743 = vcmp.lt.s32.totalorder %v1722, 3
        %vm1744 = vcmp.lt.s32.totalorder %v1722, 4
        %v1745 = vsel %vm1741, %v1725, %v1728
        %v1746 = vsel %vm1744, %v1734, 2102212464
        %v1747 = vsel %vm1743, %v1731, %v1746
        %v1748 = vsel %vm1742, %v1745, %v1747
        %v1749 = vsel %vm1741, %v1728, %v1731
        %v1750 = vsel %vm1744, %v1737, 920167782
        %v1751 = vsel %vm1743, %v1734, %v1750
        %v1752 = vsel %vm1742, %v1749, %v1751
        %v1753 = vsel %vm1741, %v1731, %v1734
        %v1754 = vsel %vm1744, %v1740, 1326507024
        %v1755 = vsel %vm1743, %v1737, %v1754
        %v1756 = vsel %vm1742, %v1753, %v1755
        %v1757 = vshll.u32 %v1717, 8
        %v1758 = vmul.u32.u64.compose %v1757, %v1756
        %v1759 = vextract.low.u32 %v1758
        %v1760 = vextract.high.u32 %v1758
        %v1761 = vmul.u32.u64.compose %v1757, %v1752
        %v1762 = vextract.low.u32 %v1761
        %v1763 = vextract.high.u32 %v1761
        %v1764 = vmul.u32 %v1757, %v1748
        %v1765 = vadd.s32 %v1760, %v1762
        %vm1766 = vc.u32 %v1760, %v1762
        %v1767 = vadd.s32 %v1763, 1
        %v1768 = vsel %vm1766, %v1767, %v1763
        %v1769 = vadd.s32 %v1764, %v1768
        %v1770 = vadd.s32 %v1769, 536870912
        %v1771 = vshrl.u32 %v1770, 30
        %v1772 = vshll.u32 %v1771, 30
        %v1773 = vsub.s32 %v1769, %v1772
        %vm1774 = vcmp.lt.s32.totalorder %v1773, 0
        %v1775 = vsub.s32 0, %v1773
        %v1776 = vsel %vm1774, %v1775, %v1773
        %v1777 = vclz %v1776
        %v1778 = vsub.s32 %v1777, 2
        %vm1779 = vcmp.gt.s32.totalorder 0, %v1778
        %v1780 = vsel %vm1779, 0, %v1778
        %v1781 = vsub.s32 32, %v1780
        %v1782 = vshll.u32 %v1773, %v1780
        %v1783 = vshrl.u32 %v1765, %v1781
        %v1784 = vor.u32 %v1782, %v1783
        %v1785 = vsub.s32 4294967266, %v1780
        %v1786 = vadd.s32 %v1785, 127
        %v1787 = vshll.u32 %v1786, 23
        %v1788 = vor.u32 4788187, %v1787
        %v1789 = vand.u32 2147483647, %v1788
        %v1791 = vcvt.s32.f32 %v1784
        %v1792 = vmul.f32 %v1791, %v1789
        %v1793 = vxor.u32 %v1792, 2147483648
        %v1794 = vsel %vm1711, %v1793, %v1792
        %v1795 = vsub.s32 4, %v1771
        %v1796 = vsel %vm1711, %v1795, %v1771
        %v1797 = vsel %vm1710, %v655, %v1794
        %v1798 = vsel %vm1710, 0, %v1796
        %v1799 = vcosq.f32.pop %v1797
        %v1800 = vsinq.f32.pop %v1797
        %vm1801 = vweird.f32 %v655
        %v1802 = vadd.s32 %v1798, 3
        %v1803 = vand.u32 %v1802, 3
        %vm1804 = vcmp.lt.s32.totalorder %v1803, 2
        %vm1805 = vcmp.eq.s32.totalorder %v1803, 0
        %v1806 = vxor.u32 %v1800, 2147483648
        %v1807 = vsel %vm1805, %v1799, %v1806
        %vm1808 = vcmp.eq.s32.totalorder %v1803, 2
        %v1809 = vxor.u32 %v1799, 2147483648
        %v1810 = vsel %vm1808, %v1809, %v1800
        %v1811 = vsel %vm1804, %v1807, %v1810
        %v1812 = vsel %vm1801, nan, %v1811
        %v1813 = vand.u32 2147483647, %v656
        %vm1814 = vcmp.le.f32.partialorder %v1813, 0.7853982
        %vm1815 = vcmp.lt.s32.totalorder %v656, 0
        %v1816 = vand.u32 %v656, 2139095040
        %v1817 = vshrl.u32 %v1816, 23
        %v1818 = vsub.s32 %v1817, 127
        %v1819 = vand.u32 2147483647, %v656
        %v1820 = vand.u32 %v1819, 8388607
        %v1821 = vor.u32 %v1820, 8388608
        %v1822 = vsub.s32 0, %v1821
        %v1823 = vadd.s32 %v1818, 1
        %vm1824 = vcmp.gt.s32.totalorder %v1823, 0
        %v1825 = vsel %vm1824, %v1823, 0
        %v1826 = vshrl.u32 %v1825, 5
        %v1827 = vand.u32 %v1825, 31
        %v1828 = vsub.s32 32, %v1827
        %v1829 = vshrl.u32 683565275, %v1828
        %v1830 = vshll.u32 683565275, %v1827
        %v1831 = vshrl.u32 2475754826, %v1828
        %v1832 = vor.u32 %v1830, %v1831
        %v1833 = vshll.u32 2475754826, %v1827
        %v1834 = vshrl.u32 2131351028, %v1828
        %v1835 = vor.u32 %v1833, %v1834
        %v1836 = vshll.u32 2131351028, %v1827
        %v1837 = vshrl.u32 2102212464, %v1828
        %v1838 = vor.u32 %v1836, %v1837
        %v1839 = vshll.u32 2102212464, %v1827
        %v1840 = vshrl.u32 920167782, %v1828
        %v1841 = vor.u32 %v1839, %v1840
        %v1842 = vshll.u32 920167782, %v1827
        %v1843 = vshrl.u32 1326507024, %v1828
        %v1844 = vor.u32 %v1842, %v1843
        %vm1845 = vcmp.lt.s32.totalorder %v1826, 1
        %vm1846 = vcmp.lt.s32.totalorder %v1826, 2
        %vm1847 = vcmp.lt.s32.totalorder %v1826, 3
        %vm1848 = vcmp.lt.s32.totalorder %v1826, 4
        %v1849 = vsel %vm1845, %v1829, %v1832
        %v1850 = vsel %vm1848, %v1838, 2102212464
        %v1851 = vsel %vm1847, %v1835, %v1850
        %v1852 = vsel %vm1846, %v1849, %v1851
        %v1853 = vsel %vm1845, %v1832, %v1835
        %v1854 = vsel %vm1848, %v1841, 920167782
        %v1855 = vsel %vm1847, %v1838, %v1854
        %v1856 = vsel %vm1846, %v1853, %v1855
        %v1857 = vsel %vm1845, %v1835, %v1838
        %v1858 = vsel %vm1848, %v1844, 1326507024
        %v1859 = vsel %vm1847, %v1841, %v1858
        %v1860 = vsel %vm1846, %v1857, %v1859
        %v1861 = vshll.u32 %v1821, 8
        %v1862 = vmul.u32.u64.compose %v1861, %v1860
        %v1863 = vextract.low.u32 %v1862
        %v1864 = vextract.high.u32 %v1862
        %v1865 = vmul.u32.u64.compose %v1861, %v1856
        %v1866 = vextract.low.u32 %v1865
        %v1867 = vextract.high.u32 %v1865
        %v1868 = vmul.u32 %v1861, %v1852
        %v1869 = vadd.s32 %v1864, %v1866
        %vm1870 = vc.u32 %v1864, %v1866
        %v1871 = vadd.s32 %v1867, 1
        %v1872 = vsel %vm1870, %v1871, %v1867
        %v1873 = vadd.s32 %v1868, %v1872
        %v1874 = vadd.s32 %v1873, 536870912
        %v1875 = vshrl.u32 %v1874, 30
        %v1876 = vshll.u32 %v1875, 30
        %v1877 = vsub.s32 %v1873, %v1876
        %vm1878 = vcmp.lt.s32.totalorder %v1877, 0
        %v1879 = vsub.s32 0, %v1877
        %v1880 = vsel %vm1878, %v1879, %v1877
        %v1881 = vclz %v1880
        %v1882 = vsub.s32 %v1881, 2
        %vm1883 = vcmp.gt.s32.totalorder 0, %v1882
        %v1884 = vsel %vm1883, 0, %v1882
        %v1885 = vsub.s32 32, %v1884
        %v1886 = vshll.u32 %v1877, %v1884
        %v1887 = vshrl.u32 %v1869, %v1885
        %v1888 = vor.u32 %v1886, %v1887
        %v1889 = vsub.s32 4294967266, %v1884
        %v1890 = vadd.s32 %v1889, 127
        %v1891 = vshll.u32 %v1890, 23
        %v1892 = vor.u32 4788187, %v1891
        %v1893 = vand.u32 2147483647, %v1892
        %v1895 = vcvt.s32.f32 %v1888
        %v1896 = vmul.f32 %v1895, %v1893
        %v1897 = vxor.u32 %v1896, 2147483648
        %v1898 = vsel %vm1815, %v1897, %v1896
        %v1899 = vsub.s32 4, %v1875
        %v1900 = vsel %vm1815, %v1899, %v1875
        %v1901 = vsel %vm1814, %v656, %v1898
        %v1902 = vsel %vm1814, 0, %v1900
        %v1903 = vcosq.f32.pop %v1901
        %v1904 = vsinq.f32.pop %v1901
        %vm1905 = vweird.f32 %v656
        %v1906 = vadd.s32 %v1902, 3
        %v1907 = vand.u32 %v1906, 3
        %vm1908 = vcmp.lt.s32.totalorder %v1907, 2
        %vm1909 = vcmp.eq.s32.totalorder %v1907, 0
        %v1910 = vxor.u32 %v1904, 2147483648
        %v1911 = vsel %vm1909, %v1903, %v1910
        %vm1912 = vcmp.eq.s32.totalorder %v1907, 2
        %v1913 = vxor.u32 %v1903, 2147483648
        %v1914 = vsel %vm1912, %v1913, %v1904
        %v1915 = vsel %vm1908, %v1911, %v1914
        %v1916 = vsel %vm1905, nan, %v1915
        %v1917 = vand.u32 2147483647, %v657
        %vm1918 = vcmp.le.f32.partialorder %v1917, 0.7853982
        %vm1919 = vcmp.lt.s32.totalorder %v657, 0
        %v1920 = vand.u32 %v657, 2139095040
        %v1921 = vshrl.u32 %v1920, 23
        %v1922 = vsub.s32 %v1921, 127
        %v1923 = vand.u32 2147483647, %v657
        %v1924 = vand.u32 %v1923, 8388607
        %v1925 = vor.u32 %v1924, 8388608
        %v1926 = vsub.s32 0, %v1925
        %v1927 = vadd.s32 %v1922, 1
        %vm1928 = vcmp.gt.s32.totalorder %v1927, 0
        %v1929 = vsel %vm1928, %v1927, 0
        %v1930 = vshrl.u32 %v1929, 5
        %v1931 = vand.u32 %v1929, 31
        %v1932 = vsub.s32 32, %v1931
        %v1933 = vshrl.u32 683565275, %v1932
        %v1934 = vshll.u32 683565275, %v1931
        %v1935 = vshrl.u32 2475754826, %v1932
        %v1936 = vor.u32 %v1934, %v1935
        %v1937 = vshll.u32 2475754826, %v1931
        %v1938 = vshrl.u32 2131351028, %v1932
        %v1939 = vor.u32 %v1937, %v1938
        %v1940 = vshll.u32 2131351028, %v1931
        %v1941 = vshrl.u32 2102212464, %v1932
        %v1942 = vor.u32 %v1940, %v1941
        %v1943 = vshll.u32 2102212464, %v1931
        %v1944 = vshrl.u32 920167782, %v1932
        %v1945 = vor.u32 %v1943, %v1944
        %v1946 = vshll.u32 920167782, %v1931
        %v1947 = vshrl.u32 1326507024, %v1932
        %v1948 = vor.u32 %v1946, %v1947
        %vm1949 = vcmp.lt.s32.totalorder %v1930, 1
        %vm1950 = vcmp.lt.s32.totalorder %v1930, 2
        %vm1951 = vcmp.lt.s32.totalorder %v1930, 3
        %vm1952 = vcmp.lt.s32.totalorder %v1930, 4
        %v1953 = vsel %vm1949, %v1933, %v1936
        %v1954 = vsel %vm1952, %v1942, 2102212464
        %v1955 = vsel %vm1951, %v1939, %v1954
        %v1956 = vsel %vm1950, %v1953, %v1955
        %v1957 = vsel %vm1949, %v1936, %v1939
        %v1958 = vsel %vm1952, %v1945, 920167782
        %v1959 = vsel %vm1951, %v1942, %v1958
        %v1960 = vsel %vm1950, %v1957, %v1959
        %v1961 = vsel %vm1949, %v1939, %v1942
        %v1962 = vsel %vm1952, %v1948, 1326507024
        %v1963 = vsel %vm1951, %v1945, %v1962
        %v1964 = vsel %vm1950, %v1961, %v1963
        %v1965 = vshll.u32 %v1925, 8
        %v1966 = vmul.u32.u64.compose %v1965, %v1964
        %v1967 = vextract.low.u32 %v1966
        %v1968 = vextract.high.u32 %v1966
        %v1969 = vmul.u32.u64.compose %v1965, %v1960
        %v1970 = vextract.low.u32 %v1969
        %v1971 = vextract.high.u32 %v1969
        %v1972 = vmul.u32 %v1965, %v1956
        %v1973 = vadd.s32 %v1968, %v1970
        %vm1974 = vc.u32 %v1968, %v1970
        %v1975 = vadd.s32 %v1971, 1
        %v1976 = vsel %vm1974, %v1975, %v1971
        %v1977 = vadd.s32 %v1972, %v1976
        %v1978 = vadd.s32 %v1977, 536870912
        %v1979 = vshrl.u32 %v1978, 30
        %v1980 = vshll.u32 %v1979, 30
        %v1981 = vsub.s32 %v1977, %v1980
        %vm1982 = vcmp.lt.s32.totalorder %v1981, 0
        %v1983 = vsub.s32 0, %v1981
        %v1984 = vsel %vm1982, %v1983, %v1981
        %v1985 = vclz %v1984
        %v1986 = vsub.s32 %v1985, 2
        %vm1987 = vcmp.gt.s32.totalorder 0, %v1986
        %v1988 = vsel %vm1987, 0, %v1986
        %v1989 = vsub.s32 32, %v1988
        %v1990 = vshll.u32 %v1981, %v1988
        %v1991 = vshrl.u32 %v1973, %v1989
        %v1992 = vor.u32 %v1990, %v1991
        %v1993 = vsub.s32 4294967266, %v1988
        %v1994 = vadd.s32 %v1993, 127
        %v1995 = vshll.u32 %v1994, 23
        %v1996 = vor.u32 4788187, %v1995
        %v1997 = vand.u32 2147483647, %v1996
        %v1999 = vcvt.s32.f32 %v1992
        %v2000 = vmul.f32 %v1999, %v1997
        %v2001 = vxor.u32 %v2000, 2147483648
        %v2002 = vsel %vm1919, %v2001, %v2000
        %v2003 = vsub.s32 4, %v1979
        %v2004 = vsel %vm1919, %v2003, %v1979
        %v2005 = vsel %vm1918, %v657, %v2002
        %v2006 = vsel %vm1918, 0, %v2004
        %v2007 = vcosq.f32.pop %v2005
        %v2008 = vsinq.f32.pop %v2005
        %vm2009 = vweird.f32 %v657
        %v2010 = vadd.s32 %v2006, 3
        %v2011 = vand.u32 %v2010, 3
        %vm2012 = vcmp.lt.s32.totalorder %v2011, 2
        %vm2013 = vcmp.eq.s32.totalorder %v2011, 0
        %v2014 = vxor.u32 %v2008, 2147483648
        %v2015 = vsel %vm2013, %v2007, %v2014
        %vm2016 = vcmp.eq.s32.totalorder %v2011, 2
        %v2017 = vxor.u32 %v2007, 2147483648
        %v2018 = vsel %vm2016, %v2017, %v2008
        %v2019 = vsel %vm2012, %v2015, %v2018
        %v2020 = vsel %vm2009, nan, %v2019
        %v2021 = vand.u32 2147483647, %v658
        %vm2022 = vcmp.le.f32.partialorder %v2021, 0.7853982
        %vm2023 = vcmp.lt.s32.totalorder %v658, 0
        %v2024 = vand.u32 %v658, 2139095040
        %v2025 = vshrl.u32 %v2024, 23
        %v2026 = vsub.s32 %v2025, 127
        %v2027 = vand.u32 2147483647, %v658
        %v2028 = vand.u32 %v2027, 8388607
        %v2029 = vor.u32 %v2028, 8388608
        %v2030 = vsub.s32 0, %v2029
        %v2031 = vadd.s32 %v2026, 1
        %vm2032 = vcmp.gt.s32.totalorder %v2031, 0
        %v2033 = vsel %vm2032, %v2031, 0
        %v2034 = vshrl.u32 %v2033, 5
        %v2035 = vand.u32 %v2033, 31
        %v2036 = vsub.s32 32, %v2035
        %v2037 = vshrl.u32 683565275, %v2036
        %v2038 = vshll.u32 683565275, %v2035
        %v2039 = vshrl.u32 2475754826, %v2036
        %v2040 = vor.u32 %v2038, %v2039
        %v2041 = vshll.u32 2475754826, %v2035
        %v2042 = vshrl.u32 2131351028, %v2036
        %v2043 = vor.u32 %v2041, %v2042
        %v2044 = vshll.u32 2131351028, %v2035
        %v2045 = vshrl.u32 2102212464, %v2036
        %v2046 = vor.u32 %v2044, %v2045
        %v2047 = vshll.u32 2102212464, %v2035
        %v2048 = vshrl.u32 920167782, %v2036
        %v2049 = vor.u32 %v2047, %v2048
        %v2050 = vshll.u32 920167782, %v2035
        %v2051 = vshrl.u32 1326507024, %v2036
        %v2052 = vor.u32 %v2050, %v2051
        %vm2053 = vcmp.lt.s32.totalorder %v2034, 1
        %vm2054 = vcmp.lt.s32.totalorder %v2034, 2
        %vm2055 = vcmp.lt.s32.totalorder %v2034, 3
        %vm2056 = vcmp.lt.s32.totalorder %v2034, 4
        %v2057 = vsel %vm2053, %v2037, %v2040
        %v2058 = vsel %vm2056, %v2046, 2102212464
        %v2059 = vsel %vm2055, %v2043, %v2058
        %v2060 = vsel %vm2054, %v2057, %v2059
        %v2061 = vsel %vm2053, %v2040, %v2043
        %v2062 = vsel %vm2056, %v2049, 920167782
        %v2063 = vsel %vm2055, %v2046, %v2062
        %v2064 = vsel %vm2054, %v2061, %v2063
        %v2065 = vsel %vm2053, %v2043, %v2046
        %v2066 = vsel %vm2056, %v2052, 1326507024
        %v2067 = vsel %vm2055, %v2049, %v2066
        %v2068 = vsel %vm2054, %v2065, %v2067
        %v2069 = vshll.u32 %v2029, 8
        %v2070 = vmul.u32.u64.compose %v2069, %v2068
        %v2071 = vextract.low.u32 %v2070
        %v2072 = vextract.high.u32 %v2070
        %v2073 = vmul.u32.u64.compose %v2069, %v2064
        %v2074 = vextract.low.u32 %v2073
        %v2075 = vextract.high.u32 %v2073
        %v2076 = vmul.u32 %v2069, %v2060
        %v2077 = vadd.s32 %v2072, %v2074
        %vm2078 = vc.u32 %v2072, %v2074
        %v2079 = vadd.s32 %v2075, 1
        %v2080 = vsel %vm2078, %v2079, %v2075
        %v2081 = vadd.s32 %v2076, %v2080
        %v2082 = vadd.s32 %v2081, 536870912
        %v2083 = vshrl.u32 %v2082, 30
        %v2084 = vshll.u32 %v2083, 30
        %v2085 = vsub.s32 %v2081, %v2084
        %vm2086 = vcmp.lt.s32.totalorder %v2085, 0
        %v2087 = vsub.s32 0, %v2085
        %v2088 = vsel %vm2086, %v2087, %v2085
        %v2089 = vclz %v2088
        %v2090 = vsub.s32 %v2089, 2
        %vm2091 = vcmp.gt.s32.totalorder 0, %v2090
        %v2092 = vsel %vm2091, 0, %v2090
        %v2093 = vsub.s32 32, %v2092
        %v2094 = vshll.u32 %v2085, %v2092
        %v2095 = vshrl.u32 %v2077, %v2093
        %v2096 = vor.u32 %v2094, %v2095
        %v2097 = vsub.s32 4294967266, %v2092
        %v2098 = vadd.s32 %v2097, 127
        %v2099 = vshll.u32 %v2098, 23
        %v2100 = vor.u32 4788187, %v2099
        %v2101 = vand.u32 2147483647, %v2100
        %v2103 = vcvt.s32.f32 %v2096
        %v2104 = vmul.f32 %v2103, %v2101
        %v2105 = vxor.u32 %v2104, 2147483648
        %v2106 = vsel %vm2023, %v2105, %v2104
        %v2107 = vsub.s32 4, %v2083
        %v2108 = vsel %vm2023, %v2107, %v2083
        %v2109 = vsel %vm2022, %v658, %v2106
        %v2110 = vsel %vm2022, 0, %v2108
        %v2111 = vcosq.f32.pop %v2109
        %v2112 = vsinq.f32.pop %v2109
        %vm2113 = vweird.f32 %v658
        %v2114 = vadd.s32 %v2110, 3
        %v2115 = vand.u32 %v2114, 3
        %vm2116 = vcmp.lt.s32.totalorder %v2115, 2
        %vm2117 = vcmp.eq.s32.totalorder %v2115, 0
        %v2118 = vxor.u32 %v2112, 2147483648
        %v2119 = vsel %vm2117, %v2111, %v2118
        %vm2120 = vcmp.eq.s32.totalorder %v2115, 2
        %v2121 = vxor.u32 %v2111, 2147483648
        %v2122 = vsel %vm2120, %v2121, %v2112
        %v2123 = vsel %vm2116, %v2119, %v2122
        %v2124 = vsel %vm2113, nan, %v2123
        %v2125 = vand.u32 2147483647, %v659
        %vm2126 = vcmp.le.f32.partialorder %v2125, 0.7853982
        %vm2127 = vcmp.lt.s32.totalorder %v659, 0
        %v2128 = vand.u32 %v659, 2139095040
        %v2129 = vshrl.u32 %v2128, 23
        %v2130 = vsub.s32 %v2129, 127
        %v2131 = vand.u32 2147483647, %v659
        %v2132 = vand.u32 %v2131, 8388607
        %v2133 = vor.u32 %v2132, 8388608
        %v2134 = vsub.s32 0, %v2133
        %v2135 = vadd.s32 %v2130, 1
        %vm2136 = vcmp.gt.s32.totalorder %v2135, 0
        %v2137 = vsel %vm2136, %v2135, 0
        %v2138 = vshrl.u32 %v2137, 5
        %v2139 = vand.u32 %v2137, 31
        %v2140 = vsub.s32 32, %v2139
        %v2141 = vshrl.u32 683565275, %v2140
        %v2142 = vshll.u32 683565275, %v2139
        %v2143 = vshrl.u32 2475754826, %v2140
        %v2144 = vor.u32 %v2142, %v2143
        %v2145 = vshll.u32 2475754826, %v2139
        %v2146 = vshrl.u32 2131351028, %v2140
        %v2147 = vor.u32 %v2145, %v2146
        %v2148 = vshll.u32 2131351028, %v2139
        %v2149 = vshrl.u32 2102212464, %v2140
        %v2150 = vor.u32 %v2148, %v2149
        %v2151 = vshll.u32 2102212464, %v2139
        %v2152 = vshrl.u32 920167782, %v2140
        %v2153 = vor.u32 %v2151, %v2152
        %v2154 = vshll.u32 920167782, %v2139
        %v2155 = vshrl.u32 1326507024, %v2140
        %v2156 = vor.u32 %v2154, %v2155
        %vm2157 = vcmp.lt.s32.totalorder %v2138, 1
        %vm2158 = vcmp.lt.s32.totalorder %v2138, 2
        %vm2159 = vcmp.lt.s32.totalorder %v2138, 3
        %vm2160 = vcmp.lt.s32.totalorder %v2138, 4
        %v2161 = vsel %vm2157, %v2141, %v2144
        %v2162 = vsel %vm2160, %v2150, 2102212464
        %v2163 = vsel %vm2159, %v2147, %v2162
        %v2164 = vsel %vm2158, %v2161, %v2163
        %v2165 = vsel %vm2157, %v2144, %v2147
        %v2166 = vsel %vm2160, %v2153, 920167782
        %v2167 = vsel %vm2159, %v2150, %v2166
        %v2168 = vsel %vm2158, %v2165, %v2167
        %v2169 = vsel %vm2157, %v2147, %v2150
        %v2170 = vsel %vm2160, %v2156, 1326507024
        %v2171 = vsel %vm2159, %v2153, %v2170
        %v2172 = vsel %vm2158, %v2169, %v2171
        %v2173 = vshll.u32 %v2133, 8
        %v2174 = vmul.u32.u64.compose %v2173, %v2172
        %v2175 = vextract.low.u32 %v2174
        %v2176 = vextract.high.u32 %v2174
        %v2177 = vmul.u32.u64.compose %v2173, %v2168
        %v2178 = vextract.low.u32 %v2177
        %v2179 = vextract.high.u32 %v2177
        %v2180 = vmul.u32 %v2173, %v2164
        %v2181 = vadd.s32 %v2176, %v2178
        %vm2182 = vc.u32 %v2176, %v2178
        %v2183 = vadd.s32 %v2179, 1
        %v2184 = vsel %vm2182, %v2183, %v2179
        %v2185 = vadd.s32 %v2180, %v2184
        %v2186 = vadd.s32 %v2185, 536870912
        %v2187 = vshrl.u32 %v2186, 30
        %v2188 = vshll.u32 %v2187, 30
        %v2189 = vsub.s32 %v2185, %v2188
        %vm2190 = vcmp.lt.s32.totalorder %v2189, 0
        %v2191 = vsub.s32 0, %v2189
        %v2192 = vsel %vm2190, %v2191, %v2189
        %v2193 = vclz %v2192
        %v2194 = vsub.s32 %v2193, 2
        %vm2195 = vcmp.gt.s32.totalorder 0, %v2194
        %v2196 = vsel %vm2195, 0, %v2194
        %v2197 = vsub.s32 32, %v2196
        %v2198 = vshll.u32 %v2189, %v2196
        %v2199 = vshrl.u32 %v2181, %v2197
        %v2200 = vor.u32 %v2198, %v2199
        %v2201 = vsub.s32 4294967266, %v2196
        %v2202 = vadd.s32 %v2201, 127
        %v2203 = vshll.u32 %v2202, 23
        %v2204 = vor.u32 4788187, %v2203
        %v2205 = vand.u32 2147483647, %v2204
        %v2207 = vcvt.s32.f32 %v2200
        %v2208 = vmul.f32 %v2207, %v2205
        %v2209 = vxor.u32 %v2208, 2147483648
        %v2210 = vsel %vm2127, %v2209, %v2208
        %v2211 = vsub.s32 4, %v2187
        %v2212 = vsel %vm2127, %v2211, %v2187
        %v2213 = vsel %vm2126, %v659, %v2210
        %v2214 = vsel %vm2126, 0, %v2212
        %v2215 = vcosq.f32.pop %v2213
        %v2216 = vsinq.f32.pop %v2213
        %vm2217 = vweird.f32 %v659
        %v2218 = vadd.s32 %v2214, 3
        %v2219 = vand.u32 %v2218, 3
        %vm2220 = vcmp.lt.s32.totalorder %v2219, 2
        %vm2221 = vcmp.eq.s32.totalorder %v2219, 0
        %v2222 = vxor.u32 %v2216, 2147483648
        %v2223 = vsel %vm2221, %v2215, %v2222
        %vm2224 = vcmp.eq.s32.totalorder %v2219, 2
        %v2225 = vxor.u32 %v2215, 2147483648
        %v2226 = vsel %vm2224, %v2225, %v2216
        %v2227 = vsel %vm2220, %v2223, %v2226
        %v2228 = vsel %vm2217, nan, %v2227
        %v2229 = vand.u32 2147483647, %v660
        %vm2230 = vcmp.le.f32.partialorder %v2229, 0.7853982
        %vm2231 = vcmp.lt.s32.totalorder %v660, 0
        %v2232 = vand.u32 %v660, 2139095040
        %v2233 = vshrl.u32 %v2232, 23
        %v2234 = vsub.s32 %v2233, 127
        %v2235 = vand.u32 2147483647, %v660
        %v2236 = vand.u32 %v2235, 8388607
        %v2237 = vor.u32 %v2236, 8388608
        %v2238 = vsub.s32 0, %v2237
        %v2239 = vadd.s32 %v2234, 1
        %vm2240 = vcmp.gt.s32.totalorder %v2239, 0
        %v2241 = vsel %vm2240, %v2239, 0
        %v2242 = vshrl.u32 %v2241, 5
        %v2243 = vand.u32 %v2241, 31
        %v2244 = vsub.s32 32, %v2243
        %v2245 = vshrl.u32 683565275, %v2244
        %v2246 = vshll.u32 683565275, %v2243
        %v2247 = vshrl.u32 2475754826, %v2244
        %v2248 = vor.u32 %v2246, %v2247
        %v2249 = vshll.u32 2475754826, %v2243
        %v2250 = vshrl.u32 2131351028, %v2244
        %v2251 = vor.u32 %v2249, %v2250
        %v2252 = vshll.u32 2131351028, %v2243
        %v2253 = vshrl.u32 2102212464, %v2244
        %v2254 = vor.u32 %v2252, %v2253
        %v2255 = vshll.u32 2102212464, %v2243
        %v2256 = vshrl.u32 920167782, %v2244
        %v2257 = vor.u32 %v2255, %v2256
        %v2258 = vshll.u32 920167782, %v2243
        %v2259 = vshrl.u32 1326507024, %v2244
        %v2260 = vor.u32 %v2258, %v2259
        %vm2261 = vcmp.lt.s32.totalorder %v2242, 1
        %vm2262 = vcmp.lt.s32.totalorder %v2242, 2
        %vm2263 = vcmp.lt.s32.totalorder %v2242, 3
        %vm2264 = vcmp.lt.s32.totalorder %v2242, 4
        %v2265 = vsel %vm2261, %v2245, %v2248
        %v2266 = vsel %vm2264, %v2254, 2102212464
        %v2267 = vsel %vm2263, %v2251, %v2266
        %v2268 = vsel %vm2262, %v2265, %v2267
        %v2269 = vsel %vm2261, %v2248, %v2251
        %v2270 = vsel %vm2264, %v2257, 920167782
        %v2271 = vsel %vm2263, %v2254, %v2270
        %v2272 = vsel %vm2262, %v2269, %v2271
        %v2273 = vsel %vm2261, %v2251, %v2254
        %v2274 = vsel %vm2264, %v2260, 1326507024
        %v2275 = vsel %vm2263, %v2257, %v2274
        %v2276 = vsel %vm2262, %v2273, %v2275
        %v2277 = vshll.u32 %v2237, 8
        %v2278 = vmul.u32.u64.compose %v2277, %v2276
        %v2279 = vextract.low.u32 %v2278
        %v2280 = vextract.high.u32 %v2278
        %v2281 = vmul.u32.u64.compose %v2277, %v2272
        %v2282 = vextract.low.u32 %v2281
        %v2283 = vextract.high.u32 %v2281
        %v2284 = vmul.u32 %v2277, %v2268
        %v2285 = vadd.s32 %v2280, %v2282
        %vm2286 = vc.u32 %v2280, %v2282
        %v2287 = vadd.s32 %v2283, 1
        %v2288 = vsel %vm2286, %v2287, %v2283
        %v2289 = vadd.s32 %v2284, %v2288
        %v2290 = vadd.s32 %v2289, 536870912
        %v2291 = vshrl.u32 %v2290, 30
        %v2292 = vshll.u32 %v2291, 30
        %v2293 = vsub.s32 %v2289, %v2292
        %vm2294 = vcmp.lt.s32.totalorder %v2293, 0
        %v2295 = vsub.s32 0, %v2293
        %v2296 = vsel %vm2294, %v2295, %v2293
        %v2297 = vclz %v2296
        %v2298 = vsub.s32 %v2297, 2
        %vm2299 = vcmp.gt.s32.totalorder 0, %v2298
        %v2300 = vsel %vm2299, 0, %v2298
        %v2301 = vsub.s32 32, %v2300
        %v2302 = vshll.u32 %v2293, %v2300
        %v2303 = vshrl.u32 %v2285, %v2301
        %v2304 = vor.u32 %v2302, %v2303
        %v2305 = vsub.s32 4294967266, %v2300
        %v2306 = vadd.s32 %v2305, 127
        %v2307 = vshll.u32 %v2306, 23
        %v2308 = vor.u32 4788187, %v2307
        %v2309 = vand.u32 2147483647, %v2308
        %v2311 = vcvt.s32.f32 %v2304
        %v2312 = vmul.f32 %v2311, %v2309
        %v2313 = vxor.u32 %v2312, 2147483648
        %v2314 = vsel %vm2231, %v2313, %v2312
        %v2315 = vsub.s32 4, %v2291
        %v2316 = vsel %vm2231, %v2315, %v2291
        %v2317 = vsel %vm2230, %v660, %v2314
        %v2318 = vsel %vm2230, 0, %v2316
        %v2319 = vcosq.f32.pop %v2317
        %v2320 = vsinq.f32.pop %v2317
        %vm2321 = vweird.f32 %v660
        %v2322 = vadd.s32 %v2318, 3
        %v2323 = vand.u32 %v2322, 3
        %vm2324 = vcmp.lt.s32.totalorder %v2323, 2
        %vm2325 = vcmp.eq.s32.totalorder %v2323, 0
        %v2326 = vxor.u32 %v2320, 2147483648
        %v2327 = vsel %vm2325, %v2319, %v2326
        %vm2328 = vcmp.eq.s32.totalorder %v2323, 2
        %v2329 = vxor.u32 %v2319, 2147483648
        %v2330 = vsel %vm2328, %v2329, %v2320
        %v2331 = vsel %vm2324, %v2327, %v2330
        %v2332 = vsel %vm2321, nan, %v2331
        %v2333 = vand.u32 2147483647, %v661
        %vm2334 = vcmp.le.f32.partialorder %v2333, 0.7853982
        %vm2335 = vcmp.lt.s32.totalorder %v661, 0
        %v2336 = vand.u32 %v661, 2139095040
        %v2337 = vshrl.u32 %v2336, 23
        %v2338 = vsub.s32 %v2337, 127
        %v2339 = vand.u32 2147483647, %v661
        %v2340 = vand.u32 %v2339, 8388607
        %v2341 = vor.u32 %v2340, 8388608
        %v2342 = vsub.s32 0, %v2341
        %v2343 = vadd.s32 %v2338, 1
        %vm2344 = vcmp.gt.s32.totalorder %v2343, 0
        %v2345 = vsel %vm2344, %v2343, 0
        %v2346 = vshrl.u32 %v2345, 5
        %v2347 = vand.u32 %v2345, 31
        %v2348 = vsub.s32 32, %v2347
        %v2349 = vshrl.u32 683565275, %v2348
        %v2350 = vshll.u32 683565275, %v2347
        %v2351 = vshrl.u32 2475754826, %v2348
        %v2352 = vor.u32 %v2350, %v2351
        %v2353 = vshll.u32 2475754826, %v2347
        %v2354 = vshrl.u32 2131351028, %v2348
        %v2355 = vor.u32 %v2353, %v2354
        %v2356 = vshll.u32 2131351028, %v2347
        %v2357 = vshrl.u32 2102212464, %v2348
        %v2358 = vor.u32 %v2356, %v2357
        %v2359 = vshll.u32 2102212464, %v2347
        %v2360 = vshrl.u32 920167782, %v2348
        %v2361 = vor.u32 %v2359, %v2360
        %v2362 = vshll.u32 920167782, %v2347
        %v2363 = vshrl.u32 1326507024, %v2348
        %v2364 = vor.u32 %v2362, %v2363
        %vm2365 = vcmp.lt.s32.totalorder %v2346, 1
        %vm2366 = vcmp.lt.s32.totalorder %v2346, 2
        %vm2367 = vcmp.lt.s32.totalorder %v2346, 3
        %vm2368 = vcmp.lt.s32.totalorder %v2346, 4
        %v2369 = vsel %vm2365, %v2349, %v2352
        %v2370 = vsel %vm2368, %v2358, 2102212464
        %v2371 = vsel %vm2367, %v2355, %v2370
        %v2372 = vsel %vm2366, %v2369, %v2371
        %v2373 = vsel %vm2365, %v2352, %v2355
        %v2374 = vsel %vm2368, %v2361, 920167782
        %v2375 = vsel %vm2367, %v2358, %v2374
        %v2376 = vsel %vm2366, %v2373, %v2375
        %v2377 = vsel %vm2365, %v2355, %v2358
        %v2378 = vsel %vm2368, %v2364, 1326507024
        %v2379 = vsel %vm2367, %v2361, %v2378
        %v2380 = vsel %vm2366, %v2377, %v2379
        %v2381 = vshll.u32 %v2341, 8
        %v2382 = vmul.u32.u64.compose %v2381, %v2380
        %v2383 = vextract.low.u32 %v2382
        %v2384 = vextract.high.u32 %v2382
        %v2385 = vmul.u32.u64.compose %v2381, %v2376
        %v2386 = vextract.low.u32 %v2385
        %v2387 = vextract.high.u32 %v2385
        %v2388 = vmul.u32 %v2381, %v2372
        %v2389 = vadd.s32 %v2384, %v2386
        %vm2390 = vc.u32 %v2384, %v2386
        %v2391 = vadd.s32 %v2387, 1
        %v2392 = vsel %vm2390, %v2391, %v2387
        %v2393 = vadd.s32 %v2388, %v2392
        %v2394 = vadd.s32 %v2393, 536870912
        %v2395 = vshrl.u32 %v2394, 30
        %v2396 = vshll.u32 %v2395, 30
        %v2397 = vsub.s32 %v2393, %v2396
        %vm2398 = vcmp.lt.s32.totalorder %v2397, 0
        %v2399 = vsub.s32 0, %v2397
        %v2400 = vsel %vm2398, %v2399, %v2397
        %v2401 = vclz %v2400
        %v2402 = vsub.s32 %v2401, 2
        %vm2403 = vcmp.gt.s32.totalorder 0, %v2402
        %v2404 = vsel %vm2403, 0, %v2402
        %v2405 = vsub.s32 32, %v2404
        %v2406 = vshll.u32 %v2397, %v2404
        %v2407 = vshrl.u32 %v2389, %v2405
        %v2408 = vor.u32 %v2406, %v2407
        %v2409 = vsub.s32 4294967266, %v2404
        %v2410 = vadd.s32 %v2409, 127
        %v2411 = vshll.u32 %v2410, 23
        %v2412 = vor.u32 4788187, %v2411
        %v2413 = vand.u32 2147483647, %v2412
        %v2415 = vcvt.s32.f32 %v2408
        %v2416 = vmul.f32 %v2415, %v2413
        %v2417 = vxor.u32 %v2416, 2147483648
        %v2418 = vsel %vm2335, %v2417, %v2416
        %v2419 = vsub.s32 4, %v2395
        %v2420 = vsel %vm2335, %v2419, %v2395
        %v2421 = vsel %vm2334, %v661, %v2418
        %v2422 = vsel %vm2334, 0, %v2420
        %v2423 = vcosq.f32.pop %v2421
        %v2424 = vsinq.f32.pop %v2421
        %vm2425 = vweird.f32 %v661
        %v2426 = vadd.s32 %v2422, 3
        %v2427 = vand.u32 %v2426, 3
        %vm2428 = vcmp.lt.s32.totalorder %v2427, 2
        %vm2429 = vcmp.eq.s32.totalorder %v2427, 0
        %v2430 = vxor.u32 %v2424, 2147483648
        %v2431 = vsel %vm2429, %v2423, %v2430
        %vm2432 = vcmp.eq.s32.totalorder %v2427, 2
        %v2433 = vxor.u32 %v2423, 2147483648
        %v2434 = vsel %vm2432, %v2433, %v2424
        %v2435 = vsel %vm2428, %v2431, %v2434
        %v2436 = vsel %vm2425, nan, %v2435
        %v2437 = vand.u32 2147483647, %v662
        %vm2438 = vcmp.le.f32.partialorder %v2437, 0.7853982
        %vm2439 = vcmp.lt.s32.totalorder %v662, 0
        %v2440 = vand.u32 %v662, 2139095040
        %v2441 = vshrl.u32 %v2440, 23
        %v2442 = vsub.s32 %v2441, 127
        %v2443 = vand.u32 2147483647, %v662
        %v2444 = vand.u32 %v2443, 8388607
        %v2445 = vor.u32 %v2444, 8388608
        %v2446 = vsub.s32 0, %v2445
        %v2447 = vadd.s32 %v2442, 1
        %vm2448 = vcmp.gt.s32.totalorder %v2447, 0
        %v2449 = vsel %vm2448, %v2447, 0
        %v2450 = vshrl.u32 %v2449, 5
        %v2451 = vand.u32 %v2449, 31
        %v2452 = vsub.s32 32, %v2451
        %v2453 = vshrl.u32 683565275, %v2452
        %v2454 = vshll.u32 683565275, %v2451
        %v2455 = vshrl.u32 2475754826, %v2452
        %v2456 = vor.u32 %v2454, %v2455
        %v2457 = vshll.u32 2475754826, %v2451
        %v2458 = vshrl.u32 2131351028, %v2452
        %v2459 = vor.u32 %v2457, %v2458
        %v2460 = vshll.u32 2131351028, %v2451
        %v2461 = vshrl.u32 2102212464, %v2452
        %v2462 = vor.u32 %v2460, %v2461
        %v2463 = vshll.u32 2102212464, %v2451
        %v2464 = vshrl.u32 920167782, %v2452
        %v2465 = vor.u32 %v2463, %v2464
        %v2466 = vshll.u32 920167782, %v2451
        %v2467 = vshrl.u32 1326507024, %v2452
        %v2468 = vor.u32 %v2466, %v2467
        %vm2469 = vcmp.lt.s32.totalorder %v2450, 1
        %vm2470 = vcmp.lt.s32.totalorder %v2450, 2
        %vm2471 = vcmp.lt.s32.totalorder %v2450, 3
        %vm2472 = vcmp.lt.s32.totalorder %v2450, 4
        %v2473 = vsel %vm2469, %v2453, %v2456
        %v2474 = vsel %vm2472, %v2462, 2102212464
        %v2475 = vsel %vm2471, %v2459, %v2474
        %v2476 = vsel %vm2470, %v2473, %v2475
        %v2477 = vsel %vm2469, %v2456, %v2459
        %v2478 = vsel %vm2472, %v2465, 920167782
        %v2479 = vsel %vm2471, %v2462, %v2478
        %v2480 = vsel %vm2470, %v2477, %v2479
        %v2481 = vsel %vm2469, %v2459, %v2462
        %v2482 = vsel %vm2472, %v2468, 1326507024
        %v2483 = vsel %vm2471, %v2465, %v2482
        %v2484 = vsel %vm2470, %v2481, %v2483
        %v2485 = vshll.u32 %v2445, 8
        %v2486 = vmul.u32.u64.compose %v2485, %v2484
        %v2487 = vextract.low.u32 %v2486
        %v2488 = vextract.high.u32 %v2486
        %v2489 = vmul.u32.u64.compose %v2485, %v2480
        %v2490 = vextract.low.u32 %v2489
        %v2491 = vextract.high.u32 %v2489
        %v2492 = vmul.u32 %v2485, %v2476
        %v2493 = vadd.s32 %v2488, %v2490
        %vm2494 = vc.u32 %v2488, %v2490
        %v2495 = vadd.s32 %v2491, 1
        %v2496 = vsel %vm2494, %v2495, %v2491
        %v2497 = vadd.s32 %v2492, %v2496
        %v2498 = vadd.s32 %v2497, 536870912
        %v2499 = vshrl.u32 %v2498, 30
        %v2500 = vshll.u32 %v2499, 30
        %v2501 = vsub.s32 %v2497, %v2500
        %vm2502 = vcmp.lt.s32.totalorder %v2501, 0
        %v2503 = vsub.s32 0, %v2501
        %v2504 = vsel %vm2502, %v2503, %v2501
        %v2505 = vclz %v2504
        %v2506 = vsub.s32 %v2505, 2
        %vm2507 = vcmp.gt.s32.totalorder 0, %v2506
        %v2508 = vsel %vm2507, 0, %v2506
        %v2509 = vsub.s32 32, %v2508
        %v2510 = vshll.u32 %v2501, %v2508
        %v2511 = vshrl.u32 %v2493, %v2509
        %v2512 = vor.u32 %v2510, %v2511
        %v2513 = vsub.s32 4294967266, %v2508
        %v2514 = vadd.s32 %v2513, 127
        %v2515 = vshll.u32 %v2514, 23
        %v2516 = vor.u32 4788187, %v2515
        %v2517 = vand.u32 2147483647, %v2516
        %v2519 = vcvt.s32.f32 %v2512
        %v2520 = vmul.f32 %v2519, %v2517
        %v2521 = vxor.u32 %v2520, 2147483648
        %v2522 = vsel %vm2439, %v2521, %v2520
        %v2523 = vsub.s32 4, %v2499
        %v2524 = vsel %vm2439, %v2523, %v2499
        %v2525 = vsel %vm2438, %v662, %v2522
        %v2526 = vsel %vm2438, 0, %v2524
        %v2527 = vcosq.f32.pop %v2525
        %v2528 = vsinq.f32.pop %v2525
        %vm2529 = vweird.f32 %v662
        %v2530 = vadd.s32 %v2526, 3
        %v2531 = vand.u32 %v2530, 3
        %vm2532 = vcmp.lt.s32.totalorder %v2531, 2
        %vm2533 = vcmp.eq.s32.totalorder %v2531, 0
        %v2534 = vxor.u32 %v2528, 2147483648
        %v2535 = vsel %vm2533, %v2527, %v2534
        %vm2536 = vcmp.eq.s32.totalorder %v2531, 2
        %v2537 = vxor.u32 %v2527, 2147483648
        %v2538 = vsel %vm2536, %v2537, %v2528
        %v2539 = vsel %vm2532, %v2535, %v2538
        %v2540 = vsel %vm2529, nan, %v2539
        %v2541 = vand.u32 2147483647, %v663
        %vm2542 = vcmp.le.f32.partialorder %v2541, 0.7853982
        %vm2543 = vcmp.lt.s32.totalorder %v663, 0
        %v2544 = vand.u32 %v663, 2139095040
        %v2545 = vshrl.u32 %v2544, 23
        %v2546 = vsub.s32 %v2545, 127
        %v2547 = vand.u32 2147483647, %v663
        %v2548 = vand.u32 %v2547, 8388607
        %v2549 = vor.u32 %v2548, 8388608
        %v2550 = vsub.s32 0, %v2549
        %v2551 = vadd.s32 %v2546, 1
        %vm2552 = vcmp.gt.s32.totalorder %v2551, 0
        %v2553 = vsel %vm2552, %v2551, 0
        %v2554 = vshrl.u32 %v2553, 5
        %v2555 = vand.u32 %v2553, 31
        %v2556 = vsub.s32 32, %v2555
        %v2557 = vshrl.u32 683565275, %v2556
        %v2558 = vshll.u32 683565275, %v2555
        %v2559 = vshrl.u32 2475754826, %v2556
        %v2560 = vor.u32 %v2558, %v2559
        %v2561 = vshll.u32 2475754826, %v2555
        %v2562 = vshrl.u32 2131351028, %v2556
        %v2563 = vor.u32 %v2561, %v2562
        %v2564 = vshll.u32 2131351028, %v2555
        %v2565 = vshrl.u32 2102212464, %v2556
        %v2566 = vor.u32 %v2564, %v2565
        %v2567 = vshll.u32 2102212464, %v2555
        %v2568 = vshrl.u32 920167782, %v2556
        %v2569 = vor.u32 %v2567, %v2568
        %v2570 = vshll.u32 920167782, %v2555
        %v2571 = vshrl.u32 1326507024, %v2556
        %v2572 = vor.u32 %v2570, %v2571
        %vm2573 = vcmp.lt.s32.totalorder %v2554, 1
        %vm2574 = vcmp.lt.s32.totalorder %v2554, 2
        %vm2575 = vcmp.lt.s32.totalorder %v2554, 3
        %vm2576 = vcmp.lt.s32.totalorder %v2554, 4
        %v2577 = vsel %vm2573, %v2557, %v2560
        %v2578 = vsel %vm2576, %v2566, 2102212464
        %v2579 = vsel %vm2575, %v2563, %v2578
        %v2580 = vsel %vm2574, %v2577, %v2579
        %v2581 = vsel %vm2573, %v2560, %v2563
        %v2582 = vsel %vm2576, %v2569, 920167782
        %v2583 = vsel %vm2575, %v2566, %v2582
        %v2584 = vsel %vm2574, %v2581, %v2583
        %v2585 = vsel %vm2573, %v2563, %v2566
        %v2586 = vsel %vm2576, %v2572, 1326507024
        %v2587 = vsel %vm2575, %v2569, %v2586
        %v2588 = vsel %vm2574, %v2585, %v2587
        %v2589 = vshll.u32 %v2549, 8
        %v2590 = vmul.u32.u64.compose %v2589, %v2588
        %v2591 = vextract.low.u32 %v2590
        %v2592 = vextract.high.u32 %v2590
        %v2593 = vmul.u32.u64.compose %v2589, %v2584
        %v2594 = vextract.low.u32 %v2593
        %v2595 = vextract.high.u32 %v2593
        %v2596 = vmul.u32 %v2589, %v2580
        %v2597 = vadd.s32 %v2592, %v2594
        %vm2598 = vc.u32 %v2592, %v2594
        %v2599 = vadd.s32 %v2595, 1
        %v2600 = vsel %vm2598, %v2599, %v2595
        %v2601 = vadd.s32 %v2596, %v2600
        %v2602 = vadd.s32 %v2601, 536870912
        %v2603 = vshrl.u32 %v2602, 30
        %v2604 = vshll.u32 %v2603, 30
        %v2605 = vsub.s32 %v2601, %v2604
        %vm2606 = vcmp.lt.s32.totalorder %v2605, 0
        %v2607 = vsub.s32 0, %v2605
        %v2608 = vsel %vm2606, %v2607, %v2605
        %v2609 = vclz %v2608
        %v2610 = vsub.s32 %v2609, 2
        %vm2611 = vcmp.gt.s32.totalorder 0, %v2610
        %v2612 = vsel %vm2611, 0, %v2610
        %v2613 = vsub.s32 32, %v2612
        %v2614 = vshll.u32 %v2605, %v2612
        %v2615 = vshrl.u32 %v2597, %v2613
        %v2616 = vor.u32 %v2614, %v2615
        %v2617 = vsub.s32 4294967266, %v2612
        %v2618 = vadd.s32 %v2617, 127
        %v2619 = vshll.u32 %v2618, 23
        %v2620 = vor.u32 4788187, %v2619
        %v2621 = vand.u32 2147483647, %v2620
        %v2623 = vcvt.s32.f32 %v2616
        %v2624 = vmul.f32 %v2623, %v2621
        %v2625 = vxor.u32 %v2624, 2147483648
        %v2626 = vsel %vm2543, %v2625, %v2624
        %v2627 = vsub.s32 4, %v2603
        %v2628 = vsel %vm2543, %v2627, %v2603
        %v2629 = vsel %vm2542, %v663, %v2626
        %v2630 = vsel %vm2542, 0, %v2628
        %v2631 = vcosq.f32.pop %v2629
        %v2632 = vsinq.f32.pop %v2629
        %vm2633 = vweird.f32 %v663
        %v2634 = vadd.s32 %v2630, 3
        %v2635 = vand.u32 %v2634, 3
        %vm2636 = vcmp.lt.s32.totalorder %v2635, 2
        %vm2637 = vcmp.eq.s32.totalorder %v2635, 0
        %v2638 = vxor.u32 %v2632, 2147483648
        %v2639 = vsel %vm2637, %v2631, %v2638
        %vm2640 = vcmp.eq.s32.totalorder %v2635, 2
        %v2641 = vxor.u32 %v2631, 2147483648
        %v2642 = vsel %vm2640, %v2641, %v2632
        %v2643 = vsel %vm2636, %v2639, %v2642
        %v2644 = vsel %vm2633, nan, %v2643
        %v2645 = vand.u32 2147483647, %v664
        %vm2646 = vcmp.le.f32.partialorder %v2645, 0.7853982
        %vm2647 = vcmp.lt.s32.totalorder %v664, 0
        %v2648 = vand.u32 %v664, 2139095040
        %v2649 = vshrl.u32 %v2648, 23
        %v2650 = vsub.s32 %v2649, 127
        %v2651 = vand.u32 2147483647, %v664
        %v2652 = vand.u32 %v2651, 8388607
        %v2653 = vor.u32 %v2652, 8388608
        %v2654 = vsub.s32 0, %v2653
        %v2655 = vadd.s32 %v2650, 1
        %vm2656 = vcmp.gt.s32.totalorder %v2655, 0
        %v2657 = vsel %vm2656, %v2655, 0
        %v2658 = vshrl.u32 %v2657, 5
        %v2659 = vand.u32 %v2657, 31
        %v2660 = vsub.s32 32, %v2659
        %v2661 = vshrl.u32 683565275, %v2660
        %v2662 = vshll.u32 683565275, %v2659
        %v2663 = vshrl.u32 2475754826, %v2660
        %v2664 = vor.u32 %v2662, %v2663
        %v2665 = vshll.u32 2475754826, %v2659
        %v2666 = vshrl.u32 2131351028, %v2660
        %v2667 = vor.u32 %v2665, %v2666
        %v2668 = vshll.u32 2131351028, %v2659
        %v2669 = vshrl.u32 2102212464, %v2660
        %v2670 = vor.u32 %v2668, %v2669
        %v2671 = vshll.u32 2102212464, %v2659
        %v2672 = vshrl.u32 920167782, %v2660
        %v2673 = vor.u32 %v2671, %v2672
        %v2674 = vshll.u32 920167782, %v2659
        %v2675 = vshrl.u32 1326507024, %v2660
        %v2676 = vor.u32 %v2674, %v2675
        %vm2677 = vcmp.lt.s32.totalorder %v2658, 1
        %vm2678 = vcmp.lt.s32.totalorder %v2658, 2
        %vm2679 = vcmp.lt.s32.totalorder %v2658, 3
        %vm2680 = vcmp.lt.s32.totalorder %v2658, 4
        %v2681 = vsel %vm2677, %v2661, %v2664
        %v2682 = vsel %vm2680, %v2670, 2102212464
        %v2683 = vsel %vm2679, %v2667, %v2682
        %v2684 = vsel %vm2678, %v2681, %v2683
        %v2685 = vsel %vm2677, %v2664, %v2667
        %v2686 = vsel %vm2680, %v2673, 920167782
        %v2687 = vsel %vm2679, %v2670, %v2686
        %v2688 = vsel %vm2678, %v2685, %v2687
        %v2689 = vsel %vm2677, %v2667, %v2670
        %v2690 = vsel %vm2680, %v2676, 1326507024
        %v2691 = vsel %vm2679, %v2673, %v2690
        %v2692 = vsel %vm2678, %v2689, %v2691
        %v2693 = vshll.u32 %v2653, 8
        %v2694 = vmul.u32.u64.compose %v2693, %v2692
        %v2695 = vextract.low.u32 %v2694
        %v2696 = vextract.high.u32 %v2694
        %v2697 = vmul.u32.u64.compose %v2693, %v2688
        %v2698 = vextract.low.u32 %v2697
        %v2699 = vextract.high.u32 %v2697
        %v2700 = vmul.u32 %v2693, %v2684
        %v2701 = vadd.s32 %v2696, %v2698
        %vm2702 = vc.u32 %v2696, %v2698
        %v2703 = vadd.s32 %v2699, 1
        %v2704 = vsel %vm2702, %v2703, %v2699
        %v2705 = vadd.s32 %v2700, %v2704
        %v2706 = vadd.s32 %v2705, 536870912
        %v2707 = vshrl.u32 %v2706, 30
        %v2708 = vshll.u32 %v2707, 30
        %v2709 = vsub.s32 %v2705, %v2708
        %vm2710 = vcmp.lt.s32.totalorder %v2709, 0
        %v2711 = vsub.s32 0, %v2709
        %v2712 = vsel %vm2710, %v2711, %v2709
        %v2713 = vclz %v2712
        %v2714 = vsub.s32 %v2713, 2
        %vm2715 = vcmp.gt.s32.totalorder 0, %v2714
        %v2716 = vsel %vm2715, 0, %v2714
        %v2717 = vsub.s32 32, %v2716
        %v2718 = vshll.u32 %v2709, %v2716
        %v2719 = vshrl.u32 %v2701, %v2717
        %v2720 = vor.u32 %v2718, %v2719
        %v2721 = vsub.s32 4294967266, %v2716
        %v2722 = vadd.s32 %v2721, 127
        %v2723 = vshll.u32 %v2722, 23
        %v2724 = vor.u32 4788187, %v2723
        %v2725 = vand.u32 2147483647, %v2724
        %v2727 = vcvt.s32.f32 %v2720
        %v2728 = vmul.f32 %v2727, %v2725
        %v2729 = vxor.u32 %v2728, 2147483648
        %v2730 = vsel %vm2647, %v2729, %v2728
        %v2731 = vsub.s32 4, %v2707
        %v2732 = vsel %vm2647, %v2731, %v2707
        %v2733 = vsel %vm2646, %v664, %v2730
        %v2734 = vsel %vm2646, 0, %v2732
        %v2735 = vcosq.f32.pop %v2733
        %v2736 = vsinq.f32.pop %v2733
        %vm2737 = vweird.f32 %v664
        %v2738 = vadd.s32 %v2734, 3
        %v2739 = vand.u32 %v2738, 3
        %vm2740 = vcmp.lt.s32.totalorder %v2739, 2
        %vm2741 = vcmp.eq.s32.totalorder %v2739, 0
        %v2742 = vxor.u32 %v2736, 2147483648
        %v2743 = vsel %vm2741, %v2735, %v2742
        %vm2744 = vcmp.eq.s32.totalorder %v2739, 2
        %v2745 = vxor.u32 %v2735, 2147483648
        %v2746 = vsel %vm2744, %v2745, %v2736
        %v2747 = vsel %vm2740, %v2743, %v2746
        %v2748 = vsel %vm2737, nan, %v2747
        %v2749 = vand.u32 2147483647, %v665
        %vm2750 = vcmp.le.f32.partialorder %v2749, 0.7853982
        %vm2751 = vcmp.lt.s32.totalorder %v665, 0
        %v2752 = vand.u32 %v665, 2139095040
        %v2753 = vshrl.u32 %v2752, 23
        %v2754 = vsub.s32 %v2753, 127
        %v2755 = vand.u32 2147483647, %v665
        %v2756 = vand.u32 %v2755, 8388607
        %v2757 = vor.u32 %v2756, 8388608
        %v2758 = vsub.s32 0, %v2757
        %v2759 = vadd.s32 %v2754, 1
        %vm2760 = vcmp.gt.s32.totalorder %v2759, 0
        %v2761 = vsel %vm2760, %v2759, 0
        %v2762 = vshrl.u32 %v2761, 5
        %v2763 = vand.u32 %v2761, 31
        %v2764 = vsub.s32 32, %v2763
        %v2765 = vshrl.u32 683565275, %v2764
        %v2766 = vshll.u32 683565275, %v2763
        %v2767 = vshrl.u32 2475754826, %v2764
        %v2768 = vor.u32 %v2766, %v2767
        %v2769 = vshll.u32 2475754826, %v2763
        %v2770 = vshrl.u32 2131351028, %v2764
        %v2771 = vor.u32 %v2769, %v2770
        %v2772 = vshll.u32 2131351028, %v2763
        %v2773 = vshrl.u32 2102212464, %v2764
        %v2774 = vor.u32 %v2772, %v2773
        %v2775 = vshll.u32 2102212464, %v2763
        %v2776 = vshrl.u32 920167782, %v2764
        %v2777 = vor.u32 %v2775, %v2776
        %v2778 = vshll.u32 920167782, %v2763
        %v2779 = vshrl.u32 1326507024, %v2764
        %v2780 = vor.u32 %v2778, %v2779
        %vm2781 = vcmp.lt.s32.totalorder %v2762, 1
        %vm2782 = vcmp.lt.s32.totalorder %v2762, 2
        %vm2783 = vcmp.lt.s32.totalorder %v2762, 3
        %vm2784 = vcmp.lt.s32.totalorder %v2762, 4
        %v2785 = vsel %vm2781, %v2765, %v2768
        %v2786 = vsel %vm2784, %v2774, 2102212464
        %v2787 = vsel %vm2783, %v2771, %v2786
        %v2788 = vsel %vm2782, %v2785, %v2787
        %v2789 = vsel %vm2781, %v2768, %v2771
        %v2790 = vsel %vm2784, %v2777, 920167782
        %v2791 = vsel %vm2783, %v2774, %v2790
        %v2792 = vsel %vm2782, %v2789, %v2791
        %v2793 = vsel %vm2781, %v2771, %v2774
        %v2794 = vsel %vm2784, %v2780, 1326507024
        %v2795 = vsel %vm2783, %v2777, %v2794
        %v2796 = vsel %vm2782, %v2793, %v2795
        %v2797 = vshll.u32 %v2757, 8
        %v2798 = vmul.u32.u64.compose %v2797, %v2796
        %v2799 = vextract.low.u32 %v2798
        %v2800 = vextract.high.u32 %v2798
        %v2801 = vmul.u32.u64.compose %v2797, %v2792
        %v2802 = vextract.low.u32 %v2801
        %v2803 = vextract.high.u32 %v2801
        %v2804 = vmul.u32 %v2797, %v2788
        %v2805 = vadd.s32 %v2800, %v2802
        %vm2806 = vc.u32 %v2800, %v2802
        %v2807 = vadd.s32 %v2803, 1
        %v2808 = vsel %vm2806, %v2807, %v2803
        %v2809 = vadd.s32 %v2804, %v2808
        %v2810 = vadd.s32 %v2809, 536870912
        %v2811 = vshrl.u32 %v2810, 30
        %v2812 = vshll.u32 %v2811, 30
        %v2813 = vsub.s32 %v2809, %v2812
        %vm2814 = vcmp.lt.s32.totalorder %v2813, 0
        %v2815 = vsub.s32 0, %v2813
        %v2816 = vsel %vm2814, %v2815, %v2813
        %v2817 = vclz %v2816
        %v2818 = vsub.s32 %v2817, 2
        %vm2819 = vcmp.gt.s32.totalorder 0, %v2818
        %v2820 = vsel %vm2819, 0, %v2818
        %v2821 = vsub.s32 32, %v2820
        %v2822 = vshll.u32 %v2813, %v2820
        %v2823 = vshrl.u32 %v2805, %v2821
        %v2824 = vor.u32 %v2822, %v2823
        %v2825 = vsub.s32 4294967266, %v2820
        %v2826 = vadd.s32 %v2825, 127
        %v2827 = vshll.u32 %v2826, 23
        %v2828 = vor.u32 4788187, %v2827
        %v2829 = vand.u32 2147483647, %v2828
        %v2831 = vcvt.s32.f32 %v2824
        %v2832 = vmul.f32 %v2831, %v2829
        %v2833 = vxor.u32 %v2832, 2147483648
        %v2834 = vsel %vm2751, %v2833, %v2832
        %v2835 = vsub.s32 4, %v2811
        %v2836 = vsel %vm2751, %v2835, %v2811
        %v2837 = vsel %vm2750, %v665, %v2834
        %v2838 = vsel %vm2750, 0, %v2836
        %v2839 = vcosq.f32.pop %v2837
        %v2840 = vsinq.f32.pop %v2837
        %vm2841 = vweird.f32 %v665
        %v2842 = vadd.s32 %v2838, 3
        %v2843 = vand.u32 %v2842, 3
        %vm2844 = vcmp.lt.s32.totalorder %v2843, 2
        %vm2845 = vcmp.eq.s32.totalorder %v2843, 0
        %v2846 = vxor.u32 %v2840, 2147483648
        %v2847 = vsel %vm2845, %v2839, %v2846
        %vm2848 = vcmp.eq.s32.totalorder %v2843, 2
        %v2849 = vxor.u32 %v2839, 2147483648
        %v2850 = vsel %vm2848, %v2849, %v2840
        %v2851 = vsel %vm2844, %v2847, %v2850
        %v2852 = vsel %vm2841, nan, %v2851
        %v2853 = vand.u32 2147483647, %v666
        %vm2854 = vcmp.le.f32.partialorder %v2853, 0.7853982
        %vm2855 = vcmp.lt.s32.totalorder %v666, 0
        %v2856 = vand.u32 %v666, 2139095040
        %v2857 = vshrl.u32 %v2856, 23
        %v2858 = vsub.s32 %v2857, 127
        %v2859 = vand.u32 2147483647, %v666
        %v2860 = vand.u32 %v2859, 8388607
        %v2861 = vor.u32 %v2860, 8388608
        %v2862 = vsub.s32 0, %v2861
        %v2863 = vadd.s32 %v2858, 1
        %vm2864 = vcmp.gt.s32.totalorder %v2863, 0
        %v2865 = vsel %vm2864, %v2863, 0
        %v2866 = vshrl.u32 %v2865, 5
        %v2867 = vand.u32 %v2865, 31
        %v2868 = vsub.s32 32, %v2867
        %v2869 = vshrl.u32 683565275, %v2868
        %v2870 = vshll.u32 683565275, %v2867
        %v2871 = vshrl.u32 2475754826, %v2868
        %v2872 = vor.u32 %v2870, %v2871
        %v2873 = vshll.u32 2475754826, %v2867
        %v2874 = vshrl.u32 2131351028, %v2868
        %v2875 = vor.u32 %v2873, %v2874
        %v2876 = vshll.u32 2131351028, %v2867
        %v2877 = vshrl.u32 2102212464, %v2868
        %v2878 = vor.u32 %v2876, %v2877
        %v2879 = vshll.u32 2102212464, %v2867
        %v2880 = vshrl.u32 920167782, %v2868
        %v2881 = vor.u32 %v2879, %v2880
        %v2882 = vshll.u32 920167782, %v2867
        %v2883 = vshrl.u32 1326507024, %v2868
        %v2884 = vor.u32 %v2882, %v2883
        %vm2885 = vcmp.lt.s32.totalorder %v2866, 1
        %vm2886 = vcmp.lt.s32.totalorder %v2866, 2
        %vm2887 = vcmp.lt.s32.totalorder %v2866, 3
        %vm2888 = vcmp.lt.s32.totalorder %v2866, 4
        %v2889 = vsel %vm2885, %v2869, %v2872
        %v2890 = vsel %vm2888, %v2878, 2102212464
        %v2891 = vsel %vm2887, %v2875, %v2890
        %v2892 = vsel %vm2886, %v2889, %v2891
        %v2893 = vsel %vm2885, %v2872, %v2875
        %v2894 = vsel %vm2888, %v2881, 920167782
        %v2895 = vsel %vm2887, %v2878, %v2894
        %v2896 = vsel %vm2886, %v2893, %v2895
        %v2897 = vsel %vm2885, %v2875, %v2878
        %v2898 = vsel %vm2888, %v2884, 1326507024
        %v2899 = vsel %vm2887, %v2881, %v2898
        %v2900 = vsel %vm2886, %v2897, %v2899
        %v2901 = vshll.u32 %v2861, 8
        %v2902 = vmul.u32.u64.compose %v2901, %v2900
        %v2903 = vextract.low.u32 %v2902
        %v2904 = vextract.high.u32 %v2902
        %v2905 = vmul.u32.u64.compose %v2901, %v2896
        %v2906 = vextract.low.u32 %v2905
        %v2907 = vextract.high.u32 %v2905
        %v2908 = vmul.u32 %v2901, %v2892
        %v2909 = vadd.s32 %v2904, %v2906
        %vm2910 = vc.u32 %v2904, %v2906
        %v2911 = vadd.s32 %v2907, 1
        %v2912 = vsel %vm2910, %v2911, %v2907
        %v2913 = vadd.s32 %v2908, %v2912
        %v2914 = vadd.s32 %v2913, 536870912
        %v2915 = vshrl.u32 %v2914, 30
        %v2916 = vshll.u32 %v2915, 30
        %v2917 = vsub.s32 %v2913, %v2916
        %vm2918 = vcmp.lt.s32.totalorder %v2917, 0
        %v2919 = vsub.s32 0, %v2917
        %v2920 = vsel %vm2918, %v2919, %v2917
        %v2921 = vclz %v2920
        %v2922 = vsub.s32 %v2921, 2
        %vm2923 = vcmp.gt.s32.totalorder 0, %v2922
        %v2924 = vsel %vm2923, 0, %v2922
        %v2925 = vsub.s32 32, %v2924
        %v2926 = vshll.u32 %v2917, %v2924
        %v2927 = vshrl.u32 %v2909, %v2925
        %v2928 = vor.u32 %v2926, %v2927
        %v2929 = vsub.s32 4294967266, %v2924
        %v2930 = vadd.s32 %v2929, 127
        %v2931 = vshll.u32 %v2930, 23
        %v2932 = vor.u32 4788187, %v2931
        %v2933 = vand.u32 2147483647, %v2932
        %v2935 = vcvt.s32.f32 %v2928
        %v2936 = vmul.f32 %v2935, %v2933
        %v2937 = vxor.u32 %v2936, 2147483648
        %v2938 = vsel %vm2855, %v2937, %v2936
        %v2939 = vsub.s32 4, %v2915
        %v2940 = vsel %vm2855, %v2939, %v2915
        %v2941 = vsel %vm2854, %v666, %v2938
        %v2942 = vsel %vm2854, 0, %v2940
        %v2943 = vcosq.f32.pop %v2941
        %v2944 = vsinq.f32.pop %v2941
        %vm2945 = vweird.f32 %v666
        %v2946 = vadd.s32 %v2942, 3
        %v2947 = vand.u32 %v2946, 3
        %vm2948 = vcmp.lt.s32.totalorder %v2947, 2
        %vm2949 = vcmp.eq.s32.totalorder %v2947, 0
        %v2950 = vxor.u32 %v2944, 2147483648
        %v2951 = vsel %vm2949, %v2943, %v2950
        %vm2952 = vcmp.eq.s32.totalorder %v2947, 2
        %v2953 = vxor.u32 %v2943, 2147483648
        %v2954 = vsel %vm2952, %v2953, %v2944
        %v2955 = vsel %vm2948, %v2951, %v2954
        %v2956 = vsel %vm2945, nan, %v2955
        %v2957 = vand.u32 2147483647, %v667
        %vm2958 = vcmp.le.f32.partialorder %v2957, 0.7853982
        %vm2959 = vcmp.lt.s32.totalorder %v667, 0
        %v2960 = vand.u32 %v667, 2139095040
        %v2961 = vshrl.u32 %v2960, 23
        %v2962 = vsub.s32 %v2961, 127
        %v2963 = vand.u32 2147483647, %v667
        %v2964 = vand.u32 %v2963, 8388607
        %v2965 = vor.u32 %v2964, 8388608
        %v2966 = vsub.s32 0, %v2965
        %v2967 = vadd.s32 %v2962, 1
        %vm2968 = vcmp.gt.s32.totalorder %v2967, 0
        %v2969 = vsel %vm2968, %v2967, 0
        %v2970 = vshrl.u32 %v2969, 5
        %v2971 = vand.u32 %v2969, 31
        %v2972 = vsub.s32 32, %v2971
        %v2973 = vshrl.u32 683565275, %v2972
        %v2974 = vshll.u32 683565275, %v2971
        %v2975 = vshrl.u32 2475754826, %v2972
        %v2976 = vor.u32 %v2974, %v2975
        %v2977 = vshll.u32 2475754826, %v2971
        %v2978 = vshrl.u32 2131351028, %v2972
        %v2979 = vor.u32 %v2977, %v2978
        %v2980 = vshll.u32 2131351028, %v2971
        %v2981 = vshrl.u32 2102212464, %v2972
        %v2982 = vor.u32 %v2980, %v2981
        %v2983 = vshll.u32 2102212464, %v2971
        %v2984 = vshrl.u32 920167782, %v2972
        %v2985 = vor.u32 %v2983, %v2984
        %v2986 = vshll.u32 920167782, %v2971
        %v2987 = vshrl.u32 1326507024, %v2972
        %v2988 = vor.u32 %v2986, %v2987
        %vm2989 = vcmp.lt.s32.totalorder %v2970, 1
        %vm2990 = vcmp.lt.s32.totalorder %v2970, 2
        %vm2991 = vcmp.lt.s32.totalorder %v2970, 3
        %vm2992 = vcmp.lt.s32.totalorder %v2970, 4
        %v2993 = vsel %vm2989, %v2973, %v2976
        %v2994 = vsel %vm2992, %v2982, 2102212464
        %v2995 = vsel %vm2991, %v2979, %v2994
        %v2996 = vsel %vm2990, %v2993, %v2995
        %v2997 = vsel %vm2989, %v2976, %v2979
        %v2998 = vsel %vm2992, %v2985, 920167782
        %v2999 = vsel %vm2991, %v2982, %v2998
        %v3000 = vsel %vm2990, %v2997, %v2999
        %v3001 = vsel %vm2989, %v2979, %v2982
        %v3002 = vsel %vm2992, %v2988, 1326507024
        %v3003 = vsel %vm2991, %v2985, %v3002
        %v3004 = vsel %vm2990, %v3001, %v3003
        %v3005 = vshll.u32 %v2965, 8
        %v3006 = vmul.u32.u64.compose %v3005, %v3004
        %v3007 = vextract.low.u32 %v3006
        %v3008 = vextract.high.u32 %v3006
        %v3009 = vmul.u32.u64.compose %v3005, %v3000
        %v3010 = vextract.low.u32 %v3009
        %v3011 = vextract.high.u32 %v3009
        %v3012 = vmul.u32 %v3005, %v2996
        %v3013 = vadd.s32 %v3008, %v3010
        %vm3014 = vc.u32 %v3008, %v3010
        %v3015 = vadd.s32 %v3011, 1
        %v3016 = vsel %vm3014, %v3015, %v3011
        %v3017 = vadd.s32 %v3012, %v3016
        %v3018 = vadd.s32 %v3017, 536870912
        %v3019 = vshrl.u32 %v3018, 30
        %v3020 = vshll.u32 %v3019, 30
        %v3021 = vsub.s32 %v3017, %v3020
        %vm3022 = vcmp.lt.s32.totalorder %v3021, 0
        %v3023 = vsub.s32 0, %v3021
        %v3024 = vsel %vm3022, %v3023, %v3021
        %v3025 = vclz %v3024
        %v3026 = vsub.s32 %v3025, 2
        %vm3027 = vcmp.gt.s32.totalorder 0, %v3026
        %v3028 = vsel %vm3027, 0, %v3026
        %v3029 = vsub.s32 32, %v3028
        %v3030 = vshll.u32 %v3021, %v3028
        %v3031 = vshrl.u32 %v3013, %v3029
        %v3032 = vor.u32 %v3030, %v3031
        %v3033 = vsub.s32 4294967266, %v3028
        %v3034 = vadd.s32 %v3033, 127
        %v3035 = vshll.u32 %v3034, 23
        %v3036 = vor.u32 4788187, %v3035
        %v3037 = vand.u32 2147483647, %v3036
        %v3039 = vcvt.s32.f32 %v3032
        %v3040 = vmul.f32 %v3039, %v3037
        %v3041 = vxor.u32 %v3040, 2147483648
        %v3042 = vsel %vm2959, %v3041, %v3040
        %v3043 = vsub.s32 4, %v3019
        %v3044 = vsel %vm2959, %v3043, %v3019
        %v3045 = vsel %vm2958, %v667, %v3042
        %v3046 = vsel %vm2958, 0, %v3044
        %v3047 = vcosq.f32.pop %v3045
        %v3048 = vsinq.f32.pop %v3045
        %vm3049 = vweird.f32 %v667
        %v3050 = vadd.s32 %v3046, 3
        %v3051 = vand.u32 %v3050, 3
        %vm3052 = vcmp.lt.s32.totalorder %v3051, 2
        %vm3053 = vcmp.eq.s32.totalorder %v3051, 0
        %v3054 = vxor.u32 %v3048, 2147483648
        %v3055 = vsel %vm3053, %v3047, %v3054
        %vm3056 = vcmp.eq.s32.totalorder %v3051, 2
        %v3057 = vxor.u32 %v3047, 2147483648
        %v3058 = vsel %vm3056, %v3057, %v3048
        %v3059 = vsel %vm3052, %v3055, %v3058
        %v3060 = vsel %vm3049, nan, %v3059
        %v3061 = vand.u32 2147483647, %v668
        %vm3062 = vcmp.le.f32.partialorder %v3061, 0.7853982
        %vm3063 = vcmp.lt.s32.totalorder %v668, 0
        %v3064 = vand.u32 %v668, 2139095040
        %v3065 = vshrl.u32 %v3064, 23
        %v3066 = vsub.s32 %v3065, 127
        %v3067 = vand.u32 2147483647, %v668
        %v3068 = vand.u32 %v3067, 8388607
        %v3069 = vor.u32 %v3068, 8388608
        %v3070 = vsub.s32 0, %v3069
        %v3071 = vadd.s32 %v3066, 1
        %vm3072 = vcmp.gt.s32.totalorder %v3071, 0
        %v3073 = vsel %vm3072, %v3071, 0
        %v3074 = vshrl.u32 %v3073, 5
        %v3075 = vand.u32 %v3073, 31
        %v3076 = vsub.s32 32, %v3075
        %v3077 = vshrl.u32 683565275, %v3076
        %v3078 = vshll.u32 683565275, %v3075
        %v3079 = vshrl.u32 2475754826, %v3076
        %v3080 = vor.u32 %v3078, %v3079
        %v3081 = vshll.u32 2475754826, %v3075
        %v3082 = vshrl.u32 2131351028, %v3076
        %v3083 = vor.u32 %v3081, %v3082
        %v3084 = vshll.u32 2131351028, %v3075
        %v3085 = vshrl.u32 2102212464, %v3076
        %v3086 = vor.u32 %v3084, %v3085
        %v3087 = vshll.u32 2102212464, %v3075
        %v3088 = vshrl.u32 920167782, %v3076
        %v3089 = vor.u32 %v3087, %v3088
        %v3090 = vshll.u32 920167782, %v3075
        %v3091 = vshrl.u32 1326507024, %v3076
        %v3092 = vor.u32 %v3090, %v3091
        %vm3093 = vcmp.lt.s32.totalorder %v3074, 1
        %vm3094 = vcmp.lt.s32.totalorder %v3074, 2
        %vm3095 = vcmp.lt.s32.totalorder %v3074, 3
        %vm3096 = vcmp.lt.s32.totalorder %v3074, 4
        %v3097 = vsel %vm3093, %v3077, %v3080
        %v3098 = vsel %vm3096, %v3086, 2102212464
        %v3099 = vsel %vm3095, %v3083, %v3098
        %v3100 = vsel %vm3094, %v3097, %v3099
        %v3101 = vsel %vm3093, %v3080, %v3083
        %v3102 = vsel %vm3096, %v3089, 920167782
        %v3103 = vsel %vm3095, %v3086, %v3102
        %v3104 = vsel %vm3094, %v3101, %v3103
        %v3105 = vsel %vm3093, %v3083, %v3086
        %v3106 = vsel %vm3096, %v3092, 1326507024
        %v3107 = vsel %vm3095, %v3089, %v3106
        %v3108 = vsel %vm3094, %v3105, %v3107
        %v3109 = vshll.u32 %v3069, 8
        %v3110 = vmul.u32.u64.compose %v3109, %v3108
        %v3111 = vextract.low.u32 %v3110
        %v3112 = vextract.high.u32 %v3110
        %v3113 = vmul.u32.u64.compose %v3109, %v3104
        %v3114 = vextract.low.u32 %v3113
        %v3115 = vextract.high.u32 %v3113
        %v3116 = vmul.u32 %v3109, %v3100
        %v3117 = vadd.s32 %v3112, %v3114
        %vm3118 = vc.u32 %v3112, %v3114
        %v3119 = vadd.s32 %v3115, 1
        %v3120 = vsel %vm3118, %v3119, %v3115
        %v3121 = vadd.s32 %v3116, %v3120
        %v3122 = vadd.s32 %v3121, 536870912
        %v3123 = vshrl.u32 %v3122, 30
        %v3124 = vshll.u32 %v3123, 30
        %v3125 = vsub.s32 %v3121, %v3124
        %vm3126 = vcmp.lt.s32.totalorder %v3125, 0
        %v3127 = vsub.s32 0, %v3125
        %v3128 = vsel %vm3126, %v3127, %v3125
        %v3129 = vclz %v3128
        %v3130 = vsub.s32 %v3129, 2
        %vm3131 = vcmp.gt.s32.totalorder 0, %v3130
        %v3132 = vsel %vm3131, 0, %v3130
        %v3133 = vsub.s32 32, %v3132
        %v3134 = vshll.u32 %v3125, %v3132
        %v3135 = vshrl.u32 %v3117, %v3133
        %v3136 = vor.u32 %v3134, %v3135
        %v3137 = vsub.s32 4294967266, %v3132
        %v3138 = vadd.s32 %v3137, 127
        %v3139 = vshll.u32 %v3138, 23
        %v3140 = vor.u32 4788187, %v3139
        %v3141 = vand.u32 2147483647, %v3140
        %v3143 = vcvt.s32.f32 %v3136
        %v3144 = vmul.f32 %v3143, %v3141
        %v3145 = vxor.u32 %v3144, 2147483648
        %v3146 = vsel %vm3063, %v3145, %v3144
        %v3147 = vsub.s32 4, %v3123
        %v3148 = vsel %vm3063, %v3147, %v3123
        %v3149 = vsel %vm3062, %v668, %v3146
        %v3150 = vsel %vm3062, 0, %v3148
        %v3151 = vcosq.f32.pop %v3149
        %v3152 = vsinq.f32.pop %v3149
        %vm3153 = vweird.f32 %v668
        %v3154 = vadd.s32 %v3150, 3
        %v3155 = vand.u32 %v3154, 3
        %vm3156 = vcmp.lt.s32.totalorder %v3155, 2
        %vm3157 = vcmp.eq.s32.totalorder %v3155, 0
        %v3158 = vxor.u32 %v3152, 2147483648
        %v3159 = vsel %vm3157, %v3151, %v3158
        %vm3160 = vcmp.eq.s32.totalorder %v3155, 2
        %v3161 = vxor.u32 %v3151, 2147483648
        %v3162 = vsel %vm3160, %v3161, %v3152
        %v3163 = vsel %vm3156, %v3159, %v3162
        %v3164 = vsel %vm3153, nan, %v3163
        %v3165 = vmul.f32 %v2436, %v772
        %v3166 = vmul.f32 %v2540, %v876
        %v3167 = vmul.f32 %v2644, %v980
        %v3168 = vmul.f32 %v2748, %v1084
        %v3169 = vmul.f32 %v2852, %v1188
        %v3170 = vmul.f32 %v2956, %v1292
        %v3171 = vmul.f32 %v3060, %v1396
        %v3172 = vmul.f32 %v3164, %v1500
        %v3173 = vsub.f32 1.0, %v2436
        %v3174 = vsub.f32 1.0, %v2540
        %v3175 = vsub.f32 1.0, %v2644
        %v3176 = vsub.f32 1.0, %v2748
        %v3177 = vsub.f32 1.0, %v2852
        %v3178 = vsub.f32 1.0, %v2956
        %v3179 = vsub.f32 1.0, %v3060
        %v3180 = vsub.f32 1.0, %v3164
        %v3181 = vmul.f32 %v3173, %v1604
        %v3182 = vmul.f32 %v3174, %v1708
        %v3183 = vmul.f32 %v3175, %v1812
        %v3184 = vmul.f32 %v3176, %v1916
        %v3185 = vmul.f32 %v3177, %v2020
        %v3186 = vmul.f32 %v3178, %v2124
        %v3187 = vmul.f32 %v3179, %v2228
        %v3188 = vmul.f32 %v3180, %v2332
        %v3189 = vadd.f32 %v3165, %v3181
        %v3190 = vadd.f32 %v3166, %v3182
        %v3191 = vadd.f32 %v3167, %v3183
        %v3192 = vadd.f32 %v3168, %v3184
        %v3193 = vadd.f32 %v3169, %v3185
        %v3194 = vadd.f32 %v3170, %v3186
        %v3195 = vadd.f32 %v3171, %v3187
        %v3196 = vadd.f32 %v3172, %v3188
        %v3197 = vld [vmem:[%s2] sm:$0xff]
        %v3198 = vld [vmem:[%s2 + $0x8] sm:$0xff]
        %v3199 = vld [vmem:[%s2 + $0x10] sm:$0xff]
        %v3200 = vld [vmem:[%s2 + $0x18] sm:$0xff]
        %v3201 = vld [vmem:[%s3] sm:$0xff]
        %v3202 = vld [vmem:[%s3 + $0x8] sm:$0xff]
        %v3203 = vld [vmem:[%s3 + $0x10] sm:$0xff]
        %v3204 = vld [vmem:[%s3 + $0x18] sm:$0xff]
        %3206 = vset.pattern.permute.xlu0 0
        %3207 = vperm.xlu0 %3206, %v3201
        %v3208 = vpop.permute.xlu0 %3207
        %3211 = vset.pattern.permute.xlu0 0
        %3212 = vperm.xlu0 %3211, %v3202
        %v3213 = vpop.permute.xlu0 %3212
        %3216 = vset.pattern.permute.xlu0 0
        %3217 = vperm.xlu0 %3216, %v3203
        %v3218 = vpop.permute.xlu0 %3217
        %3221 = vset.pattern.permute.xlu0 0
        %3222 = vperm.xlu0 %3221, %v3204
        %v3223 = vpop.permute.xlu0 %3222
        %vm3225 = vcmask 261120
        %v3227 = vsel %vm3225, %v3197, 0
        %v3230 = vsel %vm3225, %v3198, 0
        %v3233 = vsel %vm3225, %v3199, 0
        %v3236 = vsel %vm3225, %v3200, 0
        %3238 = vmatprep.subr.mxu0 %v3190
        %3239 = vmatpush1.msra.mxu0 %v3189
        %3240 = vmatprep.subr.mxu0 %v3192
        %3241 = vmatpush1.msra.mxu0 %v3191
        %3242 = vmatprep.subr.mxu0 %v3194
        %3243 = vmatpush1.msra.mxu0 %v3193
        %3244 = vmatprep.subr.mxu0 %v3196
        %3245 = vmatpush1.msra.mxu0 %v3195
        %3246 = vmatprep.subr.mxu0 0.0
        %3247 = vmatpush1.msra.mxu0 0.0
        %3248 = vmatprep.subr.mxu0 0.0
        %3249 = vmatpush1.msra.mxu0 0.0
        %3250 = vmatprep.subr.mxu0 0.0
        %3251 = vmatpush1.msra.mxu0 0.0
        %3252 = vmatprep.subr.mxu0 0.0
        %3253 = vmatpush1.msra.mxu0 0.0
        %3254 = vmatprep.subr.mxu0 0.0
        %3255 = vmatpush1.msra.mxu0 0.0
        %3256 = vmatprep.subr.mxu0 0.0
        %3257 = vmatpush1.msra.mxu0 0.0
        %3258 = vmatprep.subr.mxu0 0.0
        %3259 = vmatpush1.msra.mxu0 0.0
        %3260 = vmatprep.subr.mxu0 0.0
        %3261 = vmatpush1.msra.mxu0 0.0
        %3262 = vmatprep.subr.mxu0 0.0
        %3263 = vmatpush1.msra.mxu0 0.0
        %3264 = vmatprep.subr.mxu0 0.0
        %3265 = vmatpush1.msra.mxu0 0.0
        %3266 = vmatprep.subr.mxu0 0.0
        %3267 = vmatpush1.msra.mxu0 0.0
        %3268 = vmatprep.subr.mxu0 0.0
        %3269 = vmatpush1.msra.mxu0 0.0
        %3270 = vmatprep.subr.mxu0 0.0
        %3271 = vmatpush1.msra.mxu0 0.0
        %3272 = vmatprep.subr.mxu0 0.0
        %3273 = vmatpush1.msra.mxu0 0.0
        %3274 = vmatprep.subr.mxu0 0.0
        %3275 = vmatpush1.msra.mxu0 0.0
        %3276 = vmatprep.subr.mxu0 0.0
        %3277 = vmatpush1.msra.mxu0 0.0
        %3278 = vmatprep.subr.mxu0 0.0
        %3279 = vmatpush1.msra.mxu0 0.0
        %3280 = vmatprep.subr.mxu0 0.0
        %3281 = vmatpush1.msra.mxu0 0.0
        %3282 = vmatprep.subr.mxu0 0.0
        %3283 = vmatpush1.msra.mxu0 0.0
        %3284 = vmatprep.subr.mxu0 0.0
        %3285 = vmatpush1.msra.mxu0 0.0
        %3286 = vmatprep.subr.mxu0 0.0
        %3287 = vmatpush1.msra.mxu0 0.0
        %3288 = vmatprep.subr.mxu0 0.0
        %3289 = vmatpush1.msra.mxu0 0.0
        %3290 = vmatprep.subr.mxu0 0.0
        %3291 = vmatpush1.msra.mxu0 0.0
        %3292 = vmatprep.subr.mxu0 0.0
        %3293 = vmatpush1.msra.mxu0 0.0
        %3294 = vmatprep.subr.mxu0 0.0
        %3295 = vmatpush1.msra.mxu0 0.0
        %3296 = vmatprep.subr.mxu0 0.0
        %3297 = vmatpush1.msra.mxu0 0.0
        %3298 = vmatprep.subr.mxu0 0.0
        %3299 = vmatpush1.msra.mxu0 0.0
        %3300 = vmatprep.subr.mxu0 0.0
        %3301 = vmatpush1.msra.mxu0 0.0
        %3302 = vmatprep.mubr.f32.mxu0 0.0
        %3303 = vmatmul.mubr.f32.gmra.mrb[0].mxu0 %v3227
        %v3304 = vpop.f32.mrb[0].mxu0
        %v3305 = vadd.f32 %v3208, %v3304
        %v3306 = vpop.f32.mrb[0].mxu0
        %v3307 = vadd.f32 %v3208, %v3306
        %3308 = vmatprep.mubr.f32.mxu0 0.0
        %3309 = vmatmul.mubr.f32.gmra.mrb[0].mxu0 %v3230
        %v3310 = vpop.f32.mrb[0].mxu0
        %v3311 = vadd.f32 %v3213, %v3310
        %v3312 = vpop.f32.mrb[0].mxu0
        %v3313 = vadd.f32 %v3213, %v3312
        %3314 = vmatprep.mubr.f32.mxu0 0.0
        %3315 = vmatmul.mubr.f32.gmra.mrb[0].mxu0 %v3233
        %v3316 = vpop.f32.mrb[0].mxu0
        %v3317 = vadd.f32 %v3218, %v3316
        %v3318 = vpop.f32.mrb[0].mxu0
        %v3319 = vadd.f32 %v3218, %v3318
        %3320 = vmatprep.mubr.f32.mxu0 0.0
        %3321 = vmatmul.mubr.f32.gmra.mrb[0].mxu0 %v3236
        %v3322 = vpop.f32.mrb[0].mxu0
        %v3323 = vadd.f32 %v3223, %v3322
        %v3324 = vpop.f32.mrb[0].mxu0
        %v3325 = vadd.f32 %v3223, %v3324
        %3326 = vdwg.mxu0
        %v3327 = vand.u32 2147483647, %v3305
        %vm3328 = vcmp.le.f32.partialorder %v3327, 0.7853982
        %vm3329 = vcmp.lt.s32.totalorder %v3305, 0
        %v3330 = vand.u32 %v3305, 2139095040
        %v3331 = vshrl.u32 %v3330, 23
        %v3332 = vsub.s32 %v3331, 127
        %v3333 = vand.u32 2147483647, %v3305
        %v3334 = vand.u32 %v3333, 8388607
        %v3335 = vor.u32 %v3334, 8388608
        %v3336 = vsub.s32 0, %v3335
        %v3337 = vadd.s32 %v3332, 1
        %vm3338 = vcmp.gt.s32.totalorder %v3337, 0
        %v3339 = vsel %vm3338, %v3337, 0
        %v3340 = vshrl.u32 %v3339, 5
        %v3341 = vand.u32 %v3339, 31
        %v3342 = vsub.s32 32, %v3341
        %v3343 = vshrl.u32 683565275, %v3342
        %v3344 = vshll.u32 683565275, %v3341
        %v3345 = vshrl.u32 2475754826, %v3342
        %v3346 = vor.u32 %v3344, %v3345
        %v3347 = vshll.u32 2475754826, %v3341
        %v3348 = vshrl.u32 2131351028, %v3342
        %v3349 = vor.u32 %v3347, %v3348
        %v3350 = vshll.u32 2131351028, %v3341
        %v3351 = vshrl.u32 2102212464, %v3342
        %v3352 = vor.u32 %v3350, %v3351
        %v3353 = vshll.u32 2102212464, %v3341
        %v3354 = vshrl.u32 920167782, %v3342
        %v3355 = vor.u32 %v3353, %v3354
        %v3356 = vshll.u32 920167782, %v3341
        %v3357 = vshrl.u32 1326507024, %v3342
        %v3358 = vor.u32 %v3356, %v3357
        %vm3359 = vcmp.lt.s32.totalorder %v3340, 1
        %vm3360 = vcmp.lt.s32.totalorder %v3340, 2
        %vm3361 = vcmp.lt.s32.totalorder %v3340, 3
        %vm3362 = vcmp.lt.s32.totalorder %v3340, 4
        %v3363 = vsel %vm3359, %v3343, %v3346
        %v3364 = vsel %vm3362, %v3352, 2102212464
        %v3365 = vsel %vm3361, %v3349, %v3364
        %v3366 = vsel %vm3360, %v3363, %v3365
        %v3367 = vsel %vm3359, %v3346, %v3349
        %v3368 = vsel %vm3362, %v3355, 920167782
        %v3369 = vsel %vm3361, %v3352, %v3368
        %v3370 = vsel %vm3360, %v3367, %v3369
        %v3371 = vsel %vm3359, %v3349, %v3352
        %v3372 = vsel %vm3362, %v3358, 1326507024
        %v3373 = vsel %vm3361, %v3355, %v3372
        %v3374 = vsel %vm3360, %v3371, %v3373
        %v3375 = vshll.u32 %v3335, 8
        %v3376 = vmul.u32.u64.compose %v3375, %v3374
        %v3377 = vextract.low.u32 %v3376
        %v3378 = vextract.high.u32 %v3376
        %v3379 = vmul.u32.u64.compose %v3375, %v3370
        %v3380 = vextract.low.u32 %v3379
        %v3381 = vextract.high.u32 %v3379
        %v3382 = vmul.u32 %v3375, %v3366
        %v3383 = vadd.s32 %v3378, %v3380
        %vm3384 = vc.u32 %v3378, %v3380
        %v3385 = vadd.s32 %v3381, 1
        %v3386 = vsel %vm3384, %v3385, %v3381
        %v3387 = vadd.s32 %v3382, %v3386
        %v3388 = vadd.s32 %v3387, 536870912
        %v3389 = vshrl.u32 %v3388, 30
        %v3390 = vshll.u32 %v3389, 30
        %v3391 = vsub.s32 %v3387, %v3390
        %vm3392 = vcmp.lt.s32.totalorder %v3391, 0
        %v3393 = vsub.s32 0, %v3391
        %v3394 = vsel %vm3392, %v3393, %v3391
        %v3395 = vclz %v3394
        %v3396 = vsub.s32 %v3395, 2
        %vm3397 = vcmp.gt.s32.totalorder 0, %v3396
        %v3398 = vsel %vm3397, 0, %v3396
        %v3399 = vsub.s32 32, %v3398
        %v3400 = vshll.u32 %v3391, %v3398
        %v3401 = vshrl.u32 %v3383, %v3399
        %v3402 = vor.u32 %v3400, %v3401
        %v3403 = vsub.s32 4294967266, %v3398
        %v3404 = vadd.s32 %v3403, 127
        %v3405 = vshll.u32 %v3404, 23
        %v3406 = vor.u32 4788187, %v3405
        %v3407 = vand.u32 2147483647, %v3406
        %v3409 = vcvt.s32.f32 %v3402
        %v3410 = vmul.f32 %v3409, %v3407
        %v3411 = vxor.u32 %v3410, 2147483648
        %v3412 = vsel %vm3329, %v3411, %v3410
        %v3413 = vsub.s32 4, %v3389
        %v3414 = vsel %vm3329, %v3413, %v3389
        %v3415 = vsel %vm3328, %v3305, %v3412
        %v3416 = vsel %vm3328, 0, %v3414
        %v3417 = vcosq.f32.pop %v3415
        %v3418 = vsinq.f32.pop %v3415
        %vm3419 = vweird.f32 %v3305
        %v3420 = vadd.s32 %v3416, 3
        %v3421 = vand.u32 %v3420, 3
        %vm3422 = vcmp.lt.s32.totalorder %v3421, 2
        %vm3423 = vcmp.eq.s32.totalorder %v3421, 0
        %v3424 = vxor.u32 %v3418, 2147483648
        %v3425 = vsel %vm3423, %v3417, %v3424
        %vm3426 = vcmp.eq.s32.totalorder %v3421, 2
        %v3427 = vxor.u32 %v3417, 2147483648
        %v3428 = vsel %vm3426, %v3427, %v3418
        %v3429 = vsel %vm3422, %v3425, %v3428
        %v3430 = vsel %vm3419, nan, %v3429
        %v3431 = vand.u32 2147483647, %v3307
        %vm3432 = vcmp.le.f32.partialorder %v3431, 0.7853982
        %vm3433 = vcmp.lt.s32.totalorder %v3307, 0
        %v3434 = vand.u32 %v3307, 2139095040
        %v3435 = vshrl.u32 %v3434, 23
        %v3436 = vsub.s32 %v3435, 127
        %v3437 = vand.u32 2147483647, %v3307
        %v3438 = vand.u32 %v3437, 8388607
        %v3439 = vor.u32 %v3438, 8388608
        %v3440 = vsub.s32 0, %v3439
        %v3441 = vadd.s32 %v3436, 1
        %vm3442 = vcmp.gt.s32.totalorder %v3441, 0
        %v3443 = vsel %vm3442, %v3441, 0
        %v3444 = vshrl.u32 %v3443, 5
        %v3445 = vand.u32 %v3443, 31
        %v3446 = vsub.s32 32, %v3445
        %v3447 = vshrl.u32 683565275, %v3446
        %v3448 = vshll.u32 683565275, %v3445
        %v3449 = vshrl.u32 2475754826, %v3446
        %v3450 = vor.u32 %v3448, %v3449
        %v3451 = vshll.u32 2475754826, %v3445
        %v3452 = vshrl.u32 2131351028, %v3446
        %v3453 = vor.u32 %v3451, %v3452
        %v3454 = vshll.u32 2131351028, %v3445
        %v3455 = vshrl.u32 2102212464, %v3446
        %v3456 = vor.u32 %v3454, %v3455
        %v3457 = vshll.u32 2102212464, %v3445
        %v3458 = vshrl.u32 920167782, %v3446
        %v3459 = vor.u32 %v3457, %v3458
        %v3460 = vshll.u32 920167782, %v3445
        %v3461 = vshrl.u32 1326507024, %v3446
        %v3462 = vor.u32 %v3460, %v3461
        %vm3463 = vcmp.lt.s32.totalorder %v3444, 1
        %vm3464 = vcmp.lt.s32.totalorder %v3444, 2
        %vm3465 = vcmp.lt.s32.totalorder %v3444, 3
        %vm3466 = vcmp.lt.s32.totalorder %v3444, 4
        %v3467 = vsel %vm3463, %v3447, %v3450
        %v3468 = vsel %vm3466, %v3456, 2102212464
        %v3469 = vsel %vm3465, %v3453, %v3468
        %v3470 = vsel %vm3464, %v3467, %v3469
        %v3471 = vsel %vm3463, %v3450, %v3453
        %v3472 = vsel %vm3466, %v3459, 920167782
        %v3473 = vsel %vm3465, %v3456, %v3472
        %v3474 = vsel %vm3464, %v3471, %v3473
        %v3475 = vsel %vm3463, %v3453, %v3456
        %v3476 = vsel %vm3466, %v3462, 1326507024
        %v3477 = vsel %vm3465, %v3459, %v3476
        %v3478 = vsel %vm3464, %v3475, %v3477
        %v3479 = vshll.u32 %v3439, 8
        %v3480 = vmul.u32.u64.compose %v3479, %v3478
        %v3481 = vextract.low.u32 %v3480
        %v3482 = vextract.high.u32 %v3480
        %v3483 = vmul.u32.u64.compose %v3479, %v3474
        %v3484 = vextract.low.u32 %v3483
        %v3485 = vextract.high.u32 %v3483
        %v3486 = vmul.u32 %v3479, %v3470
        %v3487 = vadd.s32 %v3482, %v3484
        %vm3488 = vc.u32 %v3482, %v3484
        %v3489 = vadd.s32 %v3485, 1
        %v3490 = vsel %vm3488, %v3489, %v3485
        %v3491 = vadd.s32 %v3486, %v3490
        %v3492 = vadd.s32 %v3491, 536870912
        %v3493 = vshrl.u32 %v3492, 30
        %v3494 = vshll.u32 %v3493, 30
        %v3495 = vsub.s32 %v3491, %v3494
        %vm3496 = vcmp.lt.s32.totalorder %v3495, 0
        %v3497 = vsub.s32 0, %v3495
        %v3498 = vsel %vm3496, %v3497, %v3495
        %v3499 = vclz %v3498
        %v3500 = vsub.s32 %v3499, 2
        %vm3501 = vcmp.gt.s32.totalorder 0, %v3500
        %v3502 = vsel %vm3501, 0, %v3500
        %v3503 = vsub.s32 32, %v3502
        %v3504 = vshll.u32 %v3495, %v3502
        %v3505 = vshrl.u32 %v3487, %v3503
        %v3506 = vor.u32 %v3504, %v3505
        %v3507 = vsub.s32 4294967266, %v3502
        %v3508 = vadd.s32 %v3507, 127
        %v3509 = vshll.u32 %v3508, 23
        %v3510 = vor.u32 4788187, %v3509
        %v3511 = vand.u32 2147483647, %v3510
        %v3513 = vcvt.s32.f32 %v3506
        %v3514 = vmul.f32 %v3513, %v3511
        %v3515 = vxor.u32 %v3514, 2147483648
        %v3516 = vsel %vm3433, %v3515, %v3514
        %v3517 = vsub.s32 4, %v3493
        %v3518 = vsel %vm3433, %v3517, %v3493
        %v3519 = vsel %vm3432, %v3307, %v3516
        %v3520 = vsel %vm3432, 0, %v3518
        %v3521 = vcosq.f32.pop %v3519
        %v3522 = vsinq.f32.pop %v3519
        %vm3523 = vweird.f32 %v3307
        %v3524 = vadd.s32 %v3520, 3
        %v3525 = vand.u32 %v3524, 3
        %vm3526 = vcmp.lt.s32.totalorder %v3525, 2
        %vm3527 = vcmp.eq.s32.totalorder %v3525, 0
        %v3528 = vxor.u32 %v3522, 2147483648
        %v3529 = vsel %vm3527, %v3521, %v3528
        %vm3530 = vcmp.eq.s32.totalorder %v3525, 2
        %v3531 = vxor.u32 %v3521, 2147483648
        %v3532 = vsel %vm3530, %v3531, %v3522
        %v3533 = vsel %vm3526, %v3529, %v3532
        %v3534 = vsel %vm3523, nan, %v3533
        %v3535 = vand.u32 2147483647, %v3311
        %vm3536 = vcmp.le.f32.partialorder %v3535, 0.7853982
        %vm3537 = vcmp.lt.s32.totalorder %v3311, 0
        %v3538 = vand.u32 %v3311, 2139095040
        %v3539 = vshrl.u32 %v3538, 23
        %v3540 = vsub.s32 %v3539, 127
        %v3541 = vand.u32 2147483647, %v3311
        %v3542 = vand.u32 %v3541, 8388607
        %v3543 = vor.u32 %v3542, 8388608
        %v3544 = vsub.s32 0, %v3543
        %v3545 = vadd.s32 %v3540, 1
        %vm3546 = vcmp.gt.s32.totalorder %v3545, 0
        %v3547 = vsel %vm3546, %v3545, 0
        %v3548 = vshrl.u32 %v3547, 5
        %v3549 = vand.u32 %v3547, 31
        %v3550 = vsub.s32 32, %v3549
        %v3551 = vshrl.u32 683565275, %v3550
        %v3552 = vshll.u32 683565275, %v3549
        %v3553 = vshrl.u32 2475754826, %v3550
        %v3554 = vor.u32 %v3552, %v3553
        %v3555 = vshll.u32 2475754826, %v3549
        %v3556 = vshrl.u32 2131351028, %v3550
        %v3557 = vor.u32 %v3555, %v3556
        %v3558 = vshll.u32 2131351028, %v3549
        %v3559 = vshrl.u32 2102212464, %v3550
        %v3560 = vor.u32 %v3558, %v3559
        %v3561 = vshll.u32 2102212464, %v3549
        %v3562 = vshrl.u32 920167782, %v3550
        %v3563 = vor.u32 %v3561, %v3562
        %v3564 = vshll.u32 920167782, %v3549
        %v3565 = vshrl.u32 1326507024, %v3550
        %v3566 = vor.u32 %v3564, %v3565
        %vm3567 = vcmp.lt.s32.totalorder %v3548, 1
        %vm3568 = vcmp.lt.s32.totalorder %v3548, 2
        %vm3569 = vcmp.lt.s32.totalorder %v3548, 3
        %vm3570 = vcmp.lt.s32.totalorder %v3548, 4
        %v3571 = vsel %vm3567, %v3551, %v3554
        %v3572 = vsel %vm3570, %v3560, 2102212464
        %v3573 = vsel %vm3569, %v3557, %v3572
        %v3574 = vsel %vm3568, %v3571, %v3573
        %v3575 = vsel %vm3567, %v3554, %v3557
        %v3576 = vsel %vm3570, %v3563, 920167782
        %v3577 = vsel %vm3569, %v3560, %v3576
        %v3578 = vsel %vm3568, %v3575, %v3577
        %v3579 = vsel %vm3567, %v3557, %v3560
        %v3580 = vsel %vm3570, %v3566, 1326507024
        %v3581 = vsel %vm3569, %v3563, %v3580
        %v3582 = vsel %vm3568, %v3579, %v3581
        %v3583 = vshll.u32 %v3543, 8
        %v3584 = vmul.u32.u64.compose %v3583, %v3582
        %v3585 = vextract.low.u32 %v3584
        %v3586 = vextract.high.u32 %v3584
        %v3587 = vmul.u32.u64.compose %v3583, %v3578
        %v3588 = vextract.low.u32 %v3587
        %v3589 = vextract.high.u32 %v3587
        %v3590 = vmul.u32 %v3583, %v3574
        %v3591 = vadd.s32 %v3586, %v3588
        %vm3592 = vc.u32 %v3586, %v3588
        %v3593 = vadd.s32 %v3589, 1
        %v3594 = vsel %vm3592, %v3593, %v3589
        %v3595 = vadd.s32 %v3590, %v3594
        %v3596 = vadd.s32 %v3595, 536870912
        %v3597 = vshrl.u32 %v3596, 30
        %v3598 = vshll.u32 %v3597, 30
        %v3599 = vsub.s32 %v3595, %v3598
        %vm3600 = vcmp.lt.s32.totalorder %v3599, 0
        %v3601 = vsub.s32 0, %v3599
        %v3602 = vsel %vm3600, %v3601, %v3599
        %v3603 = vclz %v3602
        %v3604 = vsub.s32 %v3603, 2
        %vm3605 = vcmp.gt.s32.totalorder 0, %v3604
        %v3606 = vsel %vm3605, 0, %v3604
        %v3607 = vsub.s32 32, %v3606
        %v3608 = vshll.u32 %v3599, %v3606
        %v3609 = vshrl.u32 %v3591, %v3607
        %v3610 = vor.u32 %v3608, %v3609
        %v3611 = vsub.s32 4294967266, %v3606
        %v3612 = vadd.s32 %v3611, 127
        %v3613 = vshll.u32 %v3612, 23
        %v3614 = vor.u32 4788187, %v3613
        %v3615 = vand.u32 2147483647, %v3614
        %v3617 = vcvt.s32.f32 %v3610
        %v3618 = vmul.f32 %v3617, %v3615
        %v3619 = vxor.u32 %v3618, 2147483648
        %v3620 = vsel %vm3537, %v3619, %v3618
        %v3621 = vsub.s32 4, %v3597
        %v3622 = vsel %vm3537, %v3621, %v3597
        %v3623 = vsel %vm3536, %v3311, %v3620
        %v3624 = vsel %vm3536, 0, %v3622
        %v3625 = vcosq.f32.pop %v3623
        %v3626 = vsinq.f32.pop %v3623
        %vm3627 = vweird.f32 %v3311
        %v3628 = vadd.s32 %v3624, 3
        %v3629 = vand.u32 %v3628, 3
        %vm3630 = vcmp.lt.s32.totalorder %v3629, 2
        %vm3631 = vcmp.eq.s32.totalorder %v3629, 0
        %v3632 = vxor.u32 %v3626, 2147483648
        %v3633 = vsel %vm3631, %v3625, %v3632
        %vm3634 = vcmp.eq.s32.totalorder %v3629, 2
        %v3635 = vxor.u32 %v3625, 2147483648
        %v3636 = vsel %vm3634, %v3635, %v3626
        %v3637 = vsel %vm3630, %v3633, %v3636
        %v3638 = vsel %vm3627, nan, %v3637
        %v3639 = vand.u32 2147483647, %v3313
        %vm3640 = vcmp.le.f32.partialorder %v3639, 0.7853982
        %vm3641 = vcmp.lt.s32.totalorder %v3313, 0
        %v3642 = vand.u32 %v3313, 2139095040
        %v3643 = vshrl.u32 %v3642, 23
        %v3644 = vsub.s32 %v3643, 127
        %v3645 = vand.u32 2147483647, %v3313
        %v3646 = vand.u32 %v3645, 8388607
        %v3647 = vor.u32 %v3646, 8388608
        %v3648 = vsub.s32 0, %v3647
        %v3649 = vadd.s32 %v3644, 1
        %vm3650 = vcmp.gt.s32.totalorder %v3649, 0
        %v3651 = vsel %vm3650, %v3649, 0
        %v3652 = vshrl.u32 %v3651, 5
        %v3653 = vand.u32 %v3651, 31
        %v3654 = vsub.s32 32, %v3653
        %v3655 = vshrl.u32 683565275, %v3654
        %v3656 = vshll.u32 683565275, %v3653
        %v3657 = vshrl.u32 2475754826, %v3654
        %v3658 = vor.u32 %v3656, %v3657
        %v3659 = vshll.u32 2475754826, %v3653
        %v3660 = vshrl.u32 2131351028, %v3654
        %v3661 = vor.u32 %v3659, %v3660
        %v3662 = vshll.u32 2131351028, %v3653
        %v3663 = vshrl.u32 2102212464, %v3654
        %v3664 = vor.u32 %v3662, %v3663
        %v3665 = vshll.u32 2102212464, %v3653
        %v3666 = vshrl.u32 920167782, %v3654
        %v3667 = vor.u32 %v3665, %v3666
        %v3668 = vshll.u32 920167782, %v3653
        %v3669 = vshrl.u32 1326507024, %v3654
        %v3670 = vor.u32 %v3668, %v3669
        %vm3671 = vcmp.lt.s32.totalorder %v3652, 1
        %vm3672 = vcmp.lt.s32.totalorder %v3652, 2
        %vm3673 = vcmp.lt.s32.totalorder %v3652, 3
        %vm3674 = vcmp.lt.s32.totalorder %v3652, 4
        %v3675 = vsel %vm3671, %v3655, %v3658
        %v3676 = vsel %vm3674, %v3664, 2102212464
        %v3677 = vsel %vm3673, %v3661, %v3676
        %v3678 = vsel %vm3672, %v3675, %v3677
        %v3679 = vsel %vm3671, %v3658, %v3661
        %v3680 = vsel %vm3674, %v3667, 920167782
        %v3681 = vsel %vm3673, %v3664, %v3680
        %v3682 = vsel %vm3672, %v3679, %v3681
        %v3683 = vsel %vm3671, %v3661, %v3664
        %v3684 = vsel %vm3674, %v3670, 1326507024
        %v3685 = vsel %vm3673, %v3667, %v3684
        %v3686 = vsel %vm3672, %v3683, %v3685
        %v3687 = vshll.u32 %v3647, 8
        %v3688 = vmul.u32.u64.compose %v3687, %v3686
        %v3689 = vextract.low.u32 %v3688
        %v3690 = vextract.high.u32 %v3688
        %v3691 = vmul.u32.u64.compose %v3687, %v3682
        %v3692 = vextract.low.u32 %v3691
        %v3693 = vextract.high.u32 %v3691
        %v3694 = vmul.u32 %v3687, %v3678
        %v3695 = vadd.s32 %v3690, %v3692
        %vm3696 = vc.u32 %v3690, %v3692
        %v3697 = vadd.s32 %v3693, 1
        %v3698 = vsel %vm3696, %v3697, %v3693
        %v3699 = vadd.s32 %v3694, %v3698
        %v3700 = vadd.s32 %v3699, 536870912
        %v3701 = vshrl.u32 %v3700, 30
        %v3702 = vshll.u32 %v3701, 30
        %v3703 = vsub.s32 %v3699, %v3702
        %vm3704 = vcmp.lt.s32.totalorder %v3703, 0
        %v3705 = vsub.s32 0, %v3703
        %v3706 = vsel %vm3704, %v3705, %v3703
        %v3707 = vclz %v3706
        %v3708 = vsub.s32 %v3707, 2
        %vm3709 = vcmp.gt.s32.totalorder 0, %v3708
        %v3710 = vsel %vm3709, 0, %v3708
        %v3711 = vsub.s32 32, %v3710
        %v3712 = vshll.u32 %v3703, %v3710
        %v3713 = vshrl.u32 %v3695, %v3711
        %v3714 = vor.u32 %v3712, %v3713
        %v3715 = vsub.s32 4294967266, %v3710
        %v3716 = vadd.s32 %v3715, 127
        %v3717 = vshll.u32 %v3716, 23
        %v3718 = vor.u32 4788187, %v3717
        %v3719 = vand.u32 2147483647, %v3718
        %v3721 = vcvt.s32.f32 %v3714
        %v3722 = vmul.f32 %v3721, %v3719
        %v3723 = vxor.u32 %v3722, 2147483648
        %v3724 = vsel %vm3641, %v3723, %v3722
        %v3725 = vsub.s32 4, %v3701
        %v3726 = vsel %vm3641, %v3725, %v3701
        %v3727 = vsel %vm3640, %v3313, %v3724
        %v3728 = vsel %vm3640, 0, %v3726
        %v3729 = vcosq.f32.pop %v3727
        %v3730 = vsinq.f32.pop %v3727
        %vm3731 = vweird.f32 %v3313
        %v3732 = vadd.s32 %v3728, 3
        %v3733 = vand.u32 %v3732, 3
        %vm3734 = vcmp.lt.s32.totalorder %v3733, 2
        %vm3735 = vcmp.eq.s32.totalorder %v3733, 0
        %v3736 = vxor.u32 %v3730, 2147483648
        %v3737 = vsel %vm3735, %v3729, %v3736
        %vm3738 = vcmp.eq.s32.totalorder %v3733, 2
        %v3739 = vxor.u32 %v3729, 2147483648
        %v3740 = vsel %vm3738, %v3739, %v3730
        %v3741 = vsel %vm3734, %v3737, %v3740
        %v3742 = vsel %vm3731, nan, %v3741
        %v3743 = vand.u32 2147483647, %v3317
        %vm3744 = vcmp.le.f32.partialorder %v3743, 0.7853982
        %vm3745 = vcmp.lt.s32.totalorder %v3317, 0
        %v3746 = vand.u32 %v3317, 2139095040
        %v3747 = vshrl.u32 %v3746, 23
        %v3748 = vsub.s32 %v3747, 127
        %v3749 = vand.u32 2147483647, %v3317
        %v3750 = vand.u32 %v3749, 8388607
        %v3751 = vor.u32 %v3750, 8388608
        %v3752 = vsub.s32 0, %v3751
        %v3753 = vadd.s32 %v3748, 1
        %vm3754 = vcmp.gt.s32.totalorder %v3753, 0
        %v3755 = vsel %vm3754, %v3753, 0
        %v3756 = vshrl.u32 %v3755, 5
        %v3757 = vand.u32 %v3755, 31
        %v3758 = vsub.s32 32, %v3757
        %v3759 = vshrl.u32 683565275, %v3758
        %v3760 = vshll.u32 683565275, %v3757
        %v3761 = vshrl.u32 2475754826, %v3758
        %v3762 = vor.u32 %v3760, %v3761
        %v3763 = vshll.u32 2475754826, %v3757
        %v3764 = vshrl.u32 2131351028, %v3758
        %v3765 = vor.u32 %v3763, %v3764
        %v3766 = vshll.u32 2131351028, %v3757
        %v3767 = vshrl.u32 2102212464, %v3758
        %v3768 = vor.u32 %v3766, %v3767
        %v3769 = vshll.u32 2102212464, %v3757
        %v3770 = vshrl.u32 920167782, %v3758
        %v3771 = vor.u32 %v3769, %v3770
        %v3772 = vshll.u32 920167782, %v3757
        %v3773 = vshrl.u32 1326507024, %v3758
        %v3774 = vor.u32 %v3772, %v3773
        %vm3775 = vcmp.lt.s32.totalorder %v3756, 1
        %vm3776 = vcmp.lt.s32.totalorder %v3756, 2
        %vm3777 = vcmp.lt.s32.totalorder %v3756, 3
        %vm3778 = vcmp.lt.s32.totalorder %v3756, 4
        %v3779 = vsel %vm3775, %v3759, %v3762
        %v3780 = vsel %vm3778, %v3768, 2102212464
        %v3781 = vsel %vm3777, %v3765, %v3780
        %v3782 = vsel %vm3776, %v3779, %v3781
        %v3783 = vsel %vm3775, %v3762, %v3765
        %v3784 = vsel %vm3778, %v3771, 920167782
        %v3785 = vsel %vm3777, %v3768, %v3784
        %v3786 = vsel %vm3776, %v3783, %v3785
        %v3787 = vsel %vm3775, %v3765, %v3768
        %v3788 = vsel %vm3778, %v3774, 1326507024
        %v3789 = vsel %vm3777, %v3771, %v3788
        %v3790 = vsel %vm3776, %v3787, %v3789
        %v3791 = vshll.u32 %v3751, 8
        %v3792 = vmul.u32.u64.compose %v3791, %v3790
        %v3793 = vextract.low.u32 %v3792
        %v3794 = vextract.high.u32 %v3792
        %v3795 = vmul.u32.u64.compose %v3791, %v3786
        %v3796 = vextract.low.u32 %v3795
        %v3797 = vextract.high.u32 %v3795
        %v3798 = vmul.u32 %v3791, %v3782
        %v3799 = vadd.s32 %v3794, %v3796
        %vm3800 = vc.u32 %v3794, %v3796
        %v3801 = vadd.s32 %v3797, 1
        %v3802 = vsel %vm3800, %v3801, %v3797
        %v3803 = vadd.s32 %v3798, %v3802
        %v3804 = vadd.s32 %v3803, 536870912
        %v3805 = vshrl.u32 %v3804, 30
        %v3806 = vshll.u32 %v3805, 30
        %v3807 = vsub.s32 %v3803, %v3806
        %vm3808 = vcmp.lt.s32.totalorder %v3807, 0
        %v3809 = vsub.s32 0, %v3807
        %v3810 = vsel %vm3808, %v3809, %v3807
        %v3811 = vclz %v3810
        %v3812 = vsub.s32 %v3811, 2
        %vm3813 = vcmp.gt.s32.totalorder 0, %v3812
        %v3814 = vsel %vm3813, 0, %v3812
        %v3815 = vsub.s32 32, %v3814
        %v3816 = vshll.u32 %v3807, %v3814
        %v3817 = vshrl.u32 %v3799, %v3815
        %v3818 = vor.u32 %v3816, %v3817
        %v3819 = vsub.s32 4294967266, %v3814
        %v3820 = vadd.s32 %v3819, 127
        %v3821 = vshll.u32 %v3820, 23
        %v3822 = vor.u32 4788187, %v3821
        %v3823 = vand.u32 2147483647, %v3822
        %v3825 = vcvt.s32.f32 %v3818
        %v3826 = vmul.f32 %v3825, %v3823
        %v3827 = vxor.u32 %v3826, 2147483648
        %v3828 = vsel %vm3745, %v3827, %v3826
        %v3829 = vsub.s32 4, %v3805
        %v3830 = vsel %vm3745, %v3829, %v3805
        %v3831 = vsel %vm3744, %v3317, %v3828
        %v3832 = vsel %vm3744, 0, %v3830
        %v3833 = vcosq.f32.pop %v3831
        %v3834 = vsinq.f32.pop %v3831
        %vm3835 = vweird.f32 %v3317
        %v3836 = vadd.s32 %v3832, 3
        %v3837 = vand.u32 %v3836, 3
        %vm3838 = vcmp.lt.s32.totalorder %v3837, 2
        %vm3839 = vcmp.eq.s32.totalorder %v3837, 0
        %v3840 = vxor.u32 %v3834, 2147483648
        %v3841 = vsel %vm3839, %v3833, %v3840
        %vm3842 = vcmp.eq.s32.totalorder %v3837, 2
        %v3843 = vxor.u32 %v3833, 2147483648
        %v3844 = vsel %vm3842, %v3843, %v3834
        %v3845 = vsel %vm3838, %v3841, %v3844
        %v3846 = vsel %vm3835, nan, %v3845
        %v3847 = vand.u32 2147483647, %v3319
        %vm3848 = vcmp.le.f32.partialorder %v3847, 0.7853982
        %vm3849 = vcmp.lt.s32.totalorder %v3319, 0
        %v3850 = vand.u32 %v3319, 2139095040
        %v3851 = vshrl.u32 %v3850, 23
        %v3852 = vsub.s32 %v3851, 127
        %v3853 = vand.u32 2147483647, %v3319
        %v3854 = vand.u32 %v3853, 8388607
        %v3855 = vor.u32 %v3854, 8388608
        %v3856 = vsub.s32 0, %v3855
        %v3857 = vadd.s32 %v3852, 1
        %vm3858 = vcmp.gt.s32.totalorder %v3857, 0
        %v3859 = vsel %vm3858, %v3857, 0
        %v3860 = vshrl.u32 %v3859, 5
        %v3861 = vand.u32 %v3859, 31
        %v3862 = vsub.s32 32, %v3861
        %v3863 = vshrl.u32 683565275, %v3862
        %v3864 = vshll.u32 683565275, %v3861
        %v3865 = vshrl.u32 2475754826, %v3862
        %v3866 = vor.u32 %v3864, %v3865
        %v3867 = vshll.u32 2475754826, %v3861
        %v3868 = vshrl.u32 2131351028, %v3862
        %v3869 = vor.u32 %v3867, %v3868
        %v3870 = vshll.u32 2131351028, %v3861
        %v3871 = vshrl.u32 2102212464, %v3862
        %v3872 = vor.u32 %v3870, %v3871
        %v3873 = vshll.u32 2102212464, %v3861
        %v3874 = vshrl.u32 920167782, %v3862
        %v3875 = vor.u32 %v3873, %v3874
        %v3876 = vshll.u32 920167782, %v3861
        %v3877 = vshrl.u32 1326507024, %v3862
        %v3878 = vor.u32 %v3876, %v3877
        %vm3879 = vcmp.lt.s32.totalorder %v3860, 1
        %vm3880 = vcmp.lt.s32.totalorder %v3860, 2
        %vm3881 = vcmp.lt.s32.totalorder %v3860, 3
        %vm3882 = vcmp.lt.s32.totalorder %v3860, 4
        %v3883 = vsel %vm3879, %v3863, %v3866
        %v3884 = vsel %vm3882, %v3872, 2102212464
        %v3885 = vsel %vm3881, %v3869, %v3884
        %v3886 = vsel %vm3880, %v3883, %v3885
        %v3887 = vsel %vm3879, %v3866, %v3869
        %v3888 = vsel %vm3882, %v3875, 920167782
        %v3889 = vsel %vm3881, %v3872, %v3888
        %v3890 = vsel %vm3880, %v3887, %v3889
        %v3891 = vsel %vm3879, %v3869, %v3872
        %v3892 = vsel %vm3882, %v3878, 1326507024
        %v3893 = vsel %vm3881, %v3875, %v3892
        %v3894 = vsel %vm3880, %v3891, %v3893
        %v3895 = vshll.u32 %v3855, 8
        %v3896 = vmul.u32.u64.compose %v3895, %v3894
        %v3897 = vextract.low.u32 %v3896
        %v3898 = vextract.high.u32 %v3896
        %v3899 = vmul.u32.u64.compose %v3895, %v3890
        %v3900 = vextract.low.u32 %v3899
        %v3901 = vextract.high.u32 %v3899
        %v3902 = vmul.u32 %v3895, %v3886
        %v3903 = vadd.s32 %v3898, %v3900
        %vm3904 = vc.u32 %v3898, %v3900
        %v3905 = vadd.s32 %v3901, 1
        %v3906 = vsel %vm3904, %v3905, %v3901
        %v3907 = vadd.s32 %v3902, %v3906
        %v3908 = vadd.s32 %v3907, 536870912
        %v3909 = vshrl.u32 %v3908, 30
        %v3910 = vshll.u32 %v3909, 30
        %v3911 = vsub.s32 %v3907, %v3910
        %vm3912 = vcmp.lt.s32.totalorder %v3911, 0
        %v3913 = vsub.s32 0, %v3911
        %v3914 = vsel %vm3912, %v3913, %v3911
        %v3915 = vclz %v3914
        %v3916 = vsub.s32 %v3915, 2
        %vm3917 = vcmp.gt.s32.totalorder 0, %v3916
        %v3918 = vsel %vm3917, 0, %v3916
        %v3919 = vsub.s32 32, %v3918
        %v3920 = vshll.u32 %v3911, %v3918
        %v3921 = vshrl.u32 %v3903, %v3919
        %v3922 = vor.u32 %v3920, %v3921
        %v3923 = vsub.s32 4294967266, %v3918
        %v3924 = vadd.s32 %v3923, 127
        %v3925 = vshll.u32 %v3924, 23
        %v3926 = vor.u32 4788187, %v3925
        %v3927 = vand.u32 2147483647, %v3926
        %v3929 = vcvt.s32.f32 %v3922
        %v3930 = vmul.f32 %v3929, %v3927
        %v3931 = vxor.u32 %v3930, 2147483648
        %v3932 = vsel %vm3849, %v3931, %v3930
        %v3933 = vsub.s32 4, %v3909
        %v3934 = vsel %vm3849, %v3933, %v3909
        %v3935 = vsel %vm3848, %v3319, %v3932
        %v3936 = vsel %vm3848, 0, %v3934
        %v3937 = vcosq.f32.pop %v3935
        %v3938 = vsinq.f32.pop %v3935
        %vm3939 = vweird.f32 %v3319
        %v3940 = vadd.s32 %v3936, 3
        %v3941 = vand.u32 %v3940, 3
        %vm3942 = vcmp.lt.s32.totalorder %v3941, 2
        %vm3943 = vcmp.eq.s32.totalorder %v3941, 0
        %v3944 = vxor.u32 %v3938, 2147483648
        %v3945 = vsel %vm3943, %v3937, %v3944
        %vm3946 = vcmp.eq.s32.totalorder %v3941, 2
        %v3947 = vxor.u32 %v3937, 2147483648
        %v3948 = vsel %vm3946, %v3947, %v3938
        %v3949 = vsel %vm3942, %v3945, %v3948
        %v3950 = vsel %vm3939, nan, %v3949
        %v3951 = vand.u32 2147483647, %v3323
        %vm3952 = vcmp.le.f32.partialorder %v3951, 0.7853982
        %vm3953 = vcmp.lt.s32.totalorder %v3323, 0
        %v3954 = vand.u32 %v3323, 2139095040
        %v3955 = vshrl.u32 %v3954, 23
        %v3956 = vsub.s32 %v3955, 127
        %v3957 = vand.u32 2147483647, %v3323
        %v3958 = vand.u32 %v3957, 8388607
        %v3959 = vor.u32 %v3958, 8388608
        %v3960 = vsub.s32 0, %v3959
        %v3961 = vadd.s32 %v3956, 1
        %vm3962 = vcmp.gt.s32.totalorder %v3961, 0
        %v3963 = vsel %vm3962, %v3961, 0
        %v3964 = vshrl.u32 %v3963, 5
        %v3965 = vand.u32 %v3963, 31
        %v3966 = vsub.s32 32, %v3965
        %v3967 = vshrl.u32 683565275, %v3966
        %v3968 = vshll.u32 683565275, %v3965
        %v3969 = vshrl.u32 2475754826, %v3966
        %v3970 = vor.u32 %v3968, %v3969
        %v3971 = vshll.u32 2475754826, %v3965
        %v3972 = vshrl.u32 2131351028, %v3966
        %v3973 = vor.u32 %v3971, %v3972
        %v3974 = vshll.u32 2131351028, %v3965
        %v3975 = vshrl.u32 2102212464, %v3966
        %v3976 = vor.u32 %v3974, %v3975
        %v3977 = vshll.u32 2102212464, %v3965
        %v3978 = vshrl.u32 920167782, %v3966
        %v3979 = vor.u32 %v3977, %v3978
        %v3980 = vshll.u32 920167782, %v3965
        %v3981 = vshrl.u32 1326507024, %v3966
        %v3982 = vor.u32 %v3980, %v3981
        %vm3983 = vcmp.lt.s32.totalorder %v3964, 1
        %vm3984 = vcmp.lt.s32.totalorder %v3964, 2
        %vm3985 = vcmp.lt.s32.totalorder %v3964, 3
        %vm3986 = vcmp.lt.s32.totalorder %v3964, 4
        %v3987 = vsel %vm3983, %v3967, %v3970
        %v3988 = vsel %vm3986, %v3976, 2102212464
        %v3989 = vsel %vm3985, %v3973, %v3988
        %v3990 = vsel %vm3984, %v3987, %v3989
        %v3991 = vsel %vm3983, %v3970, %v3973
        %v3992 = vsel %vm3986, %v3979, 920167782
        %v3993 = vsel %vm3985, %v3976, %v3992
        %v3994 = vsel %vm3984, %v3991, %v3993
        %v3995 = vsel %vm3983, %v3973, %v3976
        %v3996 = vsel %vm3986, %v3982, 1326507024
        %v3997 = vsel %vm3985, %v3979, %v3996
        %v3998 = vsel %vm3984, %v3995, %v3997
        %v3999 = vshll.u32 %v3959, 8
        %v4000 = vmul.u32.u64.compose %v3999, %v3998
        %v4001 = vextract.low.u32 %v4000
        %v4002 = vextract.high.u32 %v4000
        %v4003 = vmul.u32.u64.compose %v3999, %v3994
        %v4004 = vextract.low.u32 %v4003
        %v4005 = vextract.high.u32 %v4003
        %v4006 = vmul.u32 %v3999, %v3990
        %v4007 = vadd.s32 %v4002, %v4004
        %vm4008 = vc.u32 %v4002, %v4004
        %v4009 = vadd.s32 %v4005, 1
        %v4010 = vsel %vm4008, %v4009, %v4005
        %v4011 = vadd.s32 %v4006, %v4010
        %v4012 = vadd.s32 %v4011, 536870912
        %v4013 = vshrl.u32 %v4012, 30
        %v4014 = vshll.u32 %v4013, 30
        %v4015 = vsub.s32 %v4011, %v4014
        %vm4016 = vcmp.lt.s32.totalorder %v4015, 0
        %v4017 = vsub.s32 0, %v4015
        %v4018 = vsel %vm4016, %v4017, %v4015
        %v4019 = vclz %v4018
        %v4020 = vsub.s32 %v4019, 2
        %vm4021 = vcmp.gt.s32.totalorder 0, %v4020
        %v4022 = vsel %vm4021, 0, %v4020
        %v4023 = vsub.s32 32, %v4022
        %v4024 = vshll.u32 %v4015, %v4022
        %v4025 = vshrl.u32 %v4007, %v4023
        %v4026 = vor.u32 %v4024, %v4025
        %v4027 = vsub.s32 4294967266, %v4022
        %v4028 = vadd.s32 %v4027, 127
        %v4029 = vshll.u32 %v4028, 23
        %v4030 = vor.u32 4788187, %v4029
        %v4031 = vand.u32 2147483647, %v4030
        %v4033 = vcvt.s32.f32 %v4026
        %v4034 = vmul.f32 %v4033, %v4031
        %v4035 = vxor.u32 %v4034, 2147483648
        %v4036 = vsel %vm3953, %v4035, %v4034
        %v4037 = vsub.s32 4, %v4013
        %v4038 = vsel %vm3953, %v4037, %v4013
        %v4039 = vsel %vm3952, %v3323, %v4036
        %v4040 = vsel %vm3952, 0, %v4038
        %v4041 = vcosq.f32.pop %v4039
        %v4042 = vsinq.f32.pop %v4039
        %vm4043 = vweird.f32 %v3323
        %v4044 = vadd.s32 %v4040, 3
        %v4045 = vand.u32 %v4044, 3
        %vm4046 = vcmp.lt.s32.totalorder %v4045, 2
        %vm4047 = vcmp.eq.s32.totalorder %v4045, 0
        %v4048 = vxor.u32 %v4042, 2147483648
        %v4049 = vsel %vm4047, %v4041, %v4048
        %vm4050 = vcmp.eq.s32.totalorder %v4045, 2
        %v4051 = vxor.u32 %v4041, 2147483648
        %v4052 = vsel %vm4050, %v4051, %v4042
        %v4053 = vsel %vm4046, %v4049, %v4052
        %v4054 = vsel %vm4043, nan, %v4053
        %v4055 = vand.u32 2147483647, %v3325
        %vm4056 = vcmp.le.f32.partialorder %v4055, 0.7853982
        %vm4057 = vcmp.lt.s32.totalorder %v3325, 0
        %v4058 = vand.u32 %v3325, 2139095040
        %v4059 = vshrl.u32 %v4058, 23
        %v4060 = vsub.s32 %v4059, 127
        %v4061 = vand.u32 2147483647, %v3325
        %v4062 = vand.u32 %v4061, 8388607
        %v4063 = vor.u32 %v4062, 8388608
        %v4064 = vsub.s32 0, %v4063
        %v4065 = vadd.s32 %v4060, 1
        %vm4066 = vcmp.gt.s32.totalorder %v4065, 0
        %v4067 = vsel %vm4066, %v4065, 0
        %v4068 = vshrl.u32 %v4067, 5
        %v4069 = vand.u32 %v4067, 31
        %v4070 = vsub.s32 32, %v4069
        %v4071 = vshrl.u32 683565275, %v4070
        %v4072 = vshll.u32 683565275, %v4069
        %v4073 = vshrl.u32 2475754826, %v4070
        %v4074 = vor.u32 %v4072, %v4073
        %v4075 = vshll.u32 2475754826, %v4069
        %v4076 = vshrl.u32 2131351028, %v4070
        %v4077 = vor.u32 %v4075, %v4076
        %v4078 = vshll.u32 2131351028, %v4069
        %v4079 = vshrl.u32 2102212464, %v4070
        %v4080 = vor.u32 %v4078, %v4079
        %v4081 = vshll.u32 2102212464, %v4069
        %v4082 = vshrl.u32 920167782, %v4070
        %v4083 = vor.u32 %v4081, %v4082
        %v4084 = vshll.u32 920167782, %v4069
        %v4085 = vshrl.u32 1326507024, %v4070
        %v4086 = vor.u32 %v4084, %v4085
        %vm4087 = vcmp.lt.s32.totalorder %v4068, 1
        %vm4088 = vcmp.lt.s32.totalorder %v4068, 2
        %vm4089 = vcmp.lt.s32.totalorder %v4068, 3
        %vm4090 = vcmp.lt.s32.totalorder %v4068, 4
        %v4091 = vsel %vm4087, %v4071, %v4074
        %v4092 = vsel %vm4090, %v4080, 2102212464
        %v4093 = vsel %vm4089, %v4077, %v4092
        %v4094 = vsel %vm4088, %v4091, %v4093
        %v4095 = vsel %vm4087, %v4074, %v4077
        %v4096 = vsel %vm4090, %v4083, 920167782
        %v4097 = vsel %vm4089, %v4080, %v4096
        %v4098 = vsel %vm4088, %v4095, %v4097
        %v4099 = vsel %vm4087, %v4077, %v4080
        %v4100 = vsel %vm4090, %v4086, 1326507024
        %v4101 = vsel %vm4089, %v4083, %v4100
        %v4102 = vsel %vm4088, %v4099, %v4101
        %v4103 = vshll.u32 %v4063, 8
        %v4104 = vmul.u32.u64.compose %v4103, %v4102
        %v4105 = vextract.low.u32 %v4104
        %v4106 = vextract.high.u32 %v4104
        %v4107 = vmul.u32.u64.compose %v4103, %v4098
        %v4108 = vextract.low.u32 %v4107
        %v4109 = vextract.high.u32 %v4107
        %v4110 = vmul.u32 %v4103, %v4094
        %v4111 = vadd.s32 %v4106, %v4108
        %vm4112 = vc.u32 %v4106, %v4108
        %v4113 = vadd.s32 %v4109, 1
        %v4114 = vsel %vm4112, %v4113, %v4109
        %v4115 = vadd.s32 %v4110, %v4114
        %v4116 = vadd.s32 %v4115, 536870912
        %v4117 = vshrl.u32 %v4116, 30
        %v4118 = vshll.u32 %v4117, 30
        %v4119 = vsub.s32 %v4115, %v4118
        %vm4120 = vcmp.lt.s32.totalorder %v4119, 0
        %v4121 = vsub.s32 0, %v4119
        %v4122 = vsel %vm4120, %v4121, %v4119
        %v4123 = vclz %v4122
        %v4124 = vsub.s32 %v4123, 2
        %vm4125 = vcmp.gt.s32.totalorder 0, %v4124
        %v4126 = vsel %vm4125, 0, %v4124
        %v4127 = vsub.s32 32, %v4126
        %v4128 = vshll.u32 %v4119, %v4126
        %v4129 = vshrl.u32 %v4111, %v4127
        %v4130 = vor.u32 %v4128, %v4129
        %v4131 = vsub.s32 4294967266, %v4126
        %v4132 = vadd.s32 %v4131, 127
        %v4133 = vshll.u32 %v4132, 23
        %v4134 = vor.u32 4788187, %v4133
        %v4135 = vand.u32 2147483647, %v4134
        %v4137 = vcvt.s32.f32 %v4130
        %v4138 = vmul.f32 %v4137, %v4135
        %v4139 = vxor.u32 %v4138, 2147483648
        %v4140 = vsel %vm4057, %v4139, %v4138
        %v4141 = vsub.s32 4, %v4117
        %v4142 = vsel %vm4057, %v4141, %v4117
        %v4143 = vsel %vm4056, %v3325, %v4140
        %v4144 = vsel %vm4056, 0, %v4142
        %v4145 = vcosq.f32.pop %v4143
        %v4146 = vsinq.f32.pop %v4143
        %vm4147 = vweird.f32 %v3325
        %v4148 = vadd.s32 %v4144, 3
        %v4149 = vand.u32 %v4148, 3
        %vm4150 = vcmp.lt.s32.totalorder %v4149, 2
        %vm4151 = vcmp.eq.s32.totalorder %v4149, 0
        %v4152 = vxor.u32 %v4146, 2147483648
        %v4153 = vsel %vm4151, %v4145, %v4152
        %vm4154 = vcmp.eq.s32.totalorder %v4149, 2
        %v4155 = vxor.u32 %v4145, 2147483648
        %v4156 = vsel %vm4154, %v4155, %v4146
        %v4157 = vsel %vm4150, %v4153, %v4156
        %v4158 = vsel %vm4147, nan, %v4157
        %v4159 = vmul.f32 %v3430, %v772
        %v4160 = vmul.f32 %v3534, %v876
        %v4161 = vmul.f32 %v3638, %v980
        %v4162 = vmul.f32 %v3742, %v1084
        %v4163 = vmul.f32 %v3846, %v1188
        %v4164 = vmul.f32 %v3950, %v1292
        %v4165 = vmul.f32 %v4054, %v1396
        %v4166 = vmul.f32 %v4158, %v1500
        %v4167 = vsub.f32 1.0, %v3430
        %v4168 = vsub.f32 1.0, %v3534
        %v4169 = vsub.f32 1.0, %v3638
        %v4170 = vsub.f32 1.0, %v3742
        %v4171 = vsub.f32 1.0, %v3846
        %v4172 = vsub.f32 1.0, %v3950
        %v4173 = vsub.f32 1.0, %v4054
        %v4174 = vsub.f32 1.0, %v4158
        %v4175 = vmul.f32 %v4167, %v1604
        %v4176 = vmul.f32 %v4168, %v1708
        %v4177 = vmul.f32 %v4169, %v1812
        %v4178 = vmul.f32 %v4170, %v1916
        %v4179 = vmul.f32 %v4171, %v2020
        %v4180 = vmul.f32 %v4172, %v2124
        %v4181 = vmul.f32 %v4173, %v2228
        %v4182 = vmul.f32 %v4174, %v2332
        %v4183 = vadd.f32 %v4159, %v4175
        %v4184 = vadd.f32 %v4160, %v4176
        %v4185 = vadd.f32 %v4161, %v4177
        %v4186 = vadd.f32 %v4162, %v4178
        %v4187 = vadd.f32 %v4163, %v4179
        %v4188 = vadd.f32 %v4164, %v4180
        %v4189 = vadd.f32 %v4165, %v4181
        %v4190 = vadd.f32 %v4166, %v4182
        %v4191 = vld [vmem:[%s4] sm:$0x3]
        %v4192 = vld [vmem:[%s5] sm:$0x3]
        %4194 = vset.pattern.permute.xlu0 0
        %4195 = vperm.xlu0 %4194, %v4192
        %v4196 = vpop.permute.xlu0 %4195
        %v4199 = vsel %vm3225, %v4191, 0
        %4201 = vmatprep.subr.mxu0 %v4184
        %4202 = vmatpush1.msra.mxu0 %v4183
        %4203 = vmatprep.subr.mxu0 %v4186
        %4204 = vmatpush1.msra.mxu0 %v4185
        %4205 = vmatprep.subr.mxu0 %v4188
        %4206 = vmatpush1.msra.mxu0 %v4187
        %4207 = vmatprep.subr.mxu0 %v4190
        %4208 = vmatpush1.msra.mxu0 %v4189
        %4209 = vmatprep.subr.mxu0 0.0
        %4210 = vmatpush1.msra.mxu0 0.0
        %4211 = vmatprep.subr.mxu0 0.0
        %4212 = vmatpush1.msra.mxu0 0.0
        %4213 = vmatprep.subr.mxu0 0.0
        %4214 = vmatpush1.msra.mxu0 0.0
        %4215 = vmatprep.subr.mxu0 0.0
        %4216 = vmatpush1.msra.mxu0 0.0
        %4217 = vmatprep.subr.mxu0 0.0
        %4218 = vmatpush1.msra.mxu0 0.0
        %4219 = vmatprep.subr.mxu0 0.0
        %4220 = vmatpush1.msra.mxu0 0.0
        %4221 = vmatprep.subr.mxu0 0.0
        %4222 = vmatpush1.msra.mxu0 0.0
        %4223 = vmatprep.subr.mxu0 0.0
        %4224 = vmatpush1.msra.mxu0 0.0
        %4225 = vmatprep.subr.mxu0 0.0
        %4226 = vmatpush1.msra.mxu0 0.0
        %4227 = vmatprep.subr.mxu0 0.0
        %4228 = vmatpush1.msra.mxu0 0.0
        %4229 = vmatprep.subr.mxu0 0.0
        %4230 = vmatpush1.msra.mxu0 0.0
        %4231 = vmatprep.subr.mxu0 0.0
        %4232 = vmatpush1.msra.mxu0 0.0
        %4233 = vmatprep.subr.mxu0 0.0
        %4234 = vmatpush1.msra.mxu0 0.0
        %4235 = vmatprep.subr.mxu0 0.0
        %4236 = vmatpush1.msra.mxu0 0.0
        %4237 = vmatprep.subr.mxu0 0.0
        %4238 = vmatpush1.msra.mxu0 0.0
        %4239 = vmatprep.subr.mxu0 0.0
        %4240 = vmatpush1.msra.mxu0 0.0
        %4241 = vmatprep.subr.mxu0 0.0
        %4242 = vmatpush1.msra.mxu0 0.0
        %4243 = vmatprep.subr.mxu0 0.0
        %4244 = vmatpush1.msra.mxu0 0.0
        %4245 = vmatprep.subr.mxu0 0.0
        %4246 = vmatpush1.msra.mxu0 0.0
        %4247 = vmatprep.subr.mxu0 0.0
        %4248 = vmatpush1.msra.mxu0 0.0
        %4249 = vmatprep.subr.mxu0 0.0
        %4250 = vmatpush1.msra.mxu0 0.0
        %4251 = vmatprep.subr.mxu0 0.0
        %4252 = vmatpush1.msra.mxu0 0.0
        %4253 = vmatprep.subr.mxu0 0.0
        %4254 = vmatpush1.msra.mxu0 0.0
        %4255 = vmatprep.subr.mxu0 0.0
        %4256 = vmatpush1.msra.mxu0 0.0
        %4257 = vmatprep.subr.mxu0 0.0
        %4258 = vmatpush1.msra.mxu0 0.0
        %4259 = vmatprep.subr.mxu0 0.0
        %4260 = vmatpush1.msra.mxu0 0.0
        %4261 = vmatprep.subr.mxu0 0.0
        %4262 = vmatpush1.msra.mxu0 0.0
        %4263 = vmatprep.subr.mxu0 0.0
        %4264 = vmatpush1.msra.mxu0 0.0
        %4265 = vmatprep.mubr.f32.mxu0 0.0
        %4266 = vmatmul.mubr.f32.gmra.mrb[0].mxu0 %v4199
        %v4267 = vpop.f32.mrb[0].mxu0
        %v4268 = vadd.f32 %v4196, %v4267
        %v4269 = vpop.f32.mrb[0].mxu0
        %v4270 = vadd.f32 %v4196, %v4269
        %4271 = vdwg.mxu0
        %v4274 = vcombine.low %v4268, %v4270
        %v4276 = vunpack.c.l.s4 1983009808
        %v4277 = vunpack.c.0.s8 %v4276
        %v4278 = vlaneseq
        %v4279 = vshrl.u32 %v4278, 7
        %v4280 = vsub.s32 %v4277, %v4279
        %v4281 = vrot.slane %v4274, %v4280
        %4283 = vst [vmem:[%s245] sm:$0xf] %v4281
        %s4284 = sand.u32 %s159, 1
        %s4285 = scalar_lea.sflag [#allocation3], %s4284
        %s4286 = sand.u32 %s159, 1
        %s4287 = smul.addr %s4286, 4
        %s4288 = scalar_lea.vmem [#allocation2], %s4287
        // Predicated region
        $region45: #{tpu_custom_call.1} parent=43 // pred_check
          %p4289 = pneg %p169
        $region46: #{tpu_custom_call.1} parent=43 // pred_check_branch
          %4291 = sbr.rel (%p4289) target = $region48
        $region47: #{tpu_custom_call.1} parent=43 // pred_region
          %s4292 = smul.u32 2, %s20
          %s4294 = ssub.s32 64, 64
          %4295 = vsyncadd %s4285, %s4294
          %s4296 = smul.addr %s4292, 32
          %s4297 = scalar_lea.hbm %s6, %s4296
          %s4299 = sshll.u32 %s4288, 4
          %s4300 = int_to_ptr.vmem [resolvable:$true] %s4299
          %4302 = dma.vmem_to_hbm [thread:$0]  %s4300, 64, %s4297, %s4285
        $region48: #{tpu_custom_call.1} parent=43 // pred_fallthru
          _
      $region44: #{tpu_custom_call.1} parent=5 // pred_fallthru
        _
      %p4303 = scmp.le.s32.totalorder 2, %s15
      // Predicated region
      $region49: #{tpu_custom_call.1} parent=5 // pred_check
        %p4304 = pneg %p4303
      $region50: #{tpu_custom_call.1} parent=5 // pred_check_branch
        %4306 = sbr.rel (%p4304) target = $region52
      $region51: #{tpu_custom_call.1} parent=5 // pred_region
        %s4307 = ssub.s32 %s15, 2
        // Predicated region
        $region53: #{tpu_custom_call.1} parent=51 // pred_check
          %p4308 = pneg %p175
        $region54: #{tpu_custom_call.1} parent=51 // pred_check_branch
          %4310 = sbr.rel (%p4308) target = $region56
        $region55: #{tpu_custom_call.1} parent=51 // pred_region
          %s4311 = sand.u32 %s160, 1
          %s4312 = scalar_lea.sflag [#allocation3], %s4311
          %s4313 = sand.u32 %s160, 1
          %s4314 = smul.addr %s4313, 4
          %s4315 = scalar_lea.vmem [#allocation2], %s4314
          %4316 = dma.done %s4312, 64
        $region56: #{tpu_custom_call.1} parent=51 // pred_fallthru
          _
      $region52: #{tpu_custom_call.1} parent=5 // pred_fallthru
        _
    $region6: #{tpu_custom_call.1} parent=1 // loop_footer
      %s19 = sadd.s32 1, %s15
    $region7: #{tpu_custom_call.1} parent=1 // loop_footer_branch
      %14 = sbr.rel target = $region3
    $region8: #{tpu_custom_call.1} parent=1 // loop_exit
      _
    %4317 = vsyncpa [#allocation3], 1
    %s4318 = scalar_lea.sflag [#allocation3], 1
    %4319 = vsyncpa %s4318, 1

</llo_original>
